<compile_context>
chip_gen: v5e
topology: v5e:2x2
jax: 0.10.0
libtpu: 0.0.40
codegen_flags: <defaults>
</compile_context>

<pallas_src>
import functools
import math

import jax
import jax.numpy as jnp
from jax.experimental import pallas as pl
from jax.experimental.pallas import tpu as pltpu


_VMEM_LIMIT = 32 * 1024 * 1024   # safe on v5e/v6e/v7x; footprint is a few MiB
_TM_MAX = 512                    # mem-bound sweet spot (~85% HBM roofline on v6e)


def _round_up(x, m):
    return (x + m - 1) // m * m


def _choose_tm(m):
    """Row tile: as large as possible (<=512) for HBM efficiency, but keep the
    grid at >=2 steps when there are enough rows so both v7x TCs get work."""
    m8 = _round_up(max(m, 8), 8)
    if m8 >= 16:
        return min(_TM_MAX, _round_up((m8 + 1) // 2, 8))
    return m8


# ----------------------------------------------------------------------------
# Fused linear-template kernel
#   x  -> [graphnorm affine prologue] -> [concat x2] -> @W (+b) -> [swish]
#      -> [+res] -> [@Wc + bc -> swish]            (all flags static)
# Activations are bf16 in / bf16 out; accumulation and elementwise math in f32.
# ----------------------------------------------------------------------------
def _fused_kernel(*refs, has_x2, has_norm, has_bias, act, has_res, has_chain):
    it = iter(refs)
    x = next(it)[...]                                     # bf16 [TM, K1]
    x2 = next(it)[...] if has_x2 else None                # bf16 [TM, K2]
    if has_norm:                                          # GraphNorm apply
        a = next(it)[...].astype(jnp.float32)
        c = next(it)[...].astype(jnp.float32)
        x = (x.astype(jnp.float32) * a + c).astype(jnp.bfloat16)
    if has_x2:
        # merged K=K1+K2 contraction (fills the 256-deep MXU on v6e/v7x)
        x = jnp.concatenate([x, x2], axis=-1)
    w_ref = next(it)
    acc = jnp.dot(x, w_ref[...], preferred_element_type=jnp.float32)
    if has_bias:
        acc = acc + next(it)[...]
    if act:
        acc = acc * jax.nn.sigmoid(acc)                   # swish in f32
    if has_res:
        acc = acc + next(it)[...].astype(jnp.float32)     # residual in f32
    if has_chain:                                         # chained lin+swish
        cw_ref = next(it)
        cb_ref = next(it)
        acc = jnp.dot(acc.astype(jnp.bfloat16), cw_ref[...],
                      preferred_element_type=jnp.float32) + cb_ref[...]
        acc = acc * jax.nn.sigmoid(acc)
    o_ref = next(it)
    o_ref[...] = acc.astype(o_ref.dtype)


def fused_op(x, w, b=None, *, x2=None, norm=None, res=None, act=False,
             chain=None, tm):
    """One pallas_call for the whole template above.

    x:[M,K1] bf16, w:[K1(+K2),Nmid] bf16, b:[1,Nmid] f32, x2:[M,K2] bf16,
    norm=(a,c) row-aligned bf16 [M,K1] (GraphNorm affine), res:[M,Nmid] bf16,
    chain=(Wc [Nmid,Nout] bf16, bc [1,Nout] f32). Returns bf16 [M,Nout].
    M must already be padded to a multiple of tm (padded once per forward).
    """
    M, K1 = x.shape
    assert M % tm == 0, (M, tm)
    n_mid = w.shape[1]
    n_out = chain[0].shape[1] if chain is not None else n_mid
    grid = (M // tm,)

    inputs = [x]
    in_specs = [pl.BlockSpec((tm, K1), lambda i: (i, 0))]
    k_total = K1
    if x2 is not None:
        K2 = x2.shape[1]
        k_total += K2
        inputs.append(x2)
        in_specs.append(pl.BlockSpec((tm, K2), lambda i: (i, 0)))
    if norm is not None:
        a, c = norm
        inputs += [a, c]
        in_specs += [pl.BlockSpec((tm, K1), lambda i: (i, 0)),
                     pl.BlockSpec((tm, K1), lambda i: (i, 0))]
    inputs.append(w)
    in_specs.append(pl.BlockSpec(w.shape, lambda i: (0, 0)))   # resident weight
    if b is not None:
        inputs.append(b)
        in_specs.append(pl.BlockSpec((1, n_mid), lambda i: (0, 0)))
    if res is not None:
        inputs.append(res)
        in_specs.append(pl.BlockSpec((tm, n_mid), lambda i: (i, 0)))
    if chain is not None:
        cw, cb = chain
        inputs += [cw, cb]
        in_specs += [pl.BlockSpec(cw.shape, lambda i: (0, 0)),
                     pl.BlockSpec((1, n_out), lambda i: (0, 0))]

    flops = 2 * M * k_total * n_mid + (2 * M * n_mid * n_out if chain else 0)
    trans = M * n_mid * (1 if act else 0) + (M * n_out if chain else 0)
    bytes_acc = (M * k_total * 2 + k_total * n_mid * 2 + M * n_out * 2
                 + (2 * M * K1 * 2 if norm is not None else 0)
                 + (M * n_mid * 2 if res is not None else 0)
                 + (n_mid * n_out * 2 if chain else 0))

    kernel = functools.partial(
        _fused_kernel, has_x2=x2 is not None, has_norm=norm is not None,
        has_bias=b is not None, act=act, has_res=res is not None,
        has_chain=chain is not None)
    return pl.pallas_call(
        kernel,
        out_shape=jax.ShapeDtypeStruct((M, n_out), jnp.bfloat16),
        grid=grid,
        in_specs=in_specs,
        out_specs=pl.BlockSpec((tm, n_out), lambda i: (i, 0)),
        compiler_params=pltpu.CompilerParams(
            dimension_semantics=("parallel",),
            vmem_limit_bytes=_VMEM_LIMIT),
        cost_estimate=pl.CostEstimate(
            flops=int(flops), transcendentals=int(trans),
            bytes_accessed=int(bytes_acc)),
    )(*inputs)


# ----------------------------------------------------------------------------
# Fused MLP chain: activation tile stays resident in VMEM across layers
# ----------------------------------------------------------------------------
def _mlp_chain_kernel(h_ref, w_ref, b_ref, o_ref, *, num_layers, residual):
    hf = h_ref[...].astype(jnp.float32)                   # [TM, H] f32
    for l in range(num_layers):                           # static unroll
        acc = jnp.dot(hf.astype(jnp.bfloat16), w_ref[l],
                      preferred_element_type=jnp.float32)
        acc = acc + b_ref[l]
        acc = acc * jax.nn.sigmoid(acc)
        hf = (hf + acc) if residual else acc
    o_ref[...] = hf.astype(o_ref.dtype)


def mlp_chain(h, w_stack, b_stack, *, residual, tm):
    """h:[M,H] bf16; w_stack:[L,H,H] bf16; b_stack:[L,1,H] f32.
    residual=True  -> h = swish(h @ W_l + b_l) + h   (InterBlock tail)
    residual=False -> h = swish(h @ W_l + b_l)       (output MLP)."""
    M, K = h.shape
    assert M % tm == 0, (M, tm)
    L, _, N = w_stack.shape
    grid = (M // tm,)
    return pl.pallas_call(
        functools.partial(_mlp_chain_kernel, num_layers=L, residual=residual),
        out_shape=jax.ShapeDtypeStruct((M, N), jnp.bfloat16),
        grid=grid,
        in_specs=[pl.BlockSpec((tm, K), lambda i: (i, 0)),
                  pl.BlockSpec((L, K, N), lambda i: (0, 0, 0)),
                  pl.BlockSpec((L, 1, N), lambda i: (0, 0, 0))],
        out_specs=pl.BlockSpec((tm, N), lambda i: (i, 0)),
        compiler_params=pltpu.CompilerParams(
            dimension_semantics=("parallel",),
            vmem_limit_bytes=_VMEM_LIMIT),
        cost_estimate=pl.CostEstimate(
            flops=int(2 * M * K * N * L),
            transcendentals=int(M * N * L),
            bytes_accessed=int(M * K * 2 + L * K * N * 2 + L * N * 4
                               + M * N * 2)),
    )(h, w_stack, b_stack)


# ----------------------------------------------------------------------------
# Geometric feature embeddings (simplified)
# ----------------------------------------------------------------------------
# TODO(synk): the reference dist_calc selects per-node reference neighbours
# (nearest / 2nd-nearest) to define theta/phi/tau; here angles are taken from
# the raw edge vectors in a fixed global frame.
def _angles(vecs, dist):
    theta = jnp.arccos(jnp.clip(vecs[:, 2] / dist, -1.0, 1.0))
    phi = jnp.arctan2(vecs[:, 1], vecs[:, 0])
    tau = jnp.arctan2(vecs[:, 2], vecs[:, 0])
    return theta, phi, tau


def _radial_basis(dist, num_radial, cutoff):
    # TODO(synk): linear clip envelope instead of ComENet's polynomial envelope.
    d = (dist / cutoff)[:, None]                              # [E, 1]
    n = jnp.arange(1, num_radial + 1, dtype=jnp.float32)[None, :]
    env = jnp.clip(1.0 - d, 0.0, 1.0)
    safe_d = jnp.where(d < 1e-6, 1.0, d)
    rbf = jnp.where(d < 1e-6, n * jnp.pi, jnp.sin(n * jnp.pi * d) / safe_d)
    return rbf * env                                          # [E, R]


# TODO(synk): torsion_emb / angle_emb use sympy-generated spherical Bessel
# functions * real spherical harmonics; replaced by a deterministic Fourier
# basis with identical output shapes.
def torsion_emb(dist, theta, phi, num_radial, num_spherical, cutoff):
    E = dist.shape[0]
    rbf = _radial_basis(dist, num_radial, cutoff)             # [E, R]
    l = jnp.arange(num_spherical, dtype=jnp.float32)
    a_t = jnp.cos(theta[:, None] * l[None, :])                # [E, S]
    a_p = jnp.cos(phi[:, None] * l[None, :])                  # [E, S]
    sph = (a_t[:, :, None] * a_p[:, None, :]).reshape(E, -1)  # [E, S*S]
    out = rbf[:, :, None] * sph[:, None, :]                   # [E, R, S*S]
    return out.reshape(E, num_radial * num_spherical ** 2)


def angle_emb(dist, tau, num_radial, num_spherical, cutoff):
    E = dist.shape[0]
    rbf = _radial_basis(dist, num_radial, cutoff)             # [E, R]
    l = jnp.arange(num_spherical, dtype=jnp.float32)
    ang = jnp.cos(tau[:, None] * l[None, :])                  # [E, S]
    out = rbf[:, :, None] * ang[:, None, :]                   # [E, R, S]
    return out.reshape(E, num_radial * num_spherical)


# ----------------------------------------------------------------------------
# Graph glue (data-dependent gather / segment-sum stays in plain JAX)
# ----------------------------------------------------------------------------
def graph_norm_affine(p, x, batch, num_segments, eps=1e-5):
    """Per-graph GraphNorm stats in JAX; returns row-aligned affine (a, c) so
    the elementwise apply `x*a + c` can ride as a prologue of the next matmul
    kernel instead of a separate HBM pass."""
    xf = x.astype(jnp.float32)
    ones = jnp.ones((xf.shape[0], 1), jnp.float32)
    counts = jnp.maximum(
        jax.ops.segment_sum(ones, batch, num_segments=num_segments), 1.0)
    mean = jax.ops.segment_sum(xf, batch, num_segments=num_segments) / counts
    centered = xf - mean[batch] * p['mean_scale']
    var = jax.ops.segment_sum(centered * centered, batch,
                              num_segments=num_segments) / counts
    invstd = jax.lax.rsqrt(var + eps)                         # [G, H]
    a = (p['weight'] * invstd)[batch]                         # [M, H]
    c = p['bias'] - (mean * p['mean_scale'] * p['weight'] * invstd)[batch]
    return a.astype(jnp.bfloat16), c.astype(jnp.bfloat16)


def edge_aggregate(x_nodes, edge_weight, src, dst, num_nodes):
    """msg = x[src] * edge_weight; segment-sum over dst.  Padded edges carry
    zero edge weights so they contribute nothing."""
    msg = x_nodes[src].astype(jnp.float32) * edge_weight.astype(jnp.float32)
    agg = jax.ops.segment_sum(msg, dst, num_segments=num_nodes)
    return agg.astype(jnp.bfloat16)


# ----------------------------------------------------------------------------
# Full forward
# ----------------------------------------------------------------------------
def comenet_forward(params, x_int, pos, edge_index, batch, *,
                    cutoff, num_nodes, num_graphs, num_radial, num_spherical):
    src, dst = edge_index[0], edge_index[1]
    num_edges = src.shape[0]

    # --- pad rows ONCE; padded nodes go to a dummy graph segment -----------
    tm_n = _choose_tm(num_nodes)
    n_pad = _round_up(max(num_nodes, 8), tm_n)
    tm_e = _choose_tm(num_edges)
    e_pad = _round_up(max(num_edges, 8), tm_e)
    nseg = num_graphs + 1                                  # last = dummy

    vecs = pos[dst] - pos[src]
    dist = jnp.sqrt(jnp.sum(vecs ** 2, axis=-1) + 1e-12)
    theta, phi, tau = _angles(vecs, dist)
    feat1 = torsion_emb(dist, theta, phi, num_radial, num_spherical, cutoff)
    feat2 = angle_emb(dist, tau, num_radial, num_spherical, cutoff)
    # padded feature rows are zero -> zero edge weights -> zero messages
    feat1 = jnp.pad(feat1, ((0, e_pad - num_edges), (0, 0))).astype(jnp.bfloat16)
    feat2 = jnp.pad(feat2, ((0, e_pad - num_edges), (0, 0))).astype(jnp.bfloat16)
    src_p = jnp.pad(src, (0, e_pad - num_edges))
    dst_p = jnp.pad(dst, (0, e_pad - num_edges))

    # x = swish(embedding(x).sum(1)) -- plain jnp so XLA fuses gather+sum+cast
    h0 = jnp.sum(params['x_emb'][x_int], axis=1)           # [N, H]
    x = h0 * jax.nn.sigmoid(h0)
    x = jnp.pad(x, ((0, n_pad - num_nodes), (0, 0))).astype(jnp.bfloat16)
    batch_p = jnp.pad(batch, (0, n_pad - num_nodes),
                      constant_values=num_graphs)           # dummy segment

    norm_aff = None
    for bi, blk in enumerate(params['blocks']):
        # entrance: for bi>0 this is GraphNorm-apply + (final_{bi-1} ∘ linear)
        # composed at init, so the previous block's `final` costs no extra call
        x_in = fused_op(x, blk['entrance']['w'], blk['entrance']['b'],
                        norm=norm_aff, act=True, tm=tm_n)

        # edge weight 1 (composed TwoLayerLinear) + conv1 + linear1 + swish
        f1 = fused_op(feat1, blk['lin_feat1'], tm=tm_e)             # [E_pad,H]
        agg1 = edge_aggregate(x_in, f1, src_p, dst_p, n_pad)
        h1 = fused_op(agg1, blk['conv1']['w'], blk['conv1']['b'], x2=x_in,
                      chain=(blk['linear1']['w'], blk['linear1']['b']),
                      tm=tm_n)

        # edge weight 2 + conv2 + linear2 + swish
        f2 = fused_op(feat2, blk['lin_feat2'], tm=tm_e)
        agg2 = edge_aggregate(x_in, f2, src_p, dst_p, n_pad)
        h2 = fused_op(agg2, blk['conv2']['w'], blk['conv2']['b'], x2=x_in,
                      chain=(blk['linear2']['w'], blk['linear2']['b']),
                      tm=tm_n)

        # h = linear_cat([h1|h2]) + x_in   (merged K=2H contraction + residual)
        h = fused_op(h1, blk['cat']['w'], blk['cat']['b'], x2=h2, res=x_in,
                     tm=tm_n)

        # residual MLP tail (activation tile resident across layers)
        h = mlp_chain(h, blk['res_mlp']['w'], blk['res_mlp']['b'],
                      residual=True, tm=tm_n)

        # GraphNorm stats; elementwise apply + `final` matmul are folded into
        # the next block's entrance / the output-MLP entry kernel.
        norm_aff = graph_norm_affine(blk['norm'], h, batch_p, nseg)
        x = h

    # GraphNorm-apply + (final_last ∘ out_linear[0]) + swish, one kernel
    x = fused_op(x, params['out_entry']['w'], params['out_entry']['b'],
                 norm=norm_aff, act=True, tm=tm_n)
    # remaining output layers, activation resident in VMEM
    if params['out_mlp'] is not None:
        x = mlp_chain(x, params['out_mlp']['w'], params['out_mlp']['b'],
                      residual=False, tm=tm_n)

    # out_channels=1 projection in plain jnp (lane-sparse output), fused by XLA
    out = jnp.dot(x.astype(jnp.float32), params['out']['w']) + params['out']['b']
    energy = jax.ops.segment_sum(out, batch_p, num_segments=nseg)
    return energy[:num_graphs]


# ----------------------------------------------------------------------------
# Deterministic parameter init (weights pre-transposed [in, out], bf16)
# ----------------------------------------------------------------------------
def init_params(key, hidden, middle, num_radial, num_spherical,
                num_layers, num_output_layers, out_channels):
    keys = iter(jax.random.split(key, 4096))

    def glorot(out_c, in_c):
        bound = math.sqrt(6.0 / (in_c + out_c))
        return jax.random.uniform(next(keys), (out_c, in_c), jnp.float32,
                                  -bound, bound)

    def lin_f32(in_c, out_c):       # (w [in,out] f32, b [1,out] f32)
        return glorot(out_c, in_c).T, jnp.zeros((1, out_c), jnp.float32)

    def to_bf(w):
        return w.astype(jnp.bfloat16)

    def two_layer_composed(in_c, mid_c, out_c):
        # TwoLayerLinear(bias=False, act=False): x @ W1^T @ W2^T == x @ (W2 W1)^T
        w1 = glorot(mid_c, in_c)
        w2 = glorot(out_c, mid_c)
        return to_bf(jnp.dot(w2, w1).T)                      # [in, out]

    def stacked(n, in_c, out_c):
        ws = jnp.stack([glorot(out_c, in_c).T for _ in range(n)])
        return {'w': to_bf(ws), 'b': jnp.zeros((n, 1, out_c), jnp.float32)}

    f1_dim = num_radial * num_spherical ** 2
    f2_dim = num_radial * num_spherical

    # raw per-block weights (f32, pre-transposed [in, out])
    raw_blocks = []
    for _ in range(num_layers):
        linear_w, linear_b = lin_f32(hidden, hidden)
        rel1_w, rel1_b = lin_f32(hidden, hidden)
        root1_w = glorot(hidden, hidden).T
        rel2_w, rel2_b = lin_f32(hidden, hidden)
        root2_w = glorot(hidden, hidden).T
        lin1_w, lin1_b = lin_f32(hidden, hidden)
        lin2_w, lin2_b = lin_f32(hidden, hidden)
        cat_w, cat_b = lin_f32(2 * hidden, hidden)
        final_w, final_b = lin_f32(hidden, hidden)           # output_ch == hidden
        raw_blocks.append(dict(
            linear=(linear_w, linear_b),
            lin_feat1=two_layer_composed(f1_dim, middle, hidden),
            lin_feat2=two_layer_composed(f2_dim, middle, hidden),
            conv1=(jnp.concatenate([rel1_w, root1_w], axis=0), rel1_b),
            conv2=(jnp.concatenate([rel2_w, root2_w], axis=0), rel2_b),
            linear1=(lin1_w, lin1_b), linear2=(lin2_w, lin2_b),
            cat=(cat_w, cat_b), final=(final_w, final_b),
            res_mlp=stacked(num_output_layers, hidden, hidden),
            norm={'weight': jnp.ones((hidden,), jnp.float32),
                  'bias': jnp.zeros((hidden,), jnp.float32),
                  'mean_scale': jnp.ones((hidden,), jnp.float32)},
        ))

    out_mlp_raw = [lin_f32(hidden, hidden) for _ in range(num_output_layers)]
    out_w = glorot(out_channels, hidden).T                    # [hidden, out] f32
    out_b = jnp.zeros((out_channels,), jnp.float32)

    # Compose block i's `final` with the next consumer's first Linear (exact in
    # f32; the GraphNorm apply becomes the prologue of that composed kernel).
    blocks = []
    for i, rb in enumerate(raw_blocks):
        lin_w, lin_b = rb['linear']
        if i == 0:
            ent_w, ent_b = lin_w, lin_b
        else:
            pf_w, pf_b = raw_blocks[i - 1]['final']
            ent_w = jnp.dot(pf_w, lin_w)
            ent_b = jnp.dot(pf_b, lin_w) + lin_b
        blocks.append({
            'entrance': {'w': to_bf(ent_w), 'b': ent_b},
            'lin_feat1': rb['lin_feat1'], 'lin_feat2': rb['lin_feat2'],
            'conv1': {'w': to_bf(rb['conv1'][0]), 'b': rb['conv1'][1]},
            'conv2': {'w': to_bf(rb['conv2'][0]), 'b': rb['conv2'][1]},
            'linear1': {'w': to_bf(rb['linear1'][0]), 'b': rb['linear1'][1]},
            'linear2': {'w': to_bf(rb['linear2'][0]), 'b': rb['linear2'][1]},
            'cat': {'w': to_bf(rb['cat'][0]), 'b': rb['cat'][1]},
            'res_mlp': rb['res_mlp'],
            'norm': rb['norm'],
        })

    lf_w, lf_b = raw_blocks[-1]['final']
    o0_w, o0_b = out_mlp_raw[0]
    out_entry = {'w': to_bf(jnp.dot(lf_w, o0_w)),
                 'b': jnp.dot(lf_b, o0_w) + o0_b}
    if num_output_layers > 1:
        out_mlp = {'w': to_bf(jnp.stack([w for w, _ in out_mlp_raw[1:]])),
                   'b': jnp.concatenate([b[None] for _, b in out_mlp_raw[1:]],
                                        axis=0)}
    else:
        out_mlp = None

    return {
        'x_emb': jax.random.uniform(next(keys), (178, hidden), jnp.float32,
                                    -math.sqrt(3.0), math.sqrt(3.0)),
        'blocks': blocks,
        'out_entry': out_entry,
        'out_mlp': out_mlp,
        'out': {'w': out_w, 'b': out_b},
    }


# ----------------------------------------------------------------------------
# Example run
# ----------------------------------------------------------------------------
if __name__ == "__main__":
    # Small, forward-consistent shapes; hidden kept lane-dense (multiple of 128).
    N, E, F = 16, 32, 3            # nodes, edges, atom-feature columns
    HIDDEN, MIDDLE = 128, 64
    NUM_RADIAL, NUM_SPHERICAL = 3, 2
    NUM_LAYERS, NUM_OUTPUT_LAYERS = 2, 2
    OUT_CHANNELS = 1
    CUTOFF = 8.0
    NUM_GRAPHS = 2

    key = jax.random.PRNGKey(0)
    kp, k1, k2, k3, k4 = jax.random.split(key, 5)

    params = init_params(kp, HIDDEN, MIDDLE, NUM_RADIAL, NUM_SPHERICAL,
                         NUM_LAYERS, NUM_OUTPUT_LAYERS, OUT_CHANNELS)

    x_int = jax.random.randint(k1, (N, F), 0, 178)
    pos = jax.random.normal(k2, (N, 3), jnp.float32) * 2.0
    src = jax.random.randint(k3, (E,), 0, N)
    dst = (src + 1 + jax.random.randint(k4, (E,), 0, N - 1)) % N   # no self loops
    edge_index = jnp.stack([src, dst]).astype(jnp.int32)
    batch = jnp.concatenate([jnp.zeros(N // 2, jnp.int32),
                             jnp.ones(N // 2, jnp.int32)])

    fwd = jax.jit(functools.partial(
        comenet_forward, cutoff=CUTOFF, num_nodes=N, num_graphs=NUM_GRAPHS,
        num_radial=NUM_RADIAL, num_spherical=NUM_SPHERICAL))

    energy = fwd(params, x_int, pos, edge_index, batch)
    jax.block_until_ready(energy)
    assert energy.shape == (NUM_GRAPHS, OUT_CHANNELS)
    assert bool(jnp.all(jnp.isfinite(energy)))
    print("KERNEL_OK")
</pallas_src>

<mosaic_0001>
module attributes {stable_mosaic.version = 11 : i64} {
  func.func @_fused_kernel(%arg0: i32, %arg1: memref<8x128xbf16, #tpu.memory_space<vmem>>, %arg2: memref<128x128xbf16, #tpu.memory_space<vmem>>, %arg3: memref<1x128xf32, #tpu.memory_space<vmem>>, %arg4: memref<8x128xbf16, #tpu.memory_space<vmem>>) attributes {dimension_semantics = [#tpu.dimension_semantics<parallel>], iteration_bounds = array<i64: 2>, scalar_prefetch = 0 : i64, scratch_operands = 0 : i64, tpu.core_type = #tpu.core_type<tc>, window_params = [{transform_indices = @transform_0, window_bounds = array<i64: 8, 128>}, {pipeline_mode = #tpu.pipeline_mode<synchronous>, transform_indices = @transform_1, window_bounds = array<i64: 128, 128>}, {pipeline_mode = #tpu.pipeline_mode<synchronous>, transform_indices = @transform_2, window_bounds = array<i64: 1, 128>}, {transform_indices = @transform_3, window_bounds = array<i64: 8, 128>}]} {
    %c0 = arith.constant 0 : index
    %c0_0 = arith.constant 0 : index
    %0 = vector.load %arg1[%c0, %c0_0] : memref<8x128xbf16, #tpu.memory_space<vmem>>, vector<8x128xbf16>
    %c0_1 = arith.constant 0 : index
    %c0_2 = arith.constant 0 : index
    %1 = vector.load %arg2[%c0_1, %c0_2] : memref<128x128xbf16, #tpu.memory_space<vmem>>, vector<128x128xbf16>
    %cst = arith.constant dense<0.000000e+00> : vector<8x128xf32>
    %2 = tpu.matmul %0, %1, %cst {dimension_numbers = #tpu.dot_dimension_numbers<[1], [0], [0], [1], [0, 0, 1, 1], [], []>} : vector<8x128xbf16>, vector<128x128xbf16>, vector<8x128xf32> -> vector<8x128xf32>
    %c0_3 = arith.constant 0 : index
    %c0_4 = arith.constant 0 : index
    %3 = vector.load %arg3[%c0_3, %c0_4] : memref<1x128xf32, #tpu.memory_space<vmem>>, vector<1x128xf32>
    %4 = vector.broadcast %3 : vector<1x128xf32> to vector<8x128xf32>
    %5 = arith.addf %2, %4 : vector<8x128xf32>
    %6 = arith.negf %5 : vector<8x128xf32>
    %7 = math.exp %6 : vector<8x128xf32>
    %cst_5 = arith.constant 1.000000e+00 : f32
    %8 = vector.broadcast %cst_5 : f32 to vector<8x128xf32>
    %9 = arith.addf %8, %7 : vector<8x128xf32>
    %10 = arith.divf %8, %9 : vector<8x128xf32>
    %11 = arith.mulf %5, %10 : vector<8x128xf32>
    %12 = arith.truncf %11 : vector<8x128xf32> to vector<8x128xbf16>
    %c0_6 = arith.constant 0 : index
    %c0_7 = arith.constant 0 : index
    %13 = vector.load %arg4[%c0_6, %c0_7] : memref<8x128xbf16, #tpu.memory_space<vmem>>, vector<8x128xbf16>
    tpu.vector_store %arg4[%c0_6, %c0_7], %12 {strides = array<i32>} : memref<8x128xbf16, #tpu.memory_space<vmem>>, vector<8x128xbf16>,
    return
  }
  func.func @transform_0(%arg0: i32) -> (i32, i32) {
    %c0_i32 = arith.constant 0 : i32
    %c0_i32_0 = arith.constant 0 : i32
    return %arg0, %c0_i32 : i32, i32
  }
  func.func @transform_1(%arg0: i32) -> (i32, i32) {
    %c0_i32 = arith.constant 0 : i32
    %c0_i32_0 = arith.constant 0 : i32
    %c0_i32_1 = arith.constant 0 : i32
    return %c0_i32, %c0_i32_0 : i32, i32
  }
  func.func @transform_2(%arg0: i32) -> (i32, i32) {
    %c0_i32 = arith.constant 0 : i32
    %c0_i32_0 = arith.constant 0 : i32
    %c0_i32_1 = arith.constant 0 : i32
    return %c0_i32, %c0_i32_0 : i32, i32
  }
  func.func @transform_3(%arg0: i32) -> (i32, i32) {
    %c0_i32 = arith.constant 0 : i32
    %c0_i32_0 = arith.constant 0 : i32
    return %arg0, %c0_i32 : i32, i32
  }
}

module attributes {stable_mosaic.version = 11 : i64} {
  func.func @_fused_kernel(%arg0: i32, %arg1: memref<16x12xbf16, #tpu.memory_space<vmem>>, %arg2: memref<12x128xbf16, #tpu.memory_space<vmem>>, %arg3: memref<16x128xbf16, #tpu.memory_space<vmem>>) attributes {dimension_semantics = [#tpu.dimension_semantics<parallel>], iteration_bounds = array<i64: 2>, scalar_prefetch = 0 : i64, scratch_operands = 0 : i64, tpu.core_type = #tpu.core_type<tc>, window_params = [{transform_indices = @transform_0, window_bounds = array<i64: 16, 12>}, {pipeline_mode = #tpu.pipeline_mode<synchronous>, transform_indices = @transform_1, window_bounds = array<i64: 12, 128>}, {transform_indices = @transform_2, window_bounds = array<i64: 16, 128>}]} {
    %c0 = arith.constant 0 : index
    %c0_0 = arith.constant 0 : index
    %0 = vector.load %arg1[%c0, %c0_0] : memref<16x12xbf16, #tpu.memory_space<vmem>>, vector<16x12xbf16>
    %c0_1 = arith.constant 0 : index
    %c0_2 = arith.constant 0 : index
    %1 = vector.load %arg2[%c0_1, %c0_2] : memref<12x128xbf16, #tpu.memory_space<vmem>>, vector<12x128xbf16>
    %cst = arith.constant dense<0.000000e+00> : vector<16x128xf32>
    %2 = tpu.matmul %0, %1, %cst {dimension_numbers = #tpu.dot_dimension_numbers<[1], [0], [0], [1], [0, 0, 1, 1], [], []>} : vector<16x12xbf16>, vector<12x128xbf16>, vector<16x128xf32> -> vector<16x128xf32>
    %3 = arith.truncf %2 : vector<16x128xf32> to vector<16x128xbf16>
    %c0_3 = arith.constant 0 : index
    %c0_4 = arith.constant 0 : index
    %4 = vector.load %arg3[%c0_3, %c0_4] : memref<16x128xbf16, #tpu.memory_space<vmem>>, vector<16x128xbf16>
    tpu.vector_store %arg3[%c0_3, %c0_4], %3 {strides = array<i32>} : memref<16x128xbf16, #tpu.memory_space<vmem>>, vector<16x128xbf16>,
    return
  }
  func.func @transform_0(%arg0: i32) -> (i32, i32) {
    %c0_i32 = arith.constant 0 : i32
    %c0_i32_0 = arith.constant 0 : i32
    return %arg0, %c0_i32 : i32, i32
  }
  func.func @transform_1(%arg0: i32) -> (i32, i32) {
    %c0_i32 = arith.constant 0 : i32
    %c0_i32_0 = arith.constant 0 : i32
    %c0_i32_1 = arith.constant 0 : i32
    return %c0_i32, %c0_i32_0 : i32, i32
  }
  func.func @transform_2(%arg0: i32) -> (i32, i32) {
    %c0_i32 = arith.constant 0 : i32
    %c0_i32_0 = arith.constant 0 : i32
    return %arg0, %c0_i32 : i32, i32
  }
}

module attributes {stable_mosaic.version = 11 : i64} {
  func.func @_fused_kernel(%arg0: i32, %arg1: memref<8x128xbf16, #tpu.memory_space<vmem>>, %arg2: memref<8x128xbf16, #tpu.memory_space<vmem>>, %arg3: memref<256x128xbf16, #tpu.memory_space<vmem>>, %arg4: memref<1x128xf32, #tpu.memory_space<vmem>>, %arg5: memref<128x128xbf16, #tpu.memory_space<vmem>>, %arg6: memref<1x128xf32, #tpu.memory_space<vmem>>, %arg7: memref<8x128xbf16, #tpu.memory_space<vmem>>) attributes {dimension_semantics = [#tpu.dimension_semantics<parallel>], iteration_bounds = array<i64: 2>, scalar_prefetch = 0 : i64, scratch_operands = 0 : i64, tpu.core_type = #tpu.core_type<tc>, window_params = [{transform_indices = @transform_0, window_bounds = array<i64: 8, 128>}, {transform_indices = @transform_1, window_bounds = array<i64: 8, 128>}, {pipeline_mode = #tpu.pipeline_mode<synchronous>, transform_indices = @transform_2, window_bounds = array<i64: 256, 128>}, {pipeline_mode = #tpu.pipeline_mode<synchronous>, transform_indices = @transform_3, window_bounds = array<i64: 1, 128>}, {pipeline_mode = #tpu.pipeline_mode<synchronous>, transform_indices = @transform_4, window_bounds = array<i64: 128, 128>}, {pipeline_mode = #tpu.pipeline_mode<synchronous>, transform_indices = @transform_5, window_bounds = array<i64: 1, 128>}, {transform_indices = @transform_6, window_bounds = array<i64: 8, 128>}]} {
    %c0 = arith.constant 0 : index
    %c0_0 = arith.constant 0 : index
    %0 = vector.load %arg1[%c0, %c0_0] : memref<8x128xbf16, #tpu.memory_space<vmem>>, vector<8x128xbf16>
    %c0_1 = arith.constant 0 : index
    %c0_2 = arith.constant 0 : index
    %1 = vector.load %arg2[%c0_1, %c0_2] : memref<8x128xbf16, #tpu.memory_space<vmem>>, vector<8x128xbf16>
    %2 = tpu.concatenate %0, %1 in 1 : vector<8x128xbf16>, vector<8x128xbf16> -> vector<8x256xbf16>
    %c0_3 = arith.constant 0 : index
    %c0_4 = arith.constant 0 : index
    %3 = vector.load %arg3[%c0_3, %c0_4] : memref<256x128xbf16, #tpu.memory_space<vmem>>, vector<256x128xbf16>
    %cst = arith.constant dense<0.000000e+00> : vector<8x128xf32>
    %4 = tpu.matmul %2, %3, %cst {dimension_numbers = #tpu.dot_dimension_numbers<[1], [0], [0], [1], [0, 0, 1, 1], [], []>} : vector<8x256xbf16>, vector<256x128xbf16>, vector<8x128xf32> -> vector<8x128xf32>
    %c0_5 = arith.constant 0 : index
    %c0_6 = arith.constant 0 : index
    %5 = vector.load %arg4[%c0_5, %c0_6] : memref<1x128xf32, #tpu.memory_space<vmem>>, vector<1x128xf32>
    %6 = vector.broadcast %5 : vector<1x128xf32> to vector<8x128xf32>
    %7 = arith.addf %4, %6 : vector<8x128xf32>
    %8 = arith.truncf %7 : vector<8x128xf32> to vector<8x128xbf16>
    %c0_7 = arith.constant 0 : index
    %c0_8 = arith.constant 0 : index
    %9 = vector.load %arg5[%c0_7, %c0_8] : memref<128x128xbf16, #tpu.memory_space<vmem>>, vector<128x128xbf16>
    %cst_9 = arith.constant dense<0.000000e+00> : vector<8x128xf32>
    %10 = tpu.matmul %8, %9, %cst_9 {dimension_numbers = #tpu.dot_dimension_numbers<[1], [0], [0], [1], [0, 0, 1, 1], [], []>} : vector<8x128xbf16>, vector<128x128xbf16>, vector<8x128xf32> -> vector<8x128xf32>
    %c0_10 = arith.constant 0 : index
    %c0_11 = arith.constant 0 : index
    %11 = vector.load %arg6[%c0_10, %c0_11] : memref<1x128xf32, #tpu.memory_space<vmem>>, vector<1x128xf32>
    %12 = vector.broadcast %11 : vector<1x128xf32> to vector<8x128xf32>
    %13 = arith.addf %10, %12 : vector<8x128xf32>
    %14 = arith.negf %13 : vector<8x128xf32>
    %15 = math.exp %14 : vector<8x128xf32>
    %cst_12 = arith.constant 1.000000e+00 : f32
    %16 = vector.broadcast %cst_12 : f32 to vector<8x128xf32>
    %17 = arith.addf %16, %15 : vector<8x128xf32>
    %18 = arith.divf %16, %17 : vector<8x128xf32>
    %19 = arith.mulf %13, %18 : vector<8x128xf32>
    %20 = arith.truncf %19 : vector<8x128xf32> to vector<8x128xbf16>
    %c0_13 = arith.constant 0 : index
    %c0_14 = arith.constant 0 : index
    %21 = vector.load %arg7[%c0_13, %c0_14] : memref<8x128xbf16, #tpu.memory_space<vmem>>, vector<8x128xbf16>
    tpu.vector_store %arg7[%c0_13, %c0_14], %20 {strides = array<i32>} : memref<8x128xbf16, #tpu.memory_space<vmem>>, vector<8x128xbf16>,
    return
  }
  func.func @transform_0(%arg0: i32) -> (i32, i32) {
    %c0_i32 = arith.constant 0 : i32
    %c0_i32_0 = arith.constant 0 : i32
    return %arg0, %c0_i32 : i32, i32
  }
  func.func @transform_1(%arg0: i32) -> (i32, i32) {
    %c0_i32 = arith.constant 0 : i32
    %c0_i32_0 = arith.constant 0 : i32
    return %arg0, %c0_i32 : i32, i32
  }
  func.func @transform_2(%arg0: i32) -> (i32, i32) {
    %c0_i32 = arith.constant 0 : i32
    %c0_i32_0 = arith.constant 0 : i32
    %c0_i32_1 = arith.constant 0 : i32
    return %c0_i32, %c0_i32_0 : i32, i32
  }
  func.func @transform_3(%arg0: i32) -> (i32, i32) {
    %c0_i32 = arith.constant 0 : i32
    %c0_i32_0 = arith.constant 0 : i32
    %c0_i32_1 = arith.constant 0 : i32
    return %c0_i32, %c0_i32_0 : i32, i32
  }
  func.func @transform_4(%arg0: i32) -> (i32, i32) {
    %c0_i32 = arith.constant 0 : i32
    %c0_i32_0 = arith.constant 0 : i32
    %c0_i32_1 = arith.constant 0 : i32
    return %c0_i32, %c0_i32_0 : i32, i32
  }
  func.func @transform_5(%arg0: i32) -> (i32, i32) {
    %c0_i32 = arith.constant 0 : i32
    %c0_i32_0 = arith.constant 0 : i32
    %c0_i32_1 = arith.constant 0 : i32
    return %c0_i32, %c0_i32_0 : i32, i32
  }
  func.func @transform_6(%arg0: i32) -> (i32, i32) {
    %c0_i32 = arith.constant 0 : i32
    %c0_i32_0 = arith.constant 0 : i32
    return %arg0, %c0_i32 : i32, i32
  }
}

module attributes {stable_mosaic.version = 11 : i64} {
  func.func @_fused_kernel(%arg0: i32, %arg1: memref<8x128xbf16, #tpu.memory_space<vmem>>, %arg2: memref<8x128xbf16, #tpu.memory_space<vmem>>, %arg3: memref<256x128xbf16, #tpu.memory_space<vmem>>, %arg4: memref<1x128xf32, #tpu.memory_space<vmem>>, %arg5: memref<8x128xbf16, #tpu.memory_space<vmem>>, %arg6: memref<8x128xbf16, #tpu.memory_space<vmem>>) attributes {dimension_semantics = [#tpu.dimension_semantics<parallel>], iteration_bounds = array<i64: 2>, scalar_prefetch = 0 : i64, scratch_operands = 0 : i64, tpu.core_type = #tpu.core_type<tc>, window_params = [{transform_indices = @transform_0, window_bounds = array<i64: 8, 128>}, {transform_indices = @transform_1, window_bounds = array<i64: 8, 128>}, {pipeline_mode = #tpu.pipeline_mode<synchronous>, transform_indices = @transform_2, window_bounds = array<i64: 256, 128>}, {pipeline_mode = #tpu.pipeline_mode<synchronous>, transform_indices = @transform_3, window_bounds = array<i64: 1, 128>}, {transform_indices = @transform_4, window_bounds = array<i64: 8, 128>}, {transform_indices = @transform_5, window_bounds = array<i64: 8, 128>}]} {
    %c0 = arith.constant 0 : index
    %c0_0 = arith.constant 0 : index
    %0 = vector.load %arg1[%c0, %c0_0] : memref<8x128xbf16, #tpu.memory_space<vmem>>, vector<8x128xbf16>
    %c0_1 = arith.constant 0 : index
    %c0_2 = arith.constant 0 : index
    %1 = vector.load %arg2[%c0_1, %c0_2] : memref<8x128xbf16, #tpu.memory_space<vmem>>, vector<8x128xbf16>
    %2 = tpu.concatenate %0, %1 in 1 : vector<8x128xbf16>, vector<8x128xbf16> -> vector<8x256xbf16>
    %c0_3 = arith.constant 0 : index
    %c0_4 = arith.constant 0 : index
    %3 = vector.load %arg3[%c0_3, %c0_4] : memref<256x128xbf16, #tpu.memory_space<vmem>>, vector<256x128xbf16>
    %cst = arith.constant dense<0.000000e+00> : vector<8x128xf32>
    %4 = tpu.matmul %2, %3, %cst {dimension_numbers = #tpu.dot_dimension_numbers<[1], [0], [0], [1], [0, 0, 1, 1], [], []>} : vector<8x256xbf16>, vector<256x128xbf16>, vector<8x128xf32> -> vector<8x128xf32>
    %c0_5 = arith.constant 0 : index
    %c0_6 = arith.constant 0 : index
    %5 = vector.load %arg4[%c0_5, %c0_6] : memref<1x128xf32, #tpu.memory_space<vmem>>, vector<1x128xf32>
    %6 = vector.broadcast %5 : vector<1x128xf32> to vector<8x128xf32>
    %7 = arith.addf %4, %6 : vector<8x128xf32>
    %c0_7 = arith.constant 0 : index
    %c0_8 = arith.constant 0 : index
    %8 = vector.load %arg5[%c0_7, %c0_8] : memref<8x128xbf16, #tpu.memory_space<vmem>>, vector<8x128xbf16>
    %9 = arith.extf %8 : vector<8x128xbf16> to vector<8x128xf32>
    %10 = arith.addf %7, %9 : vector<8x128xf32>
    %11 = arith.truncf %10 : vector<8x128xf32> to vector<8x128xbf16>
    %c0_9 = arith.constant 0 : index
    %c0_10 = arith.constant 0 : index
    %12 = vector.load %arg6[%c0_9, %c0_10] : memref<8x128xbf16, #tpu.memory_space<vmem>>, vector<8x128xbf16>
    tpu.vector_store %arg6[%c0_9, %c0_10], %11 {strides = array<i32>} : memref<8x128xbf16, #tpu.memory_space<vmem>>, vector<8x128xbf16>,
    return
  }
  func.func @transform_0(%arg0: i32) -> (i32, i32) {
    %c0_i32 = arith.constant 0 : i32
    %c0_i32_0 = arith.constant 0 : i32
    return %arg0, %c0_i32 : i32, i32
  }
  func.func @transform_1(%arg0: i32) -> (i32, i32) {
    %c0_i32 = arith.constant 0 : i32
    %c0_i32_0 = arith.constant 0 : i32
    return %arg0, %c0_i32 : i32, i32
  }
  func.func @transform_2(%arg0: i32) -> (i32, i32) {
    %c0_i32 = arith.constant 0 : i32
    %c0_i32_0 = arith.constant 0 : i32
    %c0_i32_1 = arith.constant 0 : i32
    return %c0_i32, %c0_i32_0 : i32, i32
  }
  func.func @transform_3(%arg0: i32) -> (i32, i32) {
    %c0_i32 = arith.constant 0 : i32
    %c0_i32_0 = arith.constant 0 : i32
    %c0_i32_1 = arith.constant 0 : i32
    return %c0_i32, %c0_i32_0 : i32, i32
  }
  func.func @transform_4(%arg0: i32) -> (i32, i32) {
    %c0_i32 = arith.constant 0 : i32
    %c0_i32_0 = arith.constant 0 : i32
    return %arg0, %c0_i32 : i32, i32
  }
  func.func @transform_5(%arg0: i32) -> (i32, i32) {
    %c0_i32 = arith.constant 0 : i32
    %c0_i32_0 = arith.constant 0 : i32
    return %arg0, %c0_i32 : i32, i32
  }
}

module attributes {stable_mosaic.version = 11 : i64} {
  func.func @_mlp_chain_kernel(%arg0: i32, %arg1: memref<8x128xbf16, #tpu.memory_space<vmem>>, %arg2: memref<2x128x128xbf16, #tpu.memory_space<vmem>>, %arg3: memref<2x1x128xf32, #tpu.memory_space<vmem>>, %arg4: memref<8x128xbf16, #tpu.memory_space<vmem>>) attributes {dimension_semantics = [#tpu.dimension_semantics<parallel>], iteration_bounds = array<i64: 2>, scalar_prefetch = 0 : i64, scratch_operands = 0 : i64, tpu.core_type = #tpu.core_type<tc>, window_params = [{transform_indices = @transform_0, window_bounds = array<i64: 8, 128>}, {pipeline_mode = #tpu.pipeline_mode<synchronous>, transform_indices = @transform_1, window_bounds = array<i64: 2, 128, 128>}, {pipeline_mode = #tpu.pipeline_mode<synchronous>, transform_indices = @transform_2, window_bounds = array<i64: 2, 1, 128>}, {transform_indices = @transform_3, window_bounds = array<i64: 8, 128>}]} {
    %c0 = arith.constant 0 : index
    %c0_0 = arith.constant 0 : index
    %0 = vector.load %arg1[%c0, %c0_0] : memref<8x128xbf16, #tpu.memory_space<vmem>>, vector<8x128xbf16>
    %1 = arith.extf %0 : vector<8x128xbf16> to vector<8x128xf32>
    %2 = arith.truncf %1 : vector<8x128xf32> to vector<8x128xbf16>
    %c0_1 = arith.constant 0 : index
    %c0_2 = arith.constant 0 : index
    %c0_3 = arith.constant 0 : index
    %3 = vector.load %arg2[%c0_1, %c0_2, %c0_3] : memref<2x128x128xbf16, #tpu.memory_space<vmem>>, vector<1x128x128xbf16>
    %4 = vector.shape_cast %3 : vector<1x128x128xbf16> to vector<128x128xbf16>
    %cst = arith.constant dense<0.000000e+00> : vector<8x128xf32>
    %5 = tpu.matmul %2, %4, %cst {dimension_numbers = #tpu.dot_dimension_numbers<[1], [0], [0], [1], [0, 0, 1, 1], [], []>} : vector<8x128xbf16>, vector<128x128xbf16>, vector<8x128xf32> -> vector<8x128xf32>
    %c0_4 = arith.constant 0 : index
    %c0_5 = arith.constant 0 : index
    %c0_6 = arith.constant 0 : index
    %6 = vector.load %arg3[%c0_4, %c0_5, %c0_6] : memref<2x1x128xf32, #tpu.memory_space<vmem>>, vector<1x1x128xf32>
    %7 = vector.shape_cast %6 : vector<1x1x128xf32> to vector<1x128xf32>
    %8 = vector.broadcast %7 : vector<1x128xf32> to vector<8x128xf32>
    %9 = arith.addf %5, %8 : vector<8x128xf32>
    %10 = arith.negf %9 : vector<8x128xf32>
    %11 = math.exp %10 : vector<8x128xf32>
    %cst_7 = arith.constant 1.000000e+00 : f32
    %12 = vector.broadcast %cst_7 : f32 to vector<8x128xf32>
    %13 = arith.addf %12, %11 : vector<8x128xf32>
    %14 = arith.divf %12, %13 : vector<8x128xf32>
    %15 = arith.mulf %9, %14 : vector<8x128xf32>
    %16 = arith.addf %1, %15 : vector<8x128xf32>
    %17 = arith.truncf %16 : vector<8x128xf32> to vector<8x128xbf16>
    %c1 = arith.constant 1 : index
    %c0_8 = arith.constant 0 : index
    %c0_9 = arith.constant 0 : index
    %18 = vector.load %arg2[%c1, %c0_8, %c0_9] : memref<2x128x128xbf16, #tpu.memory_space<vmem>>, vector<1x128x128xbf16>
    %19 = vector.shape_cast %18 : vector<1x128x128xbf16> to vector<128x128xbf16>
    %cst_10 = arith.constant dense<0.000000e+00> : vector<8x128xf32>
    %20 = tpu.matmul %17, %19, %cst_10 {dimension_numbers = #tpu.dot_dimension_numbers<[1], [0], [0], [1], [0, 0, 1, 1], [], []>} : vector<8x128xbf16>, vector<128x128xbf16>, vector<8x128xf32> -> vector<8x128xf32>
    %c1_11 = arith.constant 1 : index
    %c0_12 = arith.constant 0 : index
    %c0_13 = arith.constant 0 : index
    %21 = vector.load %arg3[%c1_11, %c0_12, %c0_13] : memref<2x1x128xf32, #tpu.memory_space<vmem>>, vector<1x1x128xf32>
    %22 = vector.shape_cast %21 : vector<1x1x128xf32> to vector<1x128xf32>
    %23 = vector.broadcast %22 : vector<1x128xf32> to vector<8x128xf32>
    %24 = arith.addf %20, %23 : vector<8x128xf32>
    %25 = arith.negf %24 : vector<8x128xf32>
    %26 = math.exp %25 : vector<8x128xf32>
    %cst_14 = arith.constant 1.000000e+00 : f32
    %27 = vector.broadcast %cst_14 : f32 to vector<8x128xf32>
    %28 = arith.addf %27, %26 : vector<8x128xf32>
    %29 = arith.divf %27, %28 : vector<8x128xf32>
    %30 = arith.mulf %24, %29 : vector<8x128xf32>
    %31 = arith.addf %16, %30 : vector<8x128xf32>
    %32 = arith.truncf %31 : vector<8x128xf32> to vector<8x128xbf16>
    %c0_15 = arith.constant 0 : index
    %c0_16 = arith.constant 0 : index
    %33 = vector.load %arg4[%c0_15, %c0_16] : memref<8x128xbf16, #tpu.memory_space<vmem>>, vector<8x128xbf16>
    tpu.vector_store %arg4[%c0_15, %c0_16], %32 {strides = array<i32>} : memref<8x128xbf16, #tpu.memory_space<vmem>>, vector<8x128xbf16>,
    return
  }
  func.func @transform_0(%arg0: i32) -> (i32, i32) {
    %c0_i32 = arith.constant 0 : i32
    %c0_i32_0 = arith.constant 0 : i32
    return %arg0, %c0_i32 : i32, i32
  }
  func.func @transform_1(%arg0: i32) -> (i32, i32, i32) {
    %c0_i32 = arith.constant 0 : i32
    %c0_i32_0 = arith.constant 0 : i32
    %c0_i32_1 = arith.constant 0 : i32
    %c0_i32_2 = arith.constant 0 : i32
    return %c0_i32, %c0_i32_0, %c0_i32_1 : i32, i32, i32
  }
  func.func @transform_2(%arg0: i32) -> (i32, i32, i32) {
    %c0_i32 = arith.constant 0 : i32
    %c0_i32_0 = arith.constant 0 : i32
    %c0_i32_1 = arith.constant 0 : i32
    %c0_i32_2 = arith.constant 0 : i32
    return %c0_i32, %c0_i32_0, %c0_i32_1 : i32, i32, i32
  }
  func.func @transform_3(%arg0: i32) -> (i32, i32) {
    %c0_i32 = arith.constant 0 : i32
    %c0_i32_0 = arith.constant 0 : i32
    return %arg0, %c0_i32 : i32, i32
  }
}

module attributes {stable_mosaic.version = 11 : i64} {
  func.func @_fused_kernel(%arg0: i32, %arg1: memref<16x6xbf16, #tpu.memory_space<vmem>>, %arg2: memref<6x128xbf16, #tpu.memory_space<vmem>>, %arg3: memref<16x128xbf16, #tpu.memory_space<vmem>>) attributes {dimension_semantics = [#tpu.dimension_semantics<parallel>], iteration_bounds = array<i64: 2>, scalar_prefetch = 0 : i64, scratch_operands = 0 : i64, tpu.core_type = #tpu.core_type<tc>, window_params = [{transform_indices = @transform_0, window_bounds = array<i64: 16, 6>}, {pipeline_mode = #tpu.pipeline_mode<synchronous>, transform_indices = @transform_1, window_bounds = array<i64: 6, 128>}, {transform_indices = @transform_2, window_bounds = array<i64: 16, 128>}]} {
    %c0 = arith.constant 0 : index
    %c0_0 = arith.constant 0 : index
    %0 = vector.load %arg1[%c0, %c0_0] : memref<16x6xbf16, #tpu.memory_space<vmem>>, vector<16x6xbf16>
    %c0_1 = arith.constant 0 : index
    %c0_2 = arith.constant 0 : index
    %1 = vector.load %arg2[%c0_1, %c0_2] : memref<6x128xbf16, #tpu.memory_space<vmem>>, vector<6x128xbf16>
    %cst = arith.constant dense<0.000000e+00> : vector<16x128xf32>
    %2 = tpu.matmul %0, %1, %cst {dimension_numbers = #tpu.dot_dimension_numbers<[1], [0], [0], [1], [0, 0, 1, 1], [], []>} : vector<16x6xbf16>, vector<6x128xbf16>, vector<16x128xf32> -> vector<16x128xf32>
    %3 = arith.truncf %2 : vector<16x128xf32> to vector<16x128xbf16>
    %c0_3 = arith.constant 0 : index
    %c0_4 = arith.constant 0 : index
    %4 = vector.load %arg3[%c0_3, %c0_4] : memref<16x128xbf16, #tpu.memory_space<vmem>>, vector<16x128xbf16>
    tpu.vector_store %arg3[%c0_3, %c0_4], %3 {strides = array<i32>} : memref<16x128xbf16, #tpu.memory_space<vmem>>, vector<16x128xbf16>,
    return
  }
  func.func @transform_0(%arg0: i32) -> (i32, i32) {
    %c0_i32 = arith.constant 0 : i32
    %c0_i32_0 = arith.constant 0 : i32
    return %arg0, %c0_i32 : i32, i32
  }
  func.func @transform_1(%arg0: i32) -> (i32, i32) {
    %c0_i32 = arith.constant 0 : i32
    %c0_i32_0 = arith.constant 0 : i32
    %c0_i32_1 = arith.constant 0 : i32
    return %c0_i32, %c0_i32_0 : i32, i32
  }
  func.func @transform_2(%arg0: i32) -> (i32, i32) {
    %c0_i32 = arith.constant 0 : i32
    %c0_i32_0 = arith.constant 0 : i32
    return %arg0, %c0_i32 : i32, i32
  }
}

module attributes {stable_mosaic.version = 11 : i64} {
  func.func @_fused_kernel(%arg0: i32, %arg1: memref<8x128xbf16, #tpu.memory_space<vmem>>, %arg2: memref<8x128xbf16, #tpu.memory_space<vmem>>, %arg3: memref<8x128xbf16, #tpu.memory_space<vmem>>, %arg4: memref<128x128xbf16, #tpu.memory_space<vmem>>, %arg5: memref<1x128xf32, #tpu.memory_space<vmem>>, %arg6: memref<8x128xbf16, #tpu.memory_space<vmem>>) attributes {dimension_semantics = [#tpu.dimension_semantics<parallel>], iteration_bounds = array<i64: 2>, scalar_prefetch = 0 : i64, scratch_operands = 0 : i64, tpu.core_type = #tpu.core_type<tc>, window_params = [{transform_indices = @transform_0, window_bounds = array<i64: 8, 128>}, {transform_indices = @transform_1, window_bounds = array<i64: 8, 128>}, {transform_indices = @transform_2, window_bounds = array<i64: 8, 128>}, {pipeline_mode = #tpu.pipeline_mode<synchronous>, transform_indices = @transform_3, window_bounds = array<i64: 128, 128>}, {pipeline_mode = #tpu.pipeline_mode<synchronous>, transform_indices = @transform_4, window_bounds = array<i64: 1, 128>}, {transform_indices = @transform_5, window_bounds = array<i64: 8, 128>}]} {
    %c0 = arith.constant 0 : index
    %c0_0 = arith.constant 0 : index
    %0 = vector.load %arg1[%c0, %c0_0] : memref<8x128xbf16, #tpu.memory_space<vmem>>, vector<8x128xbf16>
    %c0_1 = arith.constant 0 : index
    %c0_2 = arith.constant 0 : index
    %1 = vector.load %arg2[%c0_1, %c0_2] : memref<8x128xbf16, #tpu.memory_space<vmem>>, vector<8x128xbf16>
    %2 = arith.extf %1 : vector<8x128xbf16> to vector<8x128xf32>
    %c0_3 = arith.constant 0 : index
    %c0_4 = arith.constant 0 : index
    %3 = vector.load %arg3[%c0_3, %c0_4] : memref<8x128xbf16, #tpu.memory_space<vmem>>, vector<8x128xbf16>
    %4 = arith.extf %3 : vector<8x128xbf16> to vector<8x128xf32>
    %5 = arith.extf %0 : vector<8x128xbf16> to vector<8x128xf32>
    %6 = arith.mulf %5, %2 : vector<8x128xf32>
    %7 = arith.addf %6, %4 : vector<8x128xf32>
    %8 = arith.truncf %7 : vector<8x128xf32> to vector<8x128xbf16>
    %c0_5 = arith.constant 0 : index
    %c0_6 = arith.constant 0 : index
    %9 = vector.load %arg4[%c0_5, %c0_6] : memref<128x128xbf16, #tpu.memory_space<vmem>>, vector<128x128xbf16>
    %cst = arith.constant dense<0.000000e+00> : vector<8x128xf32>
    %10 = tpu.matmul %8, %9, %cst {dimension_numbers = #tpu.dot_dimension_numbers<[1], [0], [0], [1], [0, 0, 1, 1], [], []>} : vector<8x128xbf16>, vector<128x128xbf16>, vector<8x128xf32> -> vector<8x128xf32>
    %c0_7 = arith.constant 0 : index
    %c0_8 = arith.constant 0 : index
    %11 = vector.load %arg5[%c0_7, %c0_8] : memref<1x128xf32, #tpu.memory_space<vmem>>, vector<1x128xf32>
    %12 = vector.broadcast %11 : vector<1x128xf32> to vector<8x128xf32>
    %13 = arith.addf %10, %12 : vector<8x128xf32>
    %14 = arith.negf %13 : vector<8x128xf32>
    %15 = math.exp %14 : vector<8x128xf32>
    %cst_9 = arith.constant 1.000000e+00 : f32
    %16 = vector.broadcast %cst_9 : f32 to vector<8x128xf32>
    %17 = arith.addf %16, %15 : vector<8x128xf32>
    %18 = arith.divf %16, %17 : vector<8x128xf32>
    %19 = arith.mulf %13, %18 : vector<8x128xf32>
    %20 = arith.truncf %19 : vector<8x128xf32> to vector<8x128xbf16>
    %c0_10 = arith.constant 0 : index
    %c0_11 = arith.constant 0 : index
    %21 = vector.load %arg6[%c0_10, %c0_11] : memref<8x128xbf16, #tpu.memory_space<vmem>>, vector<8x128xbf16>
    tpu.vector_store %arg6[%c0_10, %c0_11], %20 {strides = array<i32>} : memref<8x128xbf16, #tpu.memory_space<vmem>>, vector<8x128xbf16>,
    return
  }
  func.func @transform_0(%arg0: i32) -> (i32, i32) {
    %c0_i32 = arith.constant 0 : i32
    %c0_i32_0 = arith.constant 0 : i32
    return %arg0, %c0_i32 : i32, i32
  }
  func.func @transform_1(%arg0: i32) -> (i32, i32) {
    %c0_i32 = arith.constant 0 : i32
    %c0_i32_0 = arith.constant 0 : i32
    return %arg0, %c0_i32 : i32, i32
  }
  func.func @transform_2(%arg0: i32) -> (i32, i32) {
    %c0_i32 = arith.constant 0 : i32
    %c0_i32_0 = arith.constant 0 : i32
    return %arg0, %c0_i32 : i32, i32
  }
  func.func @transform_3(%arg0: i32) -> (i32, i32) {
    %c0_i32 = arith.constant 0 : i32
    %c0_i32_0 = arith.constant 0 : i32
    %c0_i32_1 = arith.constant 0 : i32
    return %c0_i32, %c0_i32_0 : i32, i32
  }
  func.func @transform_4(%arg0: i32) -> (i32, i32) {
    %c0_i32 = arith.constant 0 : i32
    %c0_i32_0 = arith.constant 0 : i32
    %c0_i32_1 = arith.constant 0 : i32
    return %c0_i32, %c0_i32_0 : i32, i32
  }
  func.func @transform_5(%arg0: i32) -> (i32, i32) {
    %c0_i32 = arith.constant 0 : i32
    %c0_i32_0 = arith.constant 0 : i32
    return %arg0, %c0_i32 : i32, i32
  }
}

module attributes {stable_mosaic.version = 11 : i64} {
  func.func @_mlp_chain_kernel(%arg0: i32, %arg1: memref<8x128xbf16, #tpu.memory_space<vmem>>, %arg2: memref<1x128x128xbf16, #tpu.memory_space<vmem>>, %arg3: memref<1x1x128xf32, #tpu.memory_space<vmem>>, %arg4: memref<8x128xbf16, #tpu.memory_space<vmem>>) attributes {dimension_semantics = [#tpu.dimension_semantics<parallel>], iteration_bounds = array<i64: 2>, scalar_prefetch = 0 : i64, scratch_operands = 0 : i64, tpu.core_type = #tpu.core_type<tc>, window_params = [{transform_indices = @transform_0, window_bounds = array<i64: 8, 128>}, {pipeline_mode = #tpu.pipeline_mode<synchronous>, transform_indices = @transform_1, window_bounds = array<i64: 1, 128, 128>}, {pipeline_mode = #tpu.pipeline_mode<synchronous>, transform_indices = @transform_2, window_bounds = array<i64: 1, 1, 128>}, {transform_indices = @transform_3, window_bounds = array<i64: 8, 128>}]} {
    %c0 = arith.constant 0 : index
    %c0_0 = arith.constant 0 : index
    %0 = vector.load %arg1[%c0, %c0_0] : memref<8x128xbf16, #tpu.memory_space<vmem>>, vector<8x128xbf16>
    %1 = arith.extf %0 : vector<8x128xbf16> to vector<8x128xf32>
    %2 = arith.truncf %1 : vector<8x128xf32> to vector<8x128xbf16>
    %c0_1 = arith.constant 0 : index
    %c0_2 = arith.constant 0 : index
    %c0_3 = arith.constant 0 : index
    %3 = vector.load %arg2[%c0_1, %c0_2, %c0_3] : memref<1x128x128xbf16, #tpu.memory_space<vmem>>, vector<1x128x128xbf16>
    %4 = vector.shape_cast %3 : vector<1x128x128xbf16> to vector<128x128xbf16>
    %cst = arith.constant dense<0.000000e+00> : vector<8x128xf32>
    %5 = tpu.matmul %2, %4, %cst {dimension_numbers = #tpu.dot_dimension_numbers<[1], [0], [0], [1], [0, 0, 1, 1], [], []>} : vector<8x128xbf16>, vector<128x128xbf16>, vector<8x128xf32> -> vector<8x128xf32>
    %c0_4 = arith.constant 0 : index
    %c0_5 = arith.constant 0 : index
    %c0_6 = arith.constant 0 : index
    %6 = vector.load %arg3[%c0_4, %c0_5, %c0_6] : memref<1x1x128xf32, #tpu.memory_space<vmem>>, vector<1x1x128xf32>
    %7 = vector.shape_cast %6 : vector<1x1x128xf32> to vector<1x128xf32>
    %8 = vector.broadcast %7 : vector<1x128xf32> to vector<8x128xf32>
    %9 = arith.addf %5, %8 : vector<8x128xf32>
    %10 = arith.negf %9 : vector<8x128xf32>
    %11 = math.exp %10 : vector<8x128xf32>
    %cst_7 = arith.constant 1.000000e+00 : f32
    %12 = vector.broadcast %cst_7 : f32 to vector<8x128xf32>
    %13 = arith.addf %12, %11 : vector<8x128xf32>
    %14 = arith.divf %12, %13 : vector<8x128xf32>
    %15 = arith.mulf %9, %14 : vector<8x128xf32>
    %16 = arith.truncf %15 : vector<8x128xf32> to vector<8x128xbf16>
    %c0_8 = arith.constant 0 : index
    %c0_9 = arith.constant 0 : index
    %17 = vector.load %arg4[%c0_8, %c0_9] : memref<8x128xbf16, #tpu.memory_space<vmem>>, vector<8x128xbf16>
    tpu.vector_store %arg4[%c0_8, %c0_9], %16 {strides = array<i32>} : memref<8x128xbf16, #tpu.memory_space<vmem>>, vector<8x128xbf16>,
    return
  }
  func.func @transform_0(%arg0: i32) -> (i32, i32) {
    %c0_i32 = arith.constant 0 : i32
    %c0_i32_0 = arith.constant 0 : i32
    return %arg0, %c0_i32 : i32, i32
  }
  func.func @transform_1(%arg0: i32) -> (i32, i32, i32) {
    %c0_i32 = arith.constant 0 : i32
    %c0_i32_0 = arith.constant 0 : i32
    %c0_i32_1 = arith.constant 0 : i32
    %c0_i32_2 = arith.constant 0 : i32
    return %c0_i32, %c0_i32_0, %c0_i32_1 : i32, i32, i32
  }
  func.func @transform_2(%arg0: i32) -> (i32, i32, i32) {
    %c0_i32 = arith.constant 0 : i32
    %c0_i32_0 = arith.constant 0 : i32
    %c0_i32_1 = arith.constant 0 : i32
    %c0_i32_2 = arith.constant 0 : i32
    return %c0_i32, %c0_i32_0, %c0_i32_1 : i32, i32, i32
  }
  func.func @transform_3(%arg0: i32) -> (i32, i32) {
    %c0_i32 = arith.constant 0 : i32
    %c0_i32_0 = arith.constant 0 : i32
    return %arg0, %c0_i32 : i32, i32
  }
}

</mosaic_0001>

<llo_original>
// kernel: comenet_forward.16
$region0: #{comenet_forward.16}
  #allocation0 [shape = 'u32[]', space=smem, size = 0x4, offset = 0x4, fixed_abs, tag = 'smem constant byte address 0x4 - core index']
  #allocation1 [shape = 'u32[72,128]{1,0:T(1,128)}', space=vmem, size = 0x9000, scoped, tag = 'internal scratch']
  %s0 = inlined_call_operand.vmem [shape: bf16[16,128], index: 0, kind: input, shape index: {}]
  %s1 = inlined_call_operand.vmem [shape: bf16[128,128], index: 1, kind: input, shape index: {}]
  %s2 = inlined_call_operand.vmem [shape: f32[1,128], index: 2, kind: input, shape index: {}]
  %s3 = inlined_call_operand.vmem [shape: bf16[16,128], index: 3, kind: output, shape index: {}]
  %s4 = sld [smem:[#allocation0]]
  $region45: #{comenet_forward.16} parent=0
    _
  %s6 = ssub.s32 1, %s4
  %s7 = scalar_select 0, %s6, %s4
  loop: start=0, step=1, limit=4
  $region2: #{comenet_forward.16} parent=0 // loop_pre_header
    _
  $region3: #{comenet_forward.16} parent=0 // loop_header
    %s9 = sphi 0, %s13
    %p10 = scmp.ge.s32.totalorder %s9, 4
    %s19 = sphi 0, %s21
    %s22 = sphi 0, %s19
    %s23 = sphi 0, %s22
    %s39 = sphi 0, %s23
    %s43 = sphi 0, %s43
    %s45 = sphi 0, %s43
    %s46 = sphi 0, %s45
    %s60 = sphi 0, %s46
    %s64 = sphi 0, %s64
    %s66 = sphi 0, %s64
    %s67 = sphi 0, %s66
    %s81 = sphi 0, %s67
    %s87 = sphi 0, %s89
    %s90 = sphi 0, %s87
    %s91 = sphi 0, %s90
    %s107 = sphi 0, %s91
  $region4: #{comenet_forward.16} parent=0 // loop_header_branch
    %12 = sbr.rel (%p10) target = $region8
  $region5: #{comenet_forward.16} parent=0 // loop_body
    %s14 = ssub.s32 %s9, 1
    %s15 = ssub.s32 %s9, 2
    %s16 = sadd.s32 %s9, 1
    %s17 = ssub.s32 %s9, %s16
    %p18 = scmp.eq.s32.totalorder %s17, 0
    %s20 = sadd.s32 %s19, 1
    %s21 = scalar_select %p18, %s19, %s20
    %p24 = pneg %p18
    %p25 = scmp.eq.s32.totalorder %s9, 1
    %p26 = por %p24, %p25
    %p27 = scmp.ne.s32.totalorder %s19, %s22
    %p28 = scmp.eq.s32.totalorder %s9, 0
    %p29 = por %p27, %p28
    %p30 = scmp.ne.s32.totalorder %s19, %s22
    %p31 = scmp.eq.s32.totalorder %s14, 1
    %p32 = por %p30, %p31
    %p33 = scmp.ne.s32.totalorder %s22, %s23
    %p34 = scmp.eq.s32.totalorder %s14, 0
    %p35 = por %p33, %p34
    %p36 = scmp.ne.s32.totalorder %s22, %s23
    %p37 = scmp.eq.s32.totalorder %s15, 1
    %p38 = por %p36, %p37
    %p40 = scmp.ne.s32.totalorder %s23, %s39
    %p41 = scmp.eq.s32.totalorder %s15, 0
    %p42 = por %p40, %p41
    %s44 = sadd.s32 %s43, 1
    %p47 = scmp.eq.s32.totalorder %s9, 1
    %p48 = scmp.ne.s32.totalorder %s43, %s45
    %p49 = scmp.eq.s32.totalorder %s9, 0
    %p50 = por %p48, %p49
    %p51 = scmp.ne.s32.totalorder %s43, %s45
    %p52 = scmp.eq.s32.totalorder %s14, 1
    %p53 = por %p51, %p52
    %p54 = scmp.ne.s32.totalorder %s45, %s46
    %p55 = scmp.eq.s32.totalorder %s14, 0
    %p56 = por %p54, %p55
    %p57 = scmp.ne.s32.totalorder %s45, %s46
    %p58 = scmp.eq.s32.totalorder %s15, 1
    %p59 = por %p57, %p58
    %p61 = scmp.ne.s32.totalorder %s46, %s60
    %p62 = scmp.eq.s32.totalorder %s15, 0
    %p63 = por %p61, %p62
    %s65 = sadd.s32 %s64, 1
    %p68 = scmp.eq.s32.totalorder %s9, 1
    %p69 = scmp.ne.s32.totalorder %s64, %s66
    %p70 = scmp.eq.s32.totalorder %s9, 0
    %p71 = por %p69, %p70
    %p72 = scmp.ne.s32.totalorder %s64, %s66
    %p73 = scmp.eq.s32.totalorder %s14, 1
    %p74 = por %p72, %p73
    %p75 = scmp.ne.s32.totalorder %s66, %s67
    %p76 = scmp.eq.s32.totalorder %s14, 0
    %p77 = por %p75, %p76
    %p78 = scmp.ne.s32.totalorder %s66, %s67
    %p79 = scmp.eq.s32.totalorder %s15, 1
    %p80 = por %p78, %p79
    %p82 = scmp.ne.s32.totalorder %s67, %s81
    %p83 = scmp.eq.s32.totalorder %s15, 0
    %p84 = por %p82, %p83
    %s85 = ssub.s32 %s9, %s16
    %p86 = scmp.eq.s32.totalorder %s85, 0
    %s88 = sadd.s32 %s87, 1
    %s89 = scalar_select %p86, %s87, %s88
    %p92 = pneg %p86
    %p93 = scmp.eq.s32.totalorder %s9, 1
    %p94 = por %p92, %p93
    %p95 = scmp.ne.s32.totalorder %s87, %s90
    %p96 = scmp.eq.s32.totalorder %s9, 0
    %p97 = por %p95, %p96
    %p98 = scmp.ne.s32.totalorder %s87, %s90
    %p99 = scmp.eq.s32.totalorder %s14, 1
    %p100 = por %p98, %p99
    %p101 = scmp.ne.s32.totalorder %s90, %s91
    %p102 = scmp.eq.s32.totalorder %s14, 0
    %p103 = por %p101, %p102
    %p104 = scmp.ne.s32.totalorder %s90, %s91
    %p105 = scmp.eq.s32.totalorder %s15, 1
    %p106 = por %p104, %p105
    %p108 = scmp.ne.s32.totalorder %s91, %s107
    %p109 = scmp.eq.s32.totalorder %s15, 0
    %p110 = por %p108, %p109
    %p111 = scmp.le.s32.totalorder 1, %s9
    %p112 = scmp.lt.s32.totalorder %s9, 3
    %p113 = pnand %p111, %p112
    %p114 = pneg %p113
    // Predicated region
    $region9: #{comenet_forward.16} parent=5 // pred_check
      _
    $region10: #{comenet_forward.16} parent=5 // pred_check_branch
      %116 = sbr.rel (%p113) target = $region12
    $region11: #{comenet_forward.16} parent=5 // pred_region
      %s117 = ssub.s32 %s9, 1
      // Predicated region
      $region13: #{comenet_forward.16} parent=11 // pred_check
        %p118 = pneg %p56
      $region14: #{comenet_forward.16} parent=11 // pred_check_branch
        %120 = sbr.rel (%p118) target = $region16
      $region15: #{comenet_forward.16} parent=11 // pred_region
        _
      $region16: #{comenet_forward.16} parent=11 // pred_fallthru
        _
      // Predicated region
      $region17: #{comenet_forward.16} parent=11 // pred_check
        %p121 = pneg %p77
      $region18: #{comenet_forward.16} parent=11 // pred_check_branch
        %123 = sbr.rel (%p121) target = $region20
      $region19: #{comenet_forward.16} parent=11 // pred_region
        _
      $region20: #{comenet_forward.16} parent=11 // pred_fallthru
        _
    $region12: #{comenet_forward.16} parent=5 // pred_fallthru
      _
    %p124 = scmp.lt.s32.totalorder %s9, 2
    // Predicated region
    $region21: #{comenet_forward.16} parent=5 // pred_check
      %p125 = pneg %p124
    $region22: #{comenet_forward.16} parent=5 // pred_check_branch
      %127 = sbr.rel (%p125) target = $region24
    $region23: #{comenet_forward.16} parent=5 // pred_region
      // Predicated region
      $region25: #{comenet_forward.16} parent=23 // pred_check
        %p128 = pneg %p29
      $region26: #{comenet_forward.16} parent=23 // pred_check_branch
        %130 = sbr.rel (%p128) target = $region28
      $region27: #{comenet_forward.16} parent=23 // pred_region
        %p131 = scmp.lt.s32.totalorder %s9, 1
        %s132 = scalar_select %p131, %s9, 1
        %s133 = smul.addr %s132, 4
        %s134 = scalar_lea.vmem %s0, %s133
      $region28: #{comenet_forward.16} parent=23 // pred_fallthru
        _
    $region24: #{comenet_forward.16} parent=5 // pred_fallthru
      _
    %p135 = scmp.le.s32.totalorder 1, %s9
    %p136 = scmp.lt.s32.totalorder %s9, 3
    %p137 = pnand %p135, %p136
    %p138 = pneg %p137
    // Predicated region
    $region29: #{comenet_forward.16} parent=5 // pred_check
      _
    $region30: #{comenet_forward.16} parent=5 // pred_check_branch
      %140 = sbr.rel (%p137) target = $region32
    $region31: #{comenet_forward.16} parent=5 // pred_region
      %s141 = ssub.s32 %s9, 1
      %p142 = scmp.lt.s32.totalorder %s14, 1
      %s143 = scalar_select %p142, %s14, 1
      %s144 = smul.addr %s143, 4
      %s145 = scalar_lea.vmem %s0, %s144
      %p146 = pneg %p35
      %p147 = pneg %p32
      %p148 = pneg %p56
      %p149 = pneg %p53
      %p150 = pneg %p77
      %p151 = pneg %p74
      %p152 = pneg %p103
      %p153 = pneg %p100
      %p154 = scmp.lt.s32.totalorder %s14, 1
      %s155 = scalar_select %p154, %s14, 1
      %s156 = smul.addr %s155, 4
      %s157 = scalar_lea.vmem %s3, %s156
      %p158 = scmp.lt.s32.totalorder %s14, 1
      %s159 = scalar_select %p158, %s14, 1
      %s160 = smul.addr %s159, 4
      %s161 = scalar_lea.vmem %s0, %s160
      %p162 = scmp.lt.s32.totalorder %s14, 1
      %s163 = scalar_select %p162, %s14, 1
      %s164 = smul.addr %s163, 4
      %s165 = scalar_lea.vmem %s3, %s164
      %v166 = vld [vmem:[%s161] sm:$0xf]
      %v167 = vld [vmem:[%s1] sm:$0xf]
      %v168 = vld [vmem:[%s1 + $0x4] sm:$0xf]
      %v169 = vld [vmem:[%s1 + $0x8] sm:$0xf]
      %v170 = vld [vmem:[%s1 + $0xc] sm:$0xf]
      %v171 = vld [vmem:[%s1 + $0x10] sm:$0xf]
      %v172 = vld [vmem:[%s1 + $0x14] sm:$0xf]
      %v173 = vld [vmem:[%s1 + $0x18] sm:$0xf]
      %v174 = vld [vmem:[%s1 + $0x1c] sm:$0xf]
      %v175 = vld [vmem:[%s1 + $0x20] sm:$0xf]
      %v176 = vld [vmem:[%s1 + $0x24] sm:$0xf]
      %v177 = vld [vmem:[%s1 + $0x28] sm:$0xf]
      %v178 = vld [vmem:[%s1 + $0x2c] sm:$0xf]
      %v179 = vld [vmem:[%s1 + $0x30] sm:$0xf]
      %v180 = vld [vmem:[%s1 + $0x34] sm:$0xf]
      %v181 = vld [vmem:[%s1 + $0x38] sm:$0xf]
      %v182 = vld [vmem:[%s1 + $0x3c] sm:$0xf]
      %v183 = vld [vmem:[%s2] sm:$0x1]
      %v185 = vperm.slane %v183, 0
      %v203 = vunpack.c.l.b16 %v167
      %v204 = vunpack.c.l.b16 %v168
      %v205 = vunpack.c.l.b16 %v169
      %v206 = vunpack.c.l.b16 %v170
      %v207 = vunpack.c.l.b16 %v171
      %v208 = vunpack.c.l.b16 %v172
      %v209 = vunpack.c.l.b16 %v173
      %v210 = vunpack.c.l.b16 %v174
      %v211 = vunpack.c.l.b16 %v175
      %v212 = vunpack.c.l.b16 %v176
      %v213 = vunpack.c.l.b16 %v177
      %v214 = vunpack.c.l.b16 %v178
      %v215 = vunpack.c.l.b16 %v179
      %v216 = vunpack.c.l.b16 %v180
      %v217 = vunpack.c.l.b16 %v181
      %v218 = vunpack.c.l.b16 %v182
      %v219 = vpack.c.b16 %v204, %v203
      %v220 = vpack.c.b16 %v206, %v205
      %v221 = vpack.c.b16 %v208, %v207
      %v222 = vpack.c.b16 %v210, %v209
      %v223 = vpack.c.b16 %v212, %v211
      %v224 = vpack.c.b16 %v214, %v213
      %v225 = vpack.c.b16 %v216, %v215
      %v226 = vpack.c.b16 %v218, %v217
      %235 = vmatpush.bf16.msra.mxu0 %v226
      %236 = vmatpush.bf16.msra.mxu0 %v225
      %237 = vmatpush.bf16.msra.mxu0 %v224
      %238 = vmatpush.bf16.msra.mxu0 %v223
      %239 = vmatpush.bf16.msra.mxu0 %v222
      %240 = vmatpush.bf16.msra.mxu0 %v221
      %241 = vmatpush.bf16.msra.mxu0 %v220
      %242 = vmatpush.bf16.msra.mxu0 %v219
      %243 = vmatmul.bf16.gmra.mxu0 %v166
      %v244 = vpop.f32.mrf.mxu0
      %v245 = vadd.f32 %v185, %v244
      %v246 = vpop.f32.mrf.mxu0
      %247 = vdwg.mxu0
      %v248 = vxor.u32 %v245, 2147483648
      %v249 = vmul.f32 %v248, 1.442695
      %v250 = vpow.pop %v249
      %v251 = vadd.f32 %v250, 1.0
      %v252 = vrcp.pop %v251
      %v253 = vmul.f32 %v251, %v252
      %v254 = vsub.f32 1.0, %v253
      %v255 = vmul.f32 %v252, %v254
      %v256 = vadd.f32 %v252, %v255
      %vm257 = vweird.f32 %v251
      %vm258 = vweird.f32 %v252
      %vm259 = vmor %vm257, %vm258
      %v260 = vsel %vm259, %v252, %v256
      %v261 = vand.u32 2147483647, %v251
      %vm262 = vcmp.eq.f32.partialorder %v261, 8.507059e+37
      %v263 = vand.u32 %v251, 2147483648
      %v264 = vor.u32 1.1754944e-38, %v263
      %v265 = vsel %vm262, %v264, %v260
      %v266 = vmul.f32 1.0, %v265
      %v267 = vmul.f32 %v245, %v266
      %v268 = vpack.c.bf16 %v267, %v267
      %269 = vst [vmem:[%s165] sm:$0xf] %v268
      %p270 = scmp.lt.s32.totalorder %s14, 1
      %s271 = scalar_select %p270, %s14, 1
      %s272 = smul.addr %s271, 4
      %s273 = scalar_lea.vmem %s3, %s272
      // Predicated region
      $region33: #{comenet_forward.16} parent=31 // pred_check
        %p274 = pneg %p100
      $region34: #{comenet_forward.16} parent=31 // pred_check_branch
        %276 = sbr.rel (%p274) target = $region36
      $region35: #{comenet_forward.16} parent=31 // pred_region
        _
      $region36: #{comenet_forward.16} parent=31 // pred_fallthru
        _
    $region32: #{comenet_forward.16} parent=5 // pred_fallthru
      _
    %p277 = scmp.le.s32.totalorder 2, %s9
    // Predicated region
    $region37: #{comenet_forward.16} parent=5 // pred_check
      %p278 = pneg %p277
    $region38: #{comenet_forward.16} parent=5 // pred_check_branch
      %280 = sbr.rel (%p278) target = $region40
    $region39: #{comenet_forward.16} parent=5 // pred_region
      %s281 = ssub.s32 %s9, 2
      // Predicated region
      $region41: #{comenet_forward.16} parent=39 // pred_check
        %p282 = pneg %p106
      $region42: #{comenet_forward.16} parent=39 // pred_check_branch
        %284 = sbr.rel (%p282) target = $region44
      $region43: #{comenet_forward.16} parent=39 // pred_region
        %p285 = scmp.lt.s32.totalorder %s15, 1
        %s286 = scalar_select %p285, %s15, 1
        %s287 = smul.addr %s286, 4
        %s288 = scalar_lea.vmem %s3, %s287
      $region44: #{comenet_forward.16} parent=39 // pred_fallthru
        _
    $region40: #{comenet_forward.16} parent=5 // pred_fallthru
      _
  $region6: #{comenet_forward.16} parent=0 // loop_footer
    %s13 = sadd.s32 1, %s9
  $region7: #{comenet_forward.16} parent=0 // loop_footer_branch
    %8 = sbr.rel target = $region3
  $region8: #{comenet_forward.16} parent=0 // loop_exit
    _

// kernel: comenet_forward.17
$region0: #{comenet_forward.17}
  #allocation0 [shape = 'u32[]', space=smem, size = 0x4, offset = 0x4, fixed_abs, tag = 'smem constant byte address 0x4 - core index']
  #allocation1 [shape = 'u32[72,128]{1,0:T(1,128)}', space=vmem, size = 0x9000, scoped, tag = 'internal scratch']
  %s0 = inlined_call_operand.vmem [shape: bf16[32,12], index: 0, kind: input, shape index: {}]
  %s1 = inlined_call_operand.vmem [shape: bf16[12,128], index: 1, kind: input, shape index: {}]
  %s2 = inlined_call_operand.vmem [shape: bf16[32,128], index: 2, kind: output, shape index: {}]
  %s3 = sld [smem:[#allocation0]]
  $region41: #{comenet_forward.17} parent=0
    _
  %s5 = ssub.s32 1, %s3
  %s6 = scalar_select 0, %s5, %s3
  loop: start=0, step=1, limit=4
  $region2: #{comenet_forward.17} parent=0 // loop_pre_header
    _
  $region3: #{comenet_forward.17} parent=0 // loop_header
    %s8 = sphi 0, %s12
    %p9 = scmp.ge.s32.totalorder %s8, 4
    %s18 = sphi 0, %s20
    %s21 = sphi 0, %s18
    %s22 = sphi 0, %s21
    %s38 = sphi 0, %s22
    %s42 = sphi 0, %s42
    %s44 = sphi 0, %s42
    %s45 = sphi 0, %s44
    %s59 = sphi 0, %s45
    %s65 = sphi 0, %s67
    %s68 = sphi 0, %s65
    %s69 = sphi 0, %s68
    %s85 = sphi 0, %s69
  $region4: #{comenet_forward.17} parent=0 // loop_header_branch
    %11 = sbr.rel (%p9) target = $region8
  $region5: #{comenet_forward.17} parent=0 // loop_body
    %s13 = ssub.s32 %s8, 1
    %s14 = ssub.s32 %s8, 2
    %s15 = sadd.s32 %s8, 1
    %s16 = ssub.s32 %s8, %s15
    %p17 = scmp.eq.s32.totalorder %s16, 0
    %s19 = sadd.s32 %s18, 1
    %s20 = scalar_select %p17, %s18, %s19
    %p23 = pneg %p17
    %p24 = scmp.eq.s32.totalorder %s8, 1
    %p25 = por %p23, %p24
    %p26 = scmp.ne.s32.totalorder %s18, %s21
    %p27 = scmp.eq.s32.totalorder %s8, 0
    %p28 = por %p26, %p27
    %p29 = scmp.ne.s32.totalorder %s18, %s21
    %p30 = scmp.eq.s32.totalorder %s13, 1
    %p31 = por %p29, %p30
    %p32 = scmp.ne.s32.totalorder %s21, %s22
    %p33 = scmp.eq.s32.totalorder %s13, 0
    %p34 = por %p32, %p33
    %p35 = scmp.ne.s32.totalorder %s21, %s22
    %p36 = scmp.eq.s32.totalorder %s14, 1
    %p37 = por %p35, %p36
    %p39 = scmp.ne.s32.totalorder %s22, %s38
    %p40 = scmp.eq.s32.totalorder %s14, 0
    %p41 = por %p39, %p40
    %s43 = sadd.s32 %s42, 1
    %p46 = scmp.eq.s32.totalorder %s8, 1
    %p47 = scmp.ne.s32.totalorder %s42, %s44
    %p48 = scmp.eq.s32.totalorder %s8, 0
    %p49 = por %p47, %p48
    %p50 = scmp.ne.s32.totalorder %s42, %s44
    %p51 = scmp.eq.s32.totalorder %s13, 1
    %p52 = por %p50, %p51
    %p53 = scmp.ne.s32.totalorder %s44, %s45
    %p54 = scmp.eq.s32.totalorder %s13, 0
    %p55 = por %p53, %p54
    %p56 = scmp.ne.s32.totalorder %s44, %s45
    %p57 = scmp.eq.s32.totalorder %s14, 1
    %p58 = por %p56, %p57
    %p60 = scmp.ne.s32.totalorder %s45, %s59
    %p61 = scmp.eq.s32.totalorder %s14, 0
    %p62 = por %p60, %p61
    %s63 = ssub.s32 %s8, %s15
    %p64 = scmp.eq.s32.totalorder %s63, 0
    %s66 = sadd.s32 %s65, 1
    %s67 = scalar_select %p64, %s65, %s66
    %p70 = pneg %p64
    %p71 = scmp.eq.s32.totalorder %s8, 1
    %p72 = por %p70, %p71
    %p73 = scmp.ne.s32.totalorder %s65, %s68
    %p74 = scmp.eq.s32.totalorder %s8, 0
    %p75 = por %p73, %p74
    %p76 = scmp.ne.s32.totalorder %s65, %s68
    %p77 = scmp.eq.s32.totalorder %s13, 1
    %p78 = por %p76, %p77
    %p79 = scmp.ne.s32.totalorder %s68, %s69
    %p80 = scmp.eq.s32.totalorder %s13, 0
    %p81 = por %p79, %p80
    %p82 = scmp.ne.s32.totalorder %s68, %s69
    %p83 = scmp.eq.s32.totalorder %s14, 1
    %p84 = por %p82, %p83
    %p86 = scmp.ne.s32.totalorder %s69, %s85
    %p87 = scmp.eq.s32.totalorder %s14, 0
    %p88 = por %p86, %p87
    %p89 = scmp.le.s32.totalorder 1, %s8
    %p90 = scmp.lt.s32.totalorder %s8, 3
    %p91 = pnand %p89, %p90
    %p92 = pneg %p91
    // Predicated region
    $region9: #{comenet_forward.17} parent=5 // pred_check
      _
    $region10: #{comenet_forward.17} parent=5 // pred_check_branch
      %94 = sbr.rel (%p91) target = $region12
    $region11: #{comenet_forward.17} parent=5 // pred_region
      %s95 = ssub.s32 %s8, 1
      // Predicated region
      $region13: #{comenet_forward.17} parent=11 // pred_check
        %p96 = pneg %p55
      $region14: #{comenet_forward.17} parent=11 // pred_check_branch
        %98 = sbr.rel (%p96) target = $region16
      $region15: #{comenet_forward.17} parent=11 // pred_region
        _
      $region16: #{comenet_forward.17} parent=11 // pred_fallthru
        _
    $region12: #{comenet_forward.17} parent=5 // pred_fallthru
      _
    %p99 = scmp.lt.s32.totalorder %s8, 2
    // Predicated region
    $region17: #{comenet_forward.17} parent=5 // pred_check
      %p100 = pneg %p99
    $region18: #{comenet_forward.17} parent=5 // pred_check_branch
      %102 = sbr.rel (%p100) target = $region20
    $region19: #{comenet_forward.17} parent=5 // pred_region
      // Predicated region
      $region21: #{comenet_forward.17} parent=19 // pred_check
        %p103 = pneg %p28
      $region22: #{comenet_forward.17} parent=19 // pred_check_branch
        %105 = sbr.rel (%p103) target = $region24
      $region23: #{comenet_forward.17} parent=19 // pred_region
        %s106 = smul.u32 2, %s8
        %p107 = scmp.lt.s32.totalorder %s106, 3
        %s108 = scalar_select %p107, %s106, 3
        %s109 = smul.addr %s108, 4
        %s110 = scalar_lea.vmem %s0, %s109
        %s111 = smul.u32 2, %s8
      $region24: #{comenet_forward.17} parent=19 // pred_fallthru
        _
    $region20: #{comenet_forward.17} parent=5 // pred_fallthru
      _
    %p112 = scmp.le.s32.totalorder 1, %s8
    %p113 = scmp.lt.s32.totalorder %s8, 3
    %p114 = pnand %p112, %p113
    %p115 = pneg %p114
    // Predicated region
    $region25: #{comenet_forward.17} parent=5 // pred_check
      _
    $region26: #{comenet_forward.17} parent=5 // pred_check_branch
      %117 = sbr.rel (%p114) target = $region28
    $region27: #{comenet_forward.17} parent=5 // pred_region
      %s118 = ssub.s32 %s8, 1
      %s119 = smul.u32 2, %s13
      %p120 = scmp.lt.s32.totalorder %s119, 3
      %s121 = scalar_select %p120, %s119, 3
      %s122 = smul.addr %s121, 4
      %s123 = scalar_lea.vmem %s0, %s122
      %p124 = pneg %p34
      %p125 = pneg %p31
      %p126 = pneg %p55
      %p127 = pneg %p52
      %p128 = pneg %p81
      %p129 = pneg %p78
      %s130 = smul.u32 2, %s13
      %p131 = scmp.lt.s32.totalorder %s130, 3
      %s132 = scalar_select %p131, %s130, 3
      %s133 = smul.addr %s132, 4
      %s134 = scalar_lea.vmem %s2, %s133
      %s135 = smul.u32 2, %s13
      %p136 = scmp.lt.s32.totalorder %s135, 3
      %s137 = scalar_select %p136, %s135, 3
      %s138 = smul.addr %s137, 4
      %s139 = scalar_lea.vmem %s0, %s138
      %s140 = smul.u32 2, %s13
      %s141 = smul.u32 2, %s13
      %p142 = scmp.lt.s32.totalorder %s141, 3
      %s143 = scalar_select %p142, %s141, 3
      %s144 = smul.addr %s143, 4
      %s145 = scalar_lea.vmem %s2, %s144
      %s146 = smul.u32 2, %s13
      %v148 = vld [vmem:[%s139] sm:$0xf]
      %v149 = vld [vmem:[%s139 + $0x4] sm:$0xf]
      %v150 = vld [vmem:[%s1] sm:$0xf]
      %v151 = vld [vmem:[%s1 + $0x4] sm:$0x3]
      %v154 = vunpack.c.l.b16 %v148
      %v155 = vunpack.c.l.b16 %v149
      %v156 = vpack.c.b16 %v155, %v154
      %v159 = vunpack.c.l.b16 %v150
      %v160 = vunpack.c.l.b16 %v151
      %v161 = vpack.c.b16 %v160, %v159
      %vm162 = vcmask 97280
      %v164 = vsel %vm162, %v156, 0
      %vm166 = vcmask 1045504
      %v168 = vsel %vm166, %v161, 0
      %170 = vmatpush.bf16.msra.mxu0 0
      %171 = vmatpush.bf16.msra.mxu0 0
      %172 = vmatpush.bf16.msra.mxu0 0
      %173 = vmatpush.bf16.msra.mxu0 0
      %174 = vmatpush.bf16.msra.mxu0 0
      %175 = vmatpush.bf16.msra.mxu0 0
      %176 = vmatpush.bf16.msra.mxu0 0
      %177 = vmatpush.bf16.msra.mxu0 %v168
      %178 = vmatmul.bf16.gmra.mxu0 %v164
      %v179 = vpop.f32.mrf.mxu0
      %v180 = vadd.f32 0.0, %v179
      %v181 = vpop.f32.mrf.mxu0
      %v182 = vadd.f32 0.0, %v181
      %183 = vdwg.mxu0
      %v184 = vpack.c.bf16 %v180, %v180
      %v185 = vpack.c.bf16 %v182, %v182
      %186 = vst [vmem:[%s145] sm:$0xf] %v184
      %187 = vst [vmem:[%s145 + $0x4] sm:$0xf] %v185
      %s188 = smul.u32 2, %s13
      %p189 = scmp.lt.s32.totalorder %s188, 3
      %s190 = scalar_select %p189, %s188, 3
      %s191 = smul.addr %s190, 4
      %s192 = scalar_lea.vmem %s2, %s191
      // Predicated region
      $region29: #{comenet_forward.17} parent=27 // pred_check
        %p193 = pneg %p78
      $region30: #{comenet_forward.17} parent=27 // pred_check_branch
        %195 = sbr.rel (%p193) target = $region32
      $region31: #{comenet_forward.17} parent=27 // pred_region
        %s196 = smul.u32 2, %s13
      $region32: #{comenet_forward.17} parent=27 // pred_fallthru
        _
    $region28: #{comenet_forward.17} parent=5 // pred_fallthru
      _
    %p197 = scmp.le.s32.totalorder 2, %s8
    // Predicated region
    $region33: #{comenet_forward.17} parent=5 // pred_check
      %p198 = pneg %p197
    $region34: #{comenet_forward.17} parent=5 // pred_check_branch
      %200 = sbr.rel (%p198) target = $region36
    $region35: #{comenet_forward.17} parent=5 // pred_region
      %s201 = ssub.s32 %s8, 2
      // Predicated region
      $region37: #{comenet_forward.17} parent=35 // pred_check
        %p202 = pneg %p84
      $region38: #{comenet_forward.17} parent=35 // pred_check_branch
        %204 = sbr.rel (%p202) target = $region40
      $region39: #{comenet_forward.17} parent=35 // pred_region
        %s205 = smul.u32 2, %s14
        %p206 = scmp.lt.s32.totalorder %s205, 3
        %s207 = scalar_select %p206, %s205, 3
        %s208 = smul.addr %s207, 4
        %s209 = scalar_lea.vmem %s2, %s208
      $region40: #{comenet_forward.17} parent=35 // pred_fallthru
        _
    $region36: #{comenet_forward.17} parent=5 // pred_fallthru
      _
  $region6: #{comenet_forward.17} parent=0 // loop_footer
    %s12 = sadd.s32 1, %s8
  $region7: #{comenet_forward.17} parent=0 // loop_footer_branch
    %7 = sbr.rel target = $region3
  $region8: #{comenet_forward.17} parent=0 // loop_exit
    _

// kernel: comenet_forward.18
$region0: #{comenet_forward.18}
  #allocation0 [shape = 'u32[]', space=smem, size = 0x4, offset = 0x4, fixed_abs, tag = 'smem constant byte address 0x4 - core index']
  #allocation1 [shape = 'u32[72,128]{1,0:T(1,128)}', space=vmem, size = 0x9000, scoped, tag = 'internal scratch']
  %s0 = inlined_call_operand.vmem [shape: bf16[16,128], index: 0, kind: input, shape index: {}]
  %s1 = inlined_call_operand.vmem [shape: bf16[16,128], index: 1, kind: input, shape index: {}]
  %s2 = inlined_call_operand.vmem [shape: bf16[256,128], index: 2, kind: input, shape index: {}]
  %s3 = inlined_call_operand.vmem [shape: f32[1,128], index: 3, kind: input, shape index: {}]
  %s4 = inlined_call_operand.vmem [shape: bf16[128,128], index: 4, kind: input, shape index: {}]
  %s5 = inlined_call_operand.vmem [shape: f32[1,128], index: 5, kind: input, shape index: {}]
  %s6 = inlined_call_operand.vmem [shape: bf16[16,128], index: 6, kind: output, shape index: {}]
  %s7 = sld [smem:[#allocation0]]
  $region57: #{comenet_forward.18} parent=0
    _
  %s9 = ssub.s32 1, %s7
  %s10 = scalar_select 0, %s9, %s7
  loop: start=0, step=1, limit=4
  $region2: #{comenet_forward.18} parent=0 // loop_pre_header
    _
  $region3: #{comenet_forward.18} parent=0 // loop_header
    %s12 = sphi 0, %s16
    %p13 = scmp.ge.s32.totalorder %s12, 4
    %s22 = sphi 0, %s24
    %s25 = sphi 0, %s22
    %s26 = sphi 0, %s25
    %s42 = sphi 0, %s26
    %s48 = sphi 0, %s50
    %s51 = sphi 0, %s48
    %s52 = sphi 0, %s51
    %s68 = sphi 0, %s52
    %s72 = sphi 0, %s72
    %s74 = sphi 0, %s72
    %s75 = sphi 0, %s74
    %s89 = sphi 0, %s75
    %s93 = sphi 0, %s93
    %s95 = sphi 0, %s93
    %s96 = sphi 0, %s95
    %s110 = sphi 0, %s96
    %s114 = sphi 0, %s114
    %s116 = sphi 0, %s114
    %s117 = sphi 0, %s116
    %s131 = sphi 0, %s117
    %s135 = sphi 0, %s135
    %s137 = sphi 0, %s135
    %s138 = sphi 0, %s137
    %s152 = sphi 0, %s138
    %s158 = sphi 0, %s160
    %s161 = sphi 0, %s158
    %s162 = sphi 0, %s161
    %s178 = sphi 0, %s162
  $region4: #{comenet_forward.18} parent=0 // loop_header_branch
    %15 = sbr.rel (%p13) target = $region8
  $region5: #{comenet_forward.18} parent=0 // loop_body
    %s17 = ssub.s32 %s12, 1
    %s18 = ssub.s32 %s12, 2
    %s19 = sadd.s32 %s12, 1
    %s20 = ssub.s32 %s12, %s19
    %p21 = scmp.eq.s32.totalorder %s20, 0
    %s23 = sadd.s32 %s22, 1
    %s24 = scalar_select %p21, %s22, %s23
    %p27 = pneg %p21
    %p28 = scmp.eq.s32.totalorder %s12, 1
    %p29 = por %p27, %p28
    %p30 = scmp.ne.s32.totalorder %s22, %s25
    %p31 = scmp.eq.s32.totalorder %s12, 0
    %p32 = por %p30, %p31
    %p33 = scmp.ne.s32.totalorder %s22, %s25
    %p34 = scmp.eq.s32.totalorder %s17, 1
    %p35 = por %p33, %p34
    %p36 = scmp.ne.s32.totalorder %s25, %s26
    %p37 = scmp.eq.s32.totalorder %s17, 0
    %p38 = por %p36, %p37
    %p39 = scmp.ne.s32.totalorder %s25, %s26
    %p40 = scmp.eq.s32.totalorder %s18, 1
    %p41 = por %p39, %p40
    %p43 = scmp.ne.s32.totalorder %s26, %s42
    %p44 = scmp.eq.s32.totalorder %s18, 0
    %p45 = por %p43, %p44
    %s46 = ssub.s32 %s12, %s19
    %p47 = scmp.eq.s32.totalorder %s46, 0
    %s49 = sadd.s32 %s48, 1
    %s50 = scalar_select %p47, %s48, %s49
    %p53 = pneg %p47
    %p54 = scmp.eq.s32.totalorder %s12, 1
    %p55 = por %p53, %p54
    %p56 = scmp.ne.s32.totalorder %s48, %s51
    %p57 = scmp.eq.s32.totalorder %s12, 0
    %p58 = por %p56, %p57
    %p59 = scmp.ne.s32.totalorder %s48, %s51
    %p60 = scmp.eq.s32.totalorder %s17, 1
    %p61 = por %p59, %p60
    %p62 = scmp.ne.s32.totalorder %s51, %s52
    %p63 = scmp.eq.s32.totalorder %s17, 0
    %p64 = por %p62, %p63
    %p65 = scmp.ne.s32.totalorder %s51, %s52
    %p66 = scmp.eq.s32.totalorder %s18, 1
    %p67 = por %p65, %p66
    %p69 = scmp.ne.s32.totalorder %s52, %s68
    %p70 = scmp.eq.s32.totalorder %s18, 0
    %p71 = por %p69, %p70
    %s73 = sadd.s32 %s72, 1
    %p76 = scmp.eq.s32.totalorder %s12, 1
    %p77 = scmp.ne.s32.totalorder %s72, %s74
    %p78 = scmp.eq.s32.totalorder %s12, 0
    %p79 = por %p77, %p78
    %p80 = scmp.ne.s32.totalorder %s72, %s74
    %p81 = scmp.eq.s32.totalorder %s17, 1
    %p82 = por %p80, %p81
    %p83 = scmp.ne.s32.totalorder %s74, %s75
    %p84 = scmp.eq.s32.totalorder %s17, 0
    %p85 = por %p83, %p84
    %p86 = scmp.ne.s32.totalorder %s74, %s75
    %p87 = scmp.eq.s32.totalorder %s18, 1
    %p88 = por %p86, %p87
    %p90 = scmp.ne.s32.totalorder %s75, %s89
    %p91 = scmp.eq.s32.totalorder %s18, 0
    %p92 = por %p90, %p91
    %s94 = sadd.s32 %s93, 1
    %p97 = scmp.eq.s32.totalorder %s12, 1
    %p98 = scmp.ne.s32.totalorder %s93, %s95
    %p99 = scmp.eq.s32.totalorder %s12, 0
    %p100 = por %p98, %p99
    %p101 = scmp.ne.s32.totalorder %s93, %s95
    %p102 = scmp.eq.s32.totalorder %s17, 1
    %p103 = por %p101, %p102
    %p104 = scmp.ne.s32.totalorder %s95, %s96
    %p105 = scmp.eq.s32.totalorder %s17, 0
    %p106 = por %p104, %p105
    %p107 = scmp.ne.s32.totalorder %s95, %s96
    %p108 = scmp.eq.s32.totalorder %s18, 1
    %p109 = por %p107, %p108
    %p111 = scmp.ne.s32.totalorder %s96, %s110
    %p112 = scmp.eq.s32.totalorder %s18, 0
    %p113 = por %p111, %p112
    %s115 = sadd.s32 %s114, 1
    %p118 = scmp.eq.s32.totalorder %s12, 1
    %p119 = scmp.ne.s32.totalorder %s114, %s116
    %p120 = scmp.eq.s32.totalorder %s12, 0
    %p121 = por %p119, %p120
    %p122 = scmp.ne.s32.totalorder %s114, %s116
    %p123 = scmp.eq.s32.totalorder %s17, 1
    %p124 = por %p122, %p123
    %p125 = scmp.ne.s32.totalorder %s116, %s117
    %p126 = scmp.eq.s32.totalorder %s17, 0
    %p127 = por %p125, %p126
    %p128 = scmp.ne.s32.totalorder %s116, %s117
    %p129 = scmp.eq.s32.totalorder %s18, 1
    %p130 = por %p128, %p129
    %p132 = scmp.ne.s32.totalorder %s117, %s131
    %p133 = scmp.eq.s32.totalorder %s18, 0
    %p134 = por %p132, %p133
    %s136 = sadd.s32 %s135, 1
    %p139 = scmp.eq.s32.totalorder %s12, 1
    %p140 = scmp.ne.s32.totalorder %s135, %s137
    %p141 = scmp.eq.s32.totalorder %s12, 0
    %p142 = por %p140, %p141
    %p143 = scmp.ne.s32.totalorder %s135, %s137
    %p144 = scmp.eq.s32.totalorder %s17, 1
    %p145 = por %p143, %p144
    %p146 = scmp.ne.s32.totalorder %s137, %s138
    %p147 = scmp.eq.s32.totalorder %s17, 0
    %p148 = por %p146, %p147
    %p149 = scmp.ne.s32.totalorder %s137, %s138
    %p150 = scmp.eq.s32.totalorder %s18, 1
    %p151 = por %p149, %p150
    %p153 = scmp.ne.s32.totalorder %s138, %s152
    %p154 = scmp.eq.s32.totalorder %s18, 0
    %p155 = por %p153, %p154
    %s156 = ssub.s32 %s12, %s19
    %p157 = scmp.eq.s32.totalorder %s156, 0
    %s159 = sadd.s32 %s158, 1
    %s160 = scalar_select %p157, %s158, %s159
    %p163 = pneg %p157
    %p164 = scmp.eq.s32.totalorder %s12, 1
    %p165 = por %p163, %p164
    %p166 = scmp.ne.s32.totalorder %s158, %s161
    %p167 = scmp.eq.s32.totalorder %s12, 0
    %p168 = por %p166, %p167
    %p169 = scmp.ne.s32.totalorder %s158, %s161
    %p170 = scmp.eq.s32.totalorder %s17, 1
    %p171 = por %p169, %p170
    %p172 = scmp.ne.s32.totalorder %s161, %s162
    %p173 = scmp.eq.s32.totalorder %s17, 0
    %p174 = por %p172, %p173
    %p175 = scmp.ne.s32.totalorder %s161, %s162
    %p176 = scmp.eq.s32.totalorder %s18, 1
    %p177 = por %p175, %p176
    %p179 = scmp.ne.s32.totalorder %s162, %s178
    %p180 = scmp.eq.s32.totalorder %s18, 0
    %p181 = por %p179, %p180
    %p182 = scmp.le.s32.totalorder 1, %s12
    %p183 = scmp.lt.s32.totalorder %s12, 3
    %p184 = pnand %p182, %p183
    %p185 = pneg %p184
    // Predicated region
    $region9: #{comenet_forward.18} parent=5 // pred_check
      _
    $region10: #{comenet_forward.18} parent=5 // pred_check_branch
      %187 = sbr.rel (%p184) target = $region12
    $region11: #{comenet_forward.18} parent=5 // pred_region
      %s188 = ssub.s32 %s12, 1
      // Predicated region
      $region13: #{comenet_forward.18} parent=11 // pred_check
        %p189 = pneg %p85
      $region14: #{comenet_forward.18} parent=11 // pred_check_branch
        %191 = sbr.rel (%p189) target = $region16
      $region15: #{comenet_forward.18} parent=11 // pred_region
        _
      $region16: #{comenet_forward.18} parent=11 // pred_fallthru
        _
      // Predicated region
      $region17: #{comenet_forward.18} parent=11 // pred_check
        %p192 = pneg %p106
      $region18: #{comenet_forward.18} parent=11 // pred_check_branch
        %194 = sbr.rel (%p192) target = $region20
      $region19: #{comenet_forward.18} parent=11 // pred_region
        _
      $region20: #{comenet_forward.18} parent=11 // pred_fallthru
        _
      // Predicated region
      $region21: #{comenet_forward.18} parent=11 // pred_check
        %p195 = pneg %p127
      $region22: #{comenet_forward.18} parent=11 // pred_check_branch
        %197 = sbr.rel (%p195) target = $region24
      $region23: #{comenet_forward.18} parent=11 // pred_region
        _
      $region24: #{comenet_forward.18} parent=11 // pred_fallthru
        _
      // Predicated region
      $region25: #{comenet_forward.18} parent=11 // pred_check
        %p198 = pneg %p148
      $region26: #{comenet_forward.18} parent=11 // pred_check_branch
        %200 = sbr.rel (%p198) target = $region28
      $region27: #{comenet_forward.18} parent=11 // pred_region
        _
      $region28: #{comenet_forward.18} parent=11 // pred_fallthru
        _
    $region12: #{comenet_forward.18} parent=5 // pred_fallthru
      _
    %p201 = scmp.lt.s32.totalorder %s12, 2
    // Predicated region
    $region29: #{comenet_forward.18} parent=5 // pred_check
      %p202 = pneg %p201
    $region30: #{comenet_forward.18} parent=5 // pred_check_branch
      %204 = sbr.rel (%p202) target = $region32
    $region31: #{comenet_forward.18} parent=5 // pred_region
      // Predicated region
      $region33: #{comenet_forward.18} parent=31 // pred_check
        %p205 = pneg %p32
      $region34: #{comenet_forward.18} parent=31 // pred_check_branch
        %207 = sbr.rel (%p205) target = $region36
      $region35: #{comenet_forward.18} parent=31 // pred_region
        %p208 = scmp.lt.s32.totalorder %s12, 1
        %s209 = scalar_select %p208, %s12, 1
        %s210 = smul.addr %s209, 4
        %s211 = scalar_lea.vmem %s0, %s210
      $region36: #{comenet_forward.18} parent=31 // pred_fallthru
        _
      // Predicated region
      $region37: #{comenet_forward.18} parent=31 // pred_check
        %p212 = pneg %p58
      $region38: #{comenet_forward.18} parent=31 // pred_check_branch
        %214 = sbr.rel (%p212) target = $region40
      $region39: #{comenet_forward.18} parent=31 // pred_region
        %p215 = scmp.lt.s32.totalorder %s12, 1
        %s216 = scalar_select %p215, %s12, 1
        %s217 = smul.addr %s216, 4
        %s218 = scalar_lea.vmem %s1, %s217
      $region40: #{comenet_forward.18} parent=31 // pred_fallthru
        _
    $region32: #{comenet_forward.18} parent=5 // pred_fallthru
      _
    %p219 = scmp.le.s32.totalorder 1, %s12
    %p220 = scmp.lt.s32.totalorder %s12, 3
    %p221 = pnand %p219, %p220
    %p222 = pneg %p221
    // Predicated region
    $region41: #{comenet_forward.18} parent=5 // pred_check
      _
    $region42: #{comenet_forward.18} parent=5 // pred_check_branch
      %224 = sbr.rel (%p221) target = $region44
    $region43: #{comenet_forward.18} parent=5 // pred_region
      %s225 = ssub.s32 %s12, 1
      %p226 = scmp.lt.s32.totalorder %s17, 1
      %s227 = scalar_select %p226, %s17, 1
      %s228 = smul.addr %s227, 4
      %s229 = scalar_lea.vmem %s0, %s228
      %p230 = pneg %p38
      %p231 = pneg %p35
      %p232 = scmp.lt.s32.totalorder %s17, 1
      %s233 = scalar_select %p232, %s17, 1
      %s234 = smul.addr %s233, 4
      %s235 = scalar_lea.vmem %s1, %s234
      %p236 = pneg %p64
      %p237 = pneg %p61
      %p238 = pneg %p85
      %p239 = pneg %p82
      %p240 = pneg %p106
      %p241 = pneg %p103
      %p242 = pneg %p127
      %p243 = pneg %p124
      %p244 = pneg %p148
      %p245 = pneg %p145
      %p246 = pneg %p174
      %p247 = pneg %p171
      %p248 = scmp.lt.s32.totalorder %s17, 1
      %s249 = scalar_select %p248, %s17, 1
      %s250 = smul.addr %s249, 4
      %s251 = scalar_lea.vmem %s6, %s250
      %p252 = scmp.lt.s32.totalorder %s17, 1
      %s253 = scalar_select %p252, %s17, 1
      %s254 = smul.addr %s253, 4
      %s255 = scalar_lea.vmem %s0, %s254
      %p256 = scmp.lt.s32.totalorder %s17, 1
      %s257 = scalar_select %p256, %s17, 1
      %s258 = smul.addr %s257, 4
      %s259 = scalar_lea.vmem %s1, %s258
      %p260 = scmp.lt.s32.totalorder %s17, 1
      %s261 = scalar_select %p260, %s17, 1
      %s262 = smul.addr %s261, 4
      %s263 = scalar_lea.vmem %s6, %s262
      %v264 = vld [vmem:[%s255] sm:$0xf]
      %v265 = vld [vmem:[%s259] sm:$0xf]
      %v266 = vld [vmem:[%s2] sm:$0xf]
      %v267 = vld [vmem:[%s2 + $0x4] sm:$0xf]
      %v268 = vld [vmem:[%s2 + $0x8] sm:$0xf]
      %v269 = vld [vmem:[%s2 + $0xc] sm:$0xf]
      %v270 = vld [vmem:[%s2 + $0x10] sm:$0xf]
      %v271 = vld [vmem:[%s2 + $0x14] sm:$0xf]
      %v272 = vld [vmem:[%s2 + $0x18] sm:$0xf]
      %v273 = vld [vmem:[%s2 + $0x1c] sm:$0xf]
      %v274 = vld [vmem:[%s2 + $0x20] sm:$0xf]
      %v275 = vld [vmem:[%s2 + $0x24] sm:$0xf]
      %v276 = vld [vmem:[%s2 + $0x28] sm:$0xf]
      %v277 = vld [vmem:[%s2 + $0x2c] sm:$0xf]
      %v278 = vld [vmem:[%s2 + $0x30] sm:$0xf]
      %v279 = vld [vmem:[%s2 + $0x34] sm:$0xf]
      %v280 = vld [vmem:[%s2 + $0x38] sm:$0xf]
      %v281 = vld [vmem:[%s2 + $0x3c] sm:$0xf]
      %v282 = vld [vmem:[%s2 + $0x40] sm:$0xf]
      %v283 = vld [vmem:[%s2 + $0x44] sm:$0xf]
      %v284 = vld [vmem:[%s2 + $0x48] sm:$0xf]
      %v285 = vld [vmem:[%s2 + $0x4c] sm:$0xf]
      %v286 = vld [vmem:[%s2 + $0x50] sm:$0xf]
      %v287 = vld [vmem:[%s2 + $0x54] sm:$0xf]
      %v288 = vld [vmem:[%s2 + $0x58] sm:$0xf]
      %v289 = vld [vmem:[%s2 + $0x5c] sm:$0xf]
      %v290 = vld [vmem:[%s2 + $0x60] sm:$0xf]
      %v291 = vld [vmem:[%s2 + $0x64] sm:$0xf]
      %v292 = vld [vmem:[%s2 + $0x68] sm:$0xf]
      %v293 = vld [vmem:[%s2 + $0x6c] sm:$0xf]
      %v294 = vld [vmem:[%s2 + $0x70] sm:$0xf]
      %v295 = vld [vmem:[%s2 + $0x74] sm:$0xf]
      %v296 = vld [vmem:[%s2 + $0x78] sm:$0xf]
      %v297 = vld [vmem:[%s2 + $0x7c] sm:$0xf]
      %v298 = vld [vmem:[%s3] sm:$0x1]
      %v300 = vperm.slane %v298, 0
      %v334 = vunpack.c.l.b16 %v266
      %v335 = vunpack.c.l.b16 %v267
      %v336 = vunpack.c.l.b16 %v268
      %v337 = vunpack.c.l.b16 %v269
      %v338 = vunpack.c.l.b16 %v270
      %v339 = vunpack.c.l.b16 %v271
      %v340 = vunpack.c.l.b16 %v272
      %v341 = vunpack.c.l.b16 %v273
      %v342 = vunpack.c.l.b16 %v274
      %v343 = vunpack.c.l.b16 %v275
      %v344 = vunpack.c.l.b16 %v276
      %v345 = vunpack.c.l.b16 %v277
      %v346 = vunpack.c.l.b16 %v278
      %v347 = vunpack.c.l.b16 %v279
      %v348 = vunpack.c.l.b16 %v280
      %v349 = vunpack.c.l.b16 %v281
      %v350 = vunpack.c.l.b16 %v282
      %v351 = vunpack.c.l.b16 %v283
      %v352 = vunpack.c.l.b16 %v284
      %v353 = vunpack.c.l.b16 %v285
      %v354 = vunpack.c.l.b16 %v286
      %v355 = vunpack.c.l.b16 %v287
      %v356 = vunpack.c.l.b16 %v288
      %v357 = vunpack.c.l.b16 %v289
      %v358 = vunpack.c.l.b16 %v290
      %v359 = vunpack.c.l.b16 %v291
      %v360 = vunpack.c.l.b16 %v292
      %v361 = vunpack.c.l.b16 %v293
      %v362 = vunpack.c.l.b16 %v294
      %v363 = vunpack.c.l.b16 %v295
      %v364 = vunpack.c.l.b16 %v296
      %v365 = vunpack.c.l.b16 %v297
      %v366 = vpack.c.b16 %v335, %v334
      %v367 = vpack.c.b16 %v337, %v336
      %v368 = vpack.c.b16 %v339, %v338
      %v369 = vpack.c.b16 %v341, %v340
      %v370 = vpack.c.b16 %v343, %v342
      %v371 = vpack.c.b16 %v345, %v344
      %v372 = vpack.c.b16 %v347, %v346
      %v373 = vpack.c.b16 %v349, %v348
      %v374 = vpack.c.b16 %v351, %v350
      %v375 = vpack.c.b16 %v353, %v352
      %v376 = vpack.c.b16 %v355, %v354
      %v377 = vpack.c.b16 %v357, %v356
      %v378 = vpack.c.b16 %v359, %v358
      %v379 = vpack.c.b16 %v361, %v360
      %v380 = vpack.c.b16 %v363, %v362
      %v381 = vpack.c.b16 %v365, %v364
      %398 = vmatpush.bf16.msra.mxu0 %v373
      %399 = vmatpush.bf16.msra.mxu0 %v372
      %400 = vmatpush.bf16.msra.mxu0 %v371
      %401 = vmatpush.bf16.msra.mxu0 %v370
      %402 = vmatpush.bf16.msra.mxu0 %v369
      %403 = vmatpush.bf16.msra.mxu0 %v368
      %404 = vmatpush.bf16.msra.mxu0 %v367
      %405 = vmatpush.bf16.msra.mxu0 %v366
      %406 = vmatmul.bf16.gmra.mxu0 %v264
      %v407 = vpop.f32.mrf.mxu0
      %v408 = vadd.f32 %v300, %v407
      %v409 = vpop.f32.mrf.mxu0
      %410 = vdwg.mxu0
      %411 = vmatpush.bf16.msra.mxu0 %v381
      %412 = vmatpush.bf16.msra.mxu0 %v380
      %413 = vmatpush.bf16.msra.mxu0 %v379
      %414 = vmatpush.bf16.msra.mxu0 %v378
      %415 = vmatpush.bf16.msra.mxu0 %v377
      %416 = vmatpush.bf16.msra.mxu0 %v376
      %417 = vmatpush.bf16.msra.mxu0 %v375
      %418 = vmatpush.bf16.msra.mxu0 %v374
      %419 = vmatmul.bf16.gmra.mxu0 %v265
      %v420 = vpop.f32.mrf.mxu0
      %v421 = vadd.f32 %v408, %v420
      %v422 = vpop.f32.mrf.mxu0
      %423 = vdwg.mxu0
      %v424 = vpack.c.bf16 %v421, %v421
      %v425 = vld [vmem:[%s4] sm:$0xf]
      %v426 = vld [vmem:[%s4 + $0x4] sm:$0xf]
      %v427 = vld [vmem:[%s4 + $0x8] sm:$0xf]
      %v428 = vld [vmem:[%s4 + $0xc] sm:$0xf]
      %v429 = vld [vmem:[%s4 + $0x10] sm:$0xf]
      %v430 = vld [vmem:[%s4 + $0x14] sm:$0xf]
      %v431 = vld [vmem:[%s4 + $0x18] sm:$0xf]
      %v432 = vld [vmem:[%s4 + $0x1c] sm:$0xf]
      %v433 = vld [vmem:[%s4 + $0x20] sm:$0xf]
      %v434 = vld [vmem:[%s4 + $0x24] sm:$0xf]
      %v435 = vld [vmem:[%s4 + $0x28] sm:$0xf]
      %v436 = vld [vmem:[%s4 + $0x2c] sm:$0xf]
      %v437 = vld [vmem:[%s4 + $0x30] sm:$0xf]
      %v438 = vld [vmem:[%s4 + $0x34] sm:$0xf]
      %v439 = vld [vmem:[%s4 + $0x38] sm:$0xf]
      %v440 = vld [vmem:[%s4 + $0x3c] sm:$0xf]
      %v441 = vld [vmem:[%s5] sm:$0x1]
      %v443 = vperm.slane %v441, 0
      %v461 = vunpack.c.l.b16 %v425
      %v462 = vunpack.c.l.b16 %v426
      %v463 = vunpack.c.l.b16 %v427
      %v464 = vunpack.c.l.b16 %v428
      %v465 = vunpack.c.l.b16 %v429
      %v466 = vunpack.c.l.b16 %v430
      %v467 = vunpack.c.l.b16 %v431
      %v468 = vunpack.c.l.b16 %v432
      %v469 = vunpack.c.l.b16 %v433
      %v470 = vunpack.c.l.b16 %v434
      %v471 = vunpack.c.l.b16 %v435
      %v472 = vunpack.c.l.b16 %v436
      %v473 = vunpack.c.l.b16 %v437
      %v474 = vunpack.c.l.b16 %v438
      %v475 = vunpack.c.l.b16 %v439
      %v476 = vunpack.c.l.b16 %v440
      %v477 = vpack.c.b16 %v462, %v461
      %v478 = vpack.c.b16 %v464, %v463
      %v479 = vpack.c.b16 %v466, %v465
      %v480 = vpack.c.b16 %v468, %v467
      %v481 = vpack.c.b16 %v470, %v469
      %v482 = vpack.c.b16 %v472, %v471
      %v483 = vpack.c.b16 %v474, %v473
      %v484 = vpack.c.b16 %v476, %v475
      %493 = vmatpush.bf16.msra.mxu0 %v484
      %494 = vmatpush.bf16.msra.mxu0 %v483
      %495 = vmatpush.bf16.msra.mxu0 %v482
      %496 = vmatpush.bf16.msra.mxu0 %v481
      %497 = vmatpush.bf16.msra.mxu0 %v480
      %498 = vmatpush.bf16.msra.mxu0 %v479
      %499 = vmatpush.bf16.msra.mxu0 %v478
      %500 = vmatpush.bf16.msra.mxu0 %v477
      %501 = vmatmul.bf16.gmra.mxu0 %v424
      %v502 = vpop.f32.mrf.mxu0
      %v503 = vadd.f32 %v443, %v502
      %v504 = vpop.f32.mrf.mxu0
      %505 = vdwg.mxu0
      %v506 = vxor.u32 %v503, 2147483648
      %v507 = vmul.f32 %v506, 1.442695
      %v508 = vpow.pop %v507
      %v509 = vadd.f32 %v508, 1.0
      %v510 = vrcp.pop %v509
      %v511 = vmul.f32 %v509, %v510
      %v512 = vsub.f32 1.0, %v511
      %v513 = vmul.f32 %v510, %v512
      %v514 = vadd.f32 %v510, %v513
      %vm515 = vweird.f32 %v509
      %vm516 = vweird.f32 %v510
      %vm517 = vmor %vm515, %vm516
      %v518 = vsel %vm517, %v510, %v514
      %v519 = vand.u32 2147483647, %v509
      %vm520 = vcmp.eq.f32.partialorder %v519, 8.507059e+37
      %v521 = vand.u32 %v509, 2147483648
      %v522 = vor.u32 1.1754944e-38, %v521
      %v523 = vsel %vm520, %v522, %v518
      %v524 = vmul.f32 1.0, %v523
      %v525 = vmul.f32 %v503, %v524
      %v526 = vpack.c.bf16 %v525, %v525
      %527 = vst [vmem:[%s263] sm:$0xf] %v526
      %p528 = scmp.lt.s32.totalorder %s17, 1
      %s529 = scalar_select %p528, %s17, 1
      %s530 = smul.addr %s529, 4
      %s531 = scalar_lea.vmem %s6, %s530
      // Predicated region
      $region45: #{comenet_forward.18} parent=43 // pred_check
        %p532 = pneg %p171
      $region46: #{comenet_forward.18} parent=43 // pred_check_branch
        %534 = sbr.rel (%p532) target = $region48
      $region47: #{comenet_forward.18} parent=43 // pred_region
        _
      $region48: #{comenet_forward.18} parent=43 // pred_fallthru
        _
    $region44: #{comenet_forward.18} parent=5 // pred_fallthru
      _
    %p535 = scmp.le.s32.totalorder 2, %s12
    // Predicated region
    $region49: #{comenet_forward.18} parent=5 // pred_check
      %p536 = pneg %p535
    $region50: #{comenet_forward.18} parent=5 // pred_check_branch
      %538 = sbr.rel (%p536) target = $region52
    $region51: #{comenet_forward.18} parent=5 // pred_region
      %s539 = ssub.s32 %s12, 2
      // Predicated region
      $region53: #{comenet_forward.18} parent=51 // pred_check
        %p540 = pneg %p177
      $region54: #{comenet_forward.18} parent=51 // pred_check_branch
        %542 = sbr.rel (%p540) target = $region56
      $region55: #{comenet_forward.18} parent=51 // pred_region
        %p543 = scmp.lt.s32.totalorder %s18, 1
        %s544 = scalar_select %p543, %s18, 1
        %s545 = smul.addr %s544, 4
        %s546 = scalar_lea.vmem %s6, %s545
      $region56: #{comenet_forward.18} parent=51 // pred_fallthru
        _
    $region52: #{comenet_forward.18} parent=5 // pred_fallthru
      _
  $region6: #{comenet_forward.18} parent=0 // loop_footer
    %s16 = sadd.s32 1, %s12
  $region7: #{comenet_forward.18} parent=0 // loop_footer_branch
    %11 = sbr.rel target = $region3
  $region8: #{comenet_forward.18} parent=0 // loop_exit
    _

// kernel: comenet_forward.21
$region0: #{comenet_forward.21}
  #allocation0 [shape = 'u32[]', space=smem, size = 0x4, offset = 0x4, fixed_abs, tag = 'smem constant byte address 0x4 - core index']
  #allocation1 [shape = 'u32[72,128]{1,0:T(1,128)}', space=vmem, size = 0x9000, scoped, tag = 'internal scratch']
  %s0 = inlined_call_operand.vmem [shape: bf16[16,128], index: 0, kind: input, shape index: {}]
  %s1 = inlined_call_operand.vmem [shape: bf16[16,128], index: 1, kind: input, shape index: {}]
  %s2 = inlined_call_operand.vmem [shape: bf16[256,128], index: 2, kind: input, shape index: {}]
  %s3 = inlined_call_operand.vmem [shape: f32[1,128], index: 3, kind: input, shape index: {}]
  %s4 = inlined_call_operand.vmem [shape: bf16[16,128], index: 4, kind: input, shape index: {}]
  %s5 = inlined_call_operand.vmem [shape: bf16[16,128], index: 5, kind: output, shape index: {}]
  %s6 = sld [smem:[#allocation0]]
  $region53: #{comenet_forward.21} parent=0
    _
  %s8 = ssub.s32 1, %s6
  %s9 = scalar_select 0, %s8, %s6
  loop: start=0, step=1, limit=4
  $region2: #{comenet_forward.21} parent=0 // loop_pre_header
    _
  $region3: #{comenet_forward.21} parent=0 // loop_header
    %s11 = sphi 0, %s15
    %p12 = scmp.ge.s32.totalorder %s11, 4
    %s21 = sphi 0, %s23
    %s24 = sphi 0, %s21
    %s25 = sphi 0, %s24
    %s41 = sphi 0, %s25
    %s47 = sphi 0, %s49
    %s50 = sphi 0, %s47
    %s51 = sphi 0, %s50
    %s67 = sphi 0, %s51
    %s71 = sphi 0, %s71
    %s73 = sphi 0, %s71
    %s74 = sphi 0, %s73
    %s88 = sphi 0, %s74
    %s92 = sphi 0, %s92
    %s94 = sphi 0, %s92
    %s95 = sphi 0, %s94
    %s109 = sphi 0, %s95
    %s115 = sphi 0, %s117
    %s118 = sphi 0, %s115
    %s119 = sphi 0, %s118
    %s135 = sphi 0, %s119
    %s141 = sphi 0, %s143
    %s144 = sphi 0, %s141
    %s145 = sphi 0, %s144
    %s161 = sphi 0, %s145
  $region4: #{comenet_forward.21} parent=0 // loop_header_branch
    %14 = sbr.rel (%p12) target = $region8
  $region5: #{comenet_forward.21} parent=0 // loop_body
    %s16 = ssub.s32 %s11, 1
    %s17 = ssub.s32 %s11, 2
    %s18 = sadd.s32 %s11, 1
    %s19 = ssub.s32 %s11, %s18
    %p20 = scmp.eq.s32.totalorder %s19, 0
    %s22 = sadd.s32 %s21, 1
    %s23 = scalar_select %p20, %s21, %s22
    %p26 = pneg %p20
    %p27 = scmp.eq.s32.totalorder %s11, 1
    %p28 = por %p26, %p27
    %p29 = scmp.ne.s32.totalorder %s21, %s24
    %p30 = scmp.eq.s32.totalorder %s11, 0
    %p31 = por %p29, %p30
    %p32 = scmp.ne.s32.totalorder %s21, %s24
    %p33 = scmp.eq.s32.totalorder %s16, 1
    %p34 = por %p32, %p33
    %p35 = scmp.ne.s32.totalorder %s24, %s25
    %p36 = scmp.eq.s32.totalorder %s16, 0
    %p37 = por %p35, %p36
    %p38 = scmp.ne.s32.totalorder %s24, %s25
    %p39 = scmp.eq.s32.totalorder %s17, 1
    %p40 = por %p38, %p39
    %p42 = scmp.ne.s32.totalorder %s25, %s41
    %p43 = scmp.eq.s32.totalorder %s17, 0
    %p44 = por %p42, %p43
    %s45 = ssub.s32 %s11, %s18
    %p46 = scmp.eq.s32.totalorder %s45, 0
    %s48 = sadd.s32 %s47, 1
    %s49 = scalar_select %p46, %s47, %s48
    %p52 = pneg %p46
    %p53 = scmp.eq.s32.totalorder %s11, 1
    %p54 = por %p52, %p53
    %p55 = scmp.ne.s32.totalorder %s47, %s50
    %p56 = scmp.eq.s32.totalorder %s11, 0
    %p57 = por %p55, %p56
    %p58 = scmp.ne.s32.totalorder %s47, %s50
    %p59 = scmp.eq.s32.totalorder %s16, 1
    %p60 = por %p58, %p59
    %p61 = scmp.ne.s32.totalorder %s50, %s51
    %p62 = scmp.eq.s32.totalorder %s16, 0
    %p63 = por %p61, %p62
    %p64 = scmp.ne.s32.totalorder %s50, %s51
    %p65 = scmp.eq.s32.totalorder %s17, 1
    %p66 = por %p64, %p65
    %p68 = scmp.ne.s32.totalorder %s51, %s67
    %p69 = scmp.eq.s32.totalorder %s17, 0
    %p70 = por %p68, %p69
    %s72 = sadd.s32 %s71, 1
    %p75 = scmp.eq.s32.totalorder %s11, 1
    %p76 = scmp.ne.s32.totalorder %s71, %s73
    %p77 = scmp.eq.s32.totalorder %s11, 0
    %p78 = por %p76, %p77
    %p79 = scmp.ne.s32.totalorder %s71, %s73
    %p80 = scmp.eq.s32.totalorder %s16, 1
    %p81 = por %p79, %p80
    %p82 = scmp.ne.s32.totalorder %s73, %s74
    %p83 = scmp.eq.s32.totalorder %s16, 0
    %p84 = por %p82, %p83
    %p85 = scmp.ne.s32.totalorder %s73, %s74
    %p86 = scmp.eq.s32.totalorder %s17, 1
    %p87 = por %p85, %p86
    %p89 = scmp.ne.s32.totalorder %s74, %s88
    %p90 = scmp.eq.s32.totalorder %s17, 0
    %p91 = por %p89, %p90
    %s93 = sadd.s32 %s92, 1
    %p96 = scmp.eq.s32.totalorder %s11, 1
    %p97 = scmp.ne.s32.totalorder %s92, %s94
    %p98 = scmp.eq.s32.totalorder %s11, 0
    %p99 = por %p97, %p98
    %p100 = scmp.ne.s32.totalorder %s92, %s94
    %p101 = scmp.eq.s32.totalorder %s16, 1
    %p102 = por %p100, %p101
    %p103 = scmp.ne.s32.totalorder %s94, %s95
    %p104 = scmp.eq.s32.totalorder %s16, 0
    %p105 = por %p103, %p104
    %p106 = scmp.ne.s32.totalorder %s94, %s95
    %p107 = scmp.eq.s32.totalorder %s17, 1
    %p108 = por %p106, %p107
    %p110 = scmp.ne.s32.totalorder %s95, %s109
    %p111 = scmp.eq.s32.totalorder %s17, 0
    %p112 = por %p110, %p111
    %s113 = ssub.s32 %s11, %s18
    %p114 = scmp.eq.s32.totalorder %s113, 0
    %s116 = sadd.s32 %s115, 1
    %s117 = scalar_select %p114, %s115, %s116
    %p120 = pneg %p114
    %p121 = scmp.eq.s32.totalorder %s11, 1
    %p122 = por %p120, %p121
    %p123 = scmp.ne.s32.totalorder %s115, %s118
    %p124 = scmp.eq.s32.totalorder %s11, 0
    %p125 = por %p123, %p124
    %p126 = scmp.ne.s32.totalorder %s115, %s118
    %p127 = scmp.eq.s32.totalorder %s16, 1
    %p128 = por %p126, %p127
    %p129 = scmp.ne.s32.totalorder %s118, %s119
    %p130 = scmp.eq.s32.totalorder %s16, 0
    %p131 = por %p129, %p130
    %p132 = scmp.ne.s32.totalorder %s118, %s119
    %p133 = scmp.eq.s32.totalorder %s17, 1
    %p134 = por %p132, %p133
    %p136 = scmp.ne.s32.totalorder %s119, %s135
    %p137 = scmp.eq.s32.totalorder %s17, 0
    %p138 = por %p136, %p137
    %s139 = ssub.s32 %s11, %s18
    %p140 = scmp.eq.s32.totalorder %s139, 0
    %s142 = sadd.s32 %s141, 1
    %s143 = scalar_select %p140, %s141, %s142
    %p146 = pneg %p140
    %p147 = scmp.eq.s32.totalorder %s11, 1
    %p148 = por %p146, %p147
    %p149 = scmp.ne.s32.totalorder %s141, %s144
    %p150 = scmp.eq.s32.totalorder %s11, 0
    %p151 = por %p149, %p150
    %p152 = scmp.ne.s32.totalorder %s141, %s144
    %p153 = scmp.eq.s32.totalorder %s16, 1
    %p154 = por %p152, %p153
    %p155 = scmp.ne.s32.totalorder %s144, %s145
    %p156 = scmp.eq.s32.totalorder %s16, 0
    %p157 = por %p155, %p156
    %p158 = scmp.ne.s32.totalorder %s144, %s145
    %p159 = scmp.eq.s32.totalorder %s17, 1
    %p160 = por %p158, %p159
    %p162 = scmp.ne.s32.totalorder %s145, %s161
    %p163 = scmp.eq.s32.totalorder %s17, 0
    %p164 = por %p162, %p163
    %p165 = scmp.le.s32.totalorder 1, %s11
    %p166 = scmp.lt.s32.totalorder %s11, 3
    %p167 = pnand %p165, %p166
    %p168 = pneg %p167
    // Predicated region
    $region9: #{comenet_forward.21} parent=5 // pred_check
      _
    $region10: #{comenet_forward.21} parent=5 // pred_check_branch
      %170 = sbr.rel (%p167) target = $region12
    $region11: #{comenet_forward.21} parent=5 // pred_region
      %s171 = ssub.s32 %s11, 1
      // Predicated region
      $region13: #{comenet_forward.21} parent=11 // pred_check
        %p172 = pneg %p84
      $region14: #{comenet_forward.21} parent=11 // pred_check_branch
        %174 = sbr.rel (%p172) target = $region16
      $region15: #{comenet_forward.21} parent=11 // pred_region
        _
      $region16: #{comenet_forward.21} parent=11 // pred_fallthru
        _
      // Predicated region
      $region17: #{comenet_forward.21} parent=11 // pred_check
        %p175 = pneg %p105
      $region18: #{comenet_forward.21} parent=11 // pred_check_branch
        %177 = sbr.rel (%p175) target = $region20
      $region19: #{comenet_forward.21} parent=11 // pred_region
        _
      $region20: #{comenet_forward.21} parent=11 // pred_fallthru
        _
    $region12: #{comenet_forward.21} parent=5 // pred_fallthru
      _
    %p178 = scmp.lt.s32.totalorder %s11, 2
    // Predicated region
    $region21: #{comenet_forward.21} parent=5 // pred_check
      %p179 = pneg %p178
    $region22: #{comenet_forward.21} parent=5 // pred_check_branch
      %181 = sbr.rel (%p179) target = $region24
    $region23: #{comenet_forward.21} parent=5 // pred_region
      // Predicated region
      $region25: #{comenet_forward.21} parent=23 // pred_check
        %p182 = pneg %p31
      $region26: #{comenet_forward.21} parent=23 // pred_check_branch
        %184 = sbr.rel (%p182) target = $region28
      $region27: #{comenet_forward.21} parent=23 // pred_region
        %p185 = scmp.lt.s32.totalorder %s11, 1
        %s186 = scalar_select %p185, %s11, 1
        %s187 = smul.addr %s186, 4
        %s188 = scalar_lea.vmem %s0, %s187
      $region28: #{comenet_forward.21} parent=23 // pred_fallthru
        _
      // Predicated region
      $region29: #{comenet_forward.21} parent=23 // pred_check
        %p189 = pneg %p57
      $region30: #{comenet_forward.21} parent=23 // pred_check_branch
        %191 = sbr.rel (%p189) target = $region32
      $region31: #{comenet_forward.21} parent=23 // pred_region
        %p192 = scmp.lt.s32.totalorder %s11, 1
        %s193 = scalar_select %p192, %s11, 1
        %s194 = smul.addr %s193, 4
        %s195 = scalar_lea.vmem %s1, %s194
      $region32: #{comenet_forward.21} parent=23 // pred_fallthru
        _
      // Predicated region
      $region33: #{comenet_forward.21} parent=23 // pred_check
        %p196 = pneg %p125
      $region34: #{comenet_forward.21} parent=23 // pred_check_branch
        %198 = sbr.rel (%p196) target = $region36
      $region35: #{comenet_forward.21} parent=23 // pred_region
        %p199 = scmp.lt.s32.totalorder %s11, 1
        %s200 = scalar_select %p199, %s11, 1
        %s201 = smul.addr %s200, 4
        %s202 = scalar_lea.vmem %s4, %s201
      $region36: #{comenet_forward.21} parent=23 // pred_fallthru
        _
    $region24: #{comenet_forward.21} parent=5 // pred_fallthru
      _
    %p203 = scmp.le.s32.totalorder 1, %s11
    %p204 = scmp.lt.s32.totalorder %s11, 3
    %p205 = pnand %p203, %p204
    %p206 = pneg %p205
    // Predicated region
    $region37: #{comenet_forward.21} parent=5 // pred_check
      _
    $region38: #{comenet_forward.21} parent=5 // pred_check_branch
      %208 = sbr.rel (%p205) target = $region40
    $region39: #{comenet_forward.21} parent=5 // pred_region
      %s209 = ssub.s32 %s11, 1
      %p210 = scmp.lt.s32.totalorder %s16, 1
      %s211 = scalar_select %p210, %s16, 1
      %s212 = smul.addr %s211, 4
      %s213 = scalar_lea.vmem %s0, %s212
      %p214 = pneg %p37
      %p215 = pneg %p34
      %p216 = scmp.lt.s32.totalorder %s16, 1
      %s217 = scalar_select %p216, %s16, 1
      %s218 = smul.addr %s217, 4
      %s219 = scalar_lea.vmem %s1, %s218
      %p220 = pneg %p63
      %p221 = pneg %p60
      %p222 = pneg %p84
      %p223 = pneg %p81
      %p224 = pneg %p105
      %p225 = pneg %p102
      %p226 = scmp.lt.s32.totalorder %s16, 1
      %s227 = scalar_select %p226, %s16, 1
      %s228 = smul.addr %s227, 4
      %s229 = scalar_lea.vmem %s4, %s228
      %p230 = pneg %p131
      %p231 = pneg %p128
      %p232 = pneg %p157
      %p233 = pneg %p154
      %p234 = scmp.lt.s32.totalorder %s16, 1
      %s235 = scalar_select %p234, %s16, 1
      %s236 = smul.addr %s235, 4
      %s237 = scalar_lea.vmem %s5, %s236
      %p238 = scmp.lt.s32.totalorder %s16, 1
      %s239 = scalar_select %p238, %s16, 1
      %s240 = smul.addr %s239, 4
      %s241 = scalar_lea.vmem %s0, %s240
      %p242 = scmp.lt.s32.totalorder %s16, 1
      %s243 = scalar_select %p242, %s16, 1
      %s244 = smul.addr %s243, 4
      %s245 = scalar_lea.vmem %s1, %s244
      %p246 = scmp.lt.s32.totalorder %s16, 1
      %s247 = scalar_select %p246, %s16, 1
      %s248 = smul.addr %s247, 4
      %s249 = scalar_lea.vmem %s4, %s248
      %p250 = scmp.lt.s32.totalorder %s16, 1
      %s251 = scalar_select %p250, %s16, 1
      %s252 = smul.addr %s251, 4
      %s253 = scalar_lea.vmem %s5, %s252
      %v254 = vld [vmem:[%s241] sm:$0xf]
      %v255 = vld [vmem:[%s245] sm:$0xf]
      %v256 = vld [vmem:[%s2] sm:$0xf]
      %v257 = vld [vmem:[%s2 + $0x4] sm:$0xf]
      %v258 = vld [vmem:[%s2 + $0x8] sm:$0xf]
      %v259 = vld [vmem:[%s2 + $0xc] sm:$0xf]
      %v260 = vld [vmem:[%s2 + $0x10] sm:$0xf]
      %v261 = vld [vmem:[%s2 + $0x14] sm:$0xf]
      %v262 = vld [vmem:[%s2 + $0x18] sm:$0xf]
      %v263 = vld [vmem:[%s2 + $0x1c] sm:$0xf]
      %v264 = vld [vmem:[%s2 + $0x20] sm:$0xf]
      %v265 = vld [vmem:[%s2 + $0x24] sm:$0xf]
      %v266 = vld [vmem:[%s2 + $0x28] sm:$0xf]
      %v267 = vld [vmem:[%s2 + $0x2c] sm:$0xf]
      %v268 = vld [vmem:[%s2 + $0x30] sm:$0xf]
      %v269 = vld [vmem:[%s2 + $0x34] sm:$0xf]
      %v270 = vld [vmem:[%s2 + $0x38] sm:$0xf]
      %v271 = vld [vmem:[%s2 + $0x3c] sm:$0xf]
      %v272 = vld [vmem:[%s2 + $0x40] sm:$0xf]
      %v273 = vld [vmem:[%s2 + $0x44] sm:$0xf]
      %v274 = vld [vmem:[%s2 + $0x48] sm:$0xf]
      %v275 = vld [vmem:[%s2 + $0x4c] sm:$0xf]
      %v276 = vld [vmem:[%s2 + $0x50] sm:$0xf]
      %v277 = vld [vmem:[%s2 + $0x54] sm:$0xf]
      %v278 = vld [vmem:[%s2 + $0x58] sm:$0xf]
      %v279 = vld [vmem:[%s2 + $0x5c] sm:$0xf]
      %v280 = vld [vmem:[%s2 + $0x60] sm:$0xf]
      %v281 = vld [vmem:[%s2 + $0x64] sm:$0xf]
      %v282 = vld [vmem:[%s2 + $0x68] sm:$0xf]
      %v283 = vld [vmem:[%s2 + $0x6c] sm:$0xf]
      %v284 = vld [vmem:[%s2 + $0x70] sm:$0xf]
      %v285 = vld [vmem:[%s2 + $0x74] sm:$0xf]
      %v286 = vld [vmem:[%s2 + $0x78] sm:$0xf]
      %v287 = vld [vmem:[%s2 + $0x7c] sm:$0xf]
      %v288 = vld [vmem:[%s3] sm:$0x1]
      %v290 = vperm.slane %v288, 0
      %v324 = vunpack.c.l.b16 %v256
      %v325 = vunpack.c.l.b16 %v257
      %v326 = vunpack.c.l.b16 %v258
      %v327 = vunpack.c.l.b16 %v259
      %v328 = vunpack.c.l.b16 %v260
      %v329 = vunpack.c.l.b16 %v261
      %v330 = vunpack.c.l.b16 %v262
      %v331 = vunpack.c.l.b16 %v263
      %v332 = vunpack.c.l.b16 %v264
      %v333 = vunpack.c.l.b16 %v265
      %v334 = vunpack.c.l.b16 %v266
      %v335 = vunpack.c.l.b16 %v267
      %v336 = vunpack.c.l.b16 %v268
      %v337 = vunpack.c.l.b16 %v269
      %v338 = vunpack.c.l.b16 %v270
      %v339 = vunpack.c.l.b16 %v271
      %v340 = vunpack.c.l.b16 %v272
      %v341 = vunpack.c.l.b16 %v273
      %v342 = vunpack.c.l.b16 %v274
      %v343 = vunpack.c.l.b16 %v275
      %v344 = vunpack.c.l.b16 %v276
      %v345 = vunpack.c.l.b16 %v277
      %v346 = vunpack.c.l.b16 %v278
      %v347 = vunpack.c.l.b16 %v279
      %v348 = vunpack.c.l.b16 %v280
      %v349 = vunpack.c.l.b16 %v281
      %v350 = vunpack.c.l.b16 %v282
      %v351 = vunpack.c.l.b16 %v283
      %v352 = vunpack.c.l.b16 %v284
      %v353 = vunpack.c.l.b16 %v285
      %v354 = vunpack.c.l.b16 %v286
      %v355 = vunpack.c.l.b16 %v287
      %v356 = vpack.c.b16 %v325, %v324
      %v357 = vpack.c.b16 %v327, %v326
      %v358 = vpack.c.b16 %v329, %v328
      %v359 = vpack.c.b16 %v331, %v330
      %v360 = vpack.c.b16 %v333, %v332
      %v361 = vpack.c.b16 %v335, %v334
      %v362 = vpack.c.b16 %v337, %v336
      %v363 = vpack.c.b16 %v339, %v338
      %v364 = vpack.c.b16 %v341, %v340
      %v365 = vpack.c.b16 %v343, %v342
      %v366 = vpack.c.b16 %v345, %v344
      %v367 = vpack.c.b16 %v347, %v346
      %v368 = vpack.c.b16 %v349, %v348
      %v369 = vpack.c.b16 %v351, %v350
      %v370 = vpack.c.b16 %v353, %v352
      %v371 = vpack.c.b16 %v355, %v354
      %388 = vmatpush.bf16.msra.mxu0 %v363
      %389 = vmatpush.bf16.msra.mxu0 %v362
      %390 = vmatpush.bf16.msra.mxu0 %v361
      %391 = vmatpush.bf16.msra.mxu0 %v360
      %392 = vmatpush.bf16.msra.mxu0 %v359
      %393 = vmatpush.bf16.msra.mxu0 %v358
      %394 = vmatpush.bf16.msra.mxu0 %v357
      %395 = vmatpush.bf16.msra.mxu0 %v356
      %396 = vmatmul.bf16.gmra.mxu0 %v254
      %v397 = vpop.f32.mrf.mxu0
      %v398 = vadd.f32 %v290, %v397
      %v399 = vpop.f32.mrf.mxu0
      %400 = vdwg.mxu0
      %401 = vmatpush.bf16.msra.mxu0 %v371
      %402 = vmatpush.bf16.msra.mxu0 %v370
      %403 = vmatpush.bf16.msra.mxu0 %v369
      %404 = vmatpush.bf16.msra.mxu0 %v368
      %405 = vmatpush.bf16.msra.mxu0 %v367
      %406 = vmatpush.bf16.msra.mxu0 %v366
      %407 = vmatpush.bf16.msra.mxu0 %v365
      %408 = vmatpush.bf16.msra.mxu0 %v364
      %409 = vmatmul.bf16.gmra.mxu0 %v255
      %v410 = vpop.f32.mrf.mxu0
      %v411 = vadd.f32 %v398, %v410
      %v412 = vpop.f32.mrf.mxu0
      %413 = vdwg.mxu0
      %v414 = vld [vmem:[%s249] sm:$0xf]
      %v415 = vunpack.c.l.bf16 %v414
      %v416 = vadd.f32 %v411, %v415
      %v417 = vpack.c.bf16 %v416, %v416
      %418 = vst [vmem:[%s253] sm:$0xf] %v417
      %p419 = scmp.lt.s32.totalorder %s16, 1
      %s420 = scalar_select %p419, %s16, 1
      %s421 = smul.addr %s420, 4
      %s422 = scalar_lea.vmem %s5, %s421
      // Predicated region
      $region41: #{comenet_forward.21} parent=39 // pred_check
        %p423 = pneg %p154
      $region42: #{comenet_forward.21} parent=39 // pred_check_branch
        %425 = sbr.rel (%p423) target = $region44
      $region43: #{comenet_forward.21} parent=39 // pred_region
        _
      $region44: #{comenet_forward.21} parent=39 // pred_fallthru
        _
    $region40: #{comenet_forward.21} parent=5 // pred_fallthru
      _
    %p426 = scmp.le.s32.totalorder 2, %s11
    // Predicated region
    $region45: #{comenet_forward.21} parent=5 // pred_check
      %p427 = pneg %p426
    $region46: #{comenet_forward.21} parent=5 // pred_check_branch
      %429 = sbr.rel (%p427) target = $region48
    $region47: #{comenet_forward.21} parent=5 // pred_region
      %s430 = ssub.s32 %s11, 2
      // Predicated region
      $region49: #{comenet_forward.21} parent=47 // pred_check
        %p431 = pneg %p160
      $region50: #{comenet_forward.21} parent=47 // pred_check_branch
        %433 = sbr.rel (%p431) target = $region52
      $region51: #{comenet_forward.21} parent=47 // pred_region
        %p434 = scmp.lt.s32.totalorder %s17, 1
        %s435 = scalar_select %p434, %s17, 1
        %s436 = smul.addr %s435, 4
        %s437 = scalar_lea.vmem %s5, %s436
      $region52: #{comenet_forward.21} parent=47 // pred_fallthru
        _
    $region48: #{comenet_forward.21} parent=5 // pred_fallthru
      _
  $region6: #{comenet_forward.21} parent=0 // loop_footer
    %s15 = sadd.s32 1, %s11
  $region7: #{comenet_forward.21} parent=0 // loop_footer_branch
    %10 = sbr.rel target = $region3
  $region8: #{comenet_forward.21} parent=0 // loop_exit
    _

// kernel: comenet_forward.19
$region0: #{comenet_forward.19}
  #allocation0 [shape = 'u32[]', space=smem, size = 0x4, offset = 0x4, fixed_abs, tag = 'smem constant byte address 0x4 - core index']
  #allocation1 [shape = 'u32[72,128]{1,0:T(1,128)}', space=vmem, size = 0x9000, scoped, tag = 'internal scratch']
  %s0 = inlined_call_operand.vmem [shape: bf16[32,6], index: 0, kind: input, shape index: {}]
  %s1 = inlined_call_operand.vmem [shape: bf16[6,128], index: 1, kind: input, shape index: {}]
  %s2 = inlined_call_operand.vmem [shape: bf16[32,128], index: 2, kind: output, shape index: {}]
  %s3 = sld [smem:[#allocation0]]
  $region41: #{comenet_forward.19} parent=0
    _
  %s5 = ssub.s32 1, %s3
  %s6 = scalar_select 0, %s5, %s3
  loop: start=0, step=1, limit=4
  $region2: #{comenet_forward.19} parent=0 // loop_pre_header
    _
  $region3: #{comenet_forward.19} parent=0 // loop_header
    %s8 = sphi 0, %s12
    %p9 = scmp.ge.s32.totalorder %s8, 4
    %s18 = sphi 0, %s20
    %s21 = sphi 0, %s18
    %s22 = sphi 0, %s21
    %s38 = sphi 0, %s22
    %s42 = sphi 0, %s42
    %s44 = sphi 0, %s42
    %s45 = sphi 0, %s44
    %s59 = sphi 0, %s45
    %s65 = sphi 0, %s67
    %s68 = sphi 0, %s65
    %s69 = sphi 0, %s68
    %s85 = sphi 0, %s69
  $region4: #{comenet_forward.19} parent=0 // loop_header_branch
    %11 = sbr.rel (%p9) target = $region8
  $region5: #{comenet_forward.19} parent=0 // loop_body
    %s13 = ssub.s32 %s8, 1
    %s14 = ssub.s32 %s8, 2
    %s15 = sadd.s32 %s8, 1
    %s16 = ssub.s32 %s8, %s15
    %p17 = scmp.eq.s32.totalorder %s16, 0
    %s19 = sadd.s32 %s18, 1
    %s20 = scalar_select %p17, %s18, %s19
    %p23 = pneg %p17
    %p24 = scmp.eq.s32.totalorder %s8, 1
    %p25 = por %p23, %p24
    %p26 = scmp.ne.s32.totalorder %s18, %s21
    %p27 = scmp.eq.s32.totalorder %s8, 0
    %p28 = por %p26, %p27
    %p29 = scmp.ne.s32.totalorder %s18, %s21
    %p30 = scmp.eq.s32.totalorder %s13, 1
    %p31 = por %p29, %p30
    %p32 = scmp.ne.s32.totalorder %s21, %s22
    %p33 = scmp.eq.s32.totalorder %s13, 0
    %p34 = por %p32, %p33
    %p35 = scmp.ne.s32.totalorder %s21, %s22
    %p36 = scmp.eq.s32.totalorder %s14, 1
    %p37 = por %p35, %p36
    %p39 = scmp.ne.s32.totalorder %s22, %s38
    %p40 = scmp.eq.s32.totalorder %s14, 0
    %p41 = por %p39, %p40
    %s43 = sadd.s32 %s42, 1
    %p46 = scmp.eq.s32.totalorder %s8, 1
    %p47 = scmp.ne.s32.totalorder %s42, %s44
    %p48 = scmp.eq.s32.totalorder %s8, 0
    %p49 = por %p47, %p48
    %p50 = scmp.ne.s32.totalorder %s42, %s44
    %p51 = scmp.eq.s32.totalorder %s13, 1
    %p52 = por %p50, %p51
    %p53 = scmp.ne.s32.totalorder %s44, %s45
    %p54 = scmp.eq.s32.totalorder %s13, 0
    %p55 = por %p53, %p54
    %p56 = scmp.ne.s32.totalorder %s44, %s45
    %p57 = scmp.eq.s32.totalorder %s14, 1
    %p58 = por %p56, %p57
    %p60 = scmp.ne.s32.totalorder %s45, %s59
    %p61 = scmp.eq.s32.totalorder %s14, 0
    %p62 = por %p60, %p61
    %s63 = ssub.s32 %s8, %s15
    %p64 = scmp.eq.s32.totalorder %s63, 0
    %s66 = sadd.s32 %s65, 1
    %s67 = scalar_select %p64, %s65, %s66
    %p70 = pneg %p64
    %p71 = scmp.eq.s32.totalorder %s8, 1
    %p72 = por %p70, %p71
    %p73 = scmp.ne.s32.totalorder %s65, %s68
    %p74 = scmp.eq.s32.totalorder %s8, 0
    %p75 = por %p73, %p74
    %p76 = scmp.ne.s32.totalorder %s65, %s68
    %p77 = scmp.eq.s32.totalorder %s13, 1
    %p78 = por %p76, %p77
    %p79 = scmp.ne.s32.totalorder %s68, %s69
    %p80 = scmp.eq.s32.totalorder %s13, 0
    %p81 = por %p79, %p80
    %p82 = scmp.ne.s32.totalorder %s68, %s69
    %p83 = scmp.eq.s32.totalorder %s14, 1
    %p84 = por %p82, %p83
    %p86 = scmp.ne.s32.totalorder %s69, %s85
    %p87 = scmp.eq.s32.totalorder %s14, 0
    %p88 = por %p86, %p87
    %p89 = scmp.le.s32.totalorder 1, %s8
    %p90 = scmp.lt.s32.totalorder %s8, 3
    %p91 = pnand %p89, %p90
    %p92 = pneg %p91
    // Predicated region
    $region9: #{comenet_forward.19} parent=5 // pred_check
      _
    $region10: #{comenet_forward.19} parent=5 // pred_check_branch
      %94 = sbr.rel (%p91) target = $region12
    $region11: #{comenet_forward.19} parent=5 // pred_region
      %s95 = ssub.s32 %s8, 1
      // Predicated region
      $region13: #{comenet_forward.19} parent=11 // pred_check
        %p96 = pneg %p55
      $region14: #{comenet_forward.19} parent=11 // pred_check_branch
        %98 = sbr.rel (%p96) target = $region16
      $region15: #{comenet_forward.19} parent=11 // pred_region
        _
      $region16: #{comenet_forward.19} parent=11 // pred_fallthru
        _
    $region12: #{comenet_forward.19} parent=5 // pred_fallthru
      _
    %p99 = scmp.lt.s32.totalorder %s8, 2
    // Predicated region
    $region17: #{comenet_forward.19} parent=5 // pred_check
      %p100 = pneg %p99
    $region18: #{comenet_forward.19} parent=5 // pred_check_branch
      %102 = sbr.rel (%p100) target = $region20
    $region19: #{comenet_forward.19} parent=5 // pred_region
      // Predicated region
      $region21: #{comenet_forward.19} parent=19 // pred_check
        %p103 = pneg %p28
      $region22: #{comenet_forward.19} parent=19 // pred_check_branch
        %105 = sbr.rel (%p103) target = $region24
      $region23: #{comenet_forward.19} parent=19 // pred_region
        %s106 = smul.u32 2, %s8
        %p107 = scmp.lt.s32.totalorder %s106, 3
        %s108 = scalar_select %p107, %s106, 3
        %s109 = smul.addr %s108, 4
        %s110 = scalar_lea.vmem %s0, %s109
        %s111 = smul.u32 2, %s8
      $region24: #{comenet_forward.19} parent=19 // pred_fallthru
        _
    $region20: #{comenet_forward.19} parent=5 // pred_fallthru
      _
    %p112 = scmp.le.s32.totalorder 1, %s8
    %p113 = scmp.lt.s32.totalorder %s8, 3
    %p114 = pnand %p112, %p113
    %p115 = pneg %p114
    // Predicated region
    $region25: #{comenet_forward.19} parent=5 // pred_check
      _
    $region26: #{comenet_forward.19} parent=5 // pred_check_branch
      %117 = sbr.rel (%p114) target = $region28
    $region27: #{comenet_forward.19} parent=5 // pred_region
      %s118 = ssub.s32 %s8, 1
      %s119 = smul.u32 2, %s13
      %p120 = scmp.lt.s32.totalorder %s119, 3
      %s121 = scalar_select %p120, %s119, 3
      %s122 = smul.addr %s121, 4
      %s123 = scalar_lea.vmem %s0, %s122
      %p124 = pneg %p34
      %p125 = pneg %p31
      %p126 = pneg %p55
      %p127 = pneg %p52
      %p128 = pneg %p81
      %p129 = pneg %p78
      %s130 = smul.u32 2, %s13
      %p131 = scmp.lt.s32.totalorder %s130, 3
      %s132 = scalar_select %p131, %s130, 3
      %s133 = smul.addr %s132, 4
      %s134 = scalar_lea.vmem %s2, %s133
      %s135 = smul.u32 2, %s13
      %p136 = scmp.lt.s32.totalorder %s135, 3
      %s137 = scalar_select %p136, %s135, 3
      %s138 = smul.addr %s137, 4
      %s139 = scalar_lea.vmem %s0, %s138
      %s140 = smul.u32 2, %s13
      %s141 = smul.u32 2, %s13
      %p142 = scmp.lt.s32.totalorder %s141, 3
      %s143 = scalar_select %p142, %s141, 3
      %s144 = smul.addr %s143, 4
      %s145 = scalar_lea.vmem %s2, %s144
      %s146 = smul.u32 2, %s13
      %v148 = vld [vmem:[%s139] sm:$0xf]
      %v149 = vld [vmem:[%s139 + $0x4] sm:$0xf]
      %v150 = vld [vmem:[%s1] sm:$0x7]
      %v153 = vunpack.c.l.b16 %v148
      %v154 = vunpack.c.l.b16 %v149
      %v155 = vpack.c.b16 %v154, %v153
      %vm156 = vcmask 48128
      %v158 = vsel %vm156, %v155, 0
      %vm160 = vcmask 1042432
      %v162 = vsel %vm160, %v150, 0
      %164 = vmatpush.bf16.msra.mxu0 0
      %165 = vmatpush.bf16.msra.mxu0 0
      %166 = vmatpush.bf16.msra.mxu0 0
      %167 = vmatpush.bf16.msra.mxu0 0
      %168 = vmatpush.bf16.msra.mxu0 0
      %169 = vmatpush.bf16.msra.mxu0 0
      %170 = vmatpush.bf16.msra.mxu0 0
      %171 = vmatpush.bf16.msra.mxu0 %v162
      %172 = vmatmul.bf16.gmra.mxu0 %v158
      %v173 = vpop.f32.mrf.mxu0
      %v174 = vadd.f32 0.0, %v173
      %v175 = vpop.f32.mrf.mxu0
      %v176 = vadd.f32 0.0, %v175
      %177 = vdwg.mxu0
      %v178 = vpack.c.bf16 %v174, %v174
      %v179 = vpack.c.bf16 %v176, %v176
      %180 = vst [vmem:[%s145] sm:$0xf] %v178
      %181 = vst [vmem:[%s145 + $0x4] sm:$0xf] %v179
      %s182 = smul.u32 2, %s13
      %p183 = scmp.lt.s32.totalorder %s182, 3
      %s184 = scalar_select %p183, %s182, 3
      %s185 = smul.addr %s184, 4
      %s186 = scalar_lea.vmem %s2, %s185
      // Predicated region
      $region29: #{comenet_forward.19} parent=27 // pred_check
        %p187 = pneg %p78
      $region30: #{comenet_forward.19} parent=27 // pred_check_branch
        %189 = sbr.rel (%p187) target = $region32
      $region31: #{comenet_forward.19} parent=27 // pred_region
        %s190 = smul.u32 2, %s13
      $region32: #{comenet_forward.19} parent=27 // pred_fallthru
        _
    $region28: #{comenet_forward.19} parent=5 // pred_fallthru
      _
    %p191 = scmp.le.s32.totalorder 2, %s8
    // Predicated region
    $region33: #{comenet_forward.19} parent=5 // pred_check
      %p192 = pneg %p191
    $region34: #{comenet_forward.19} parent=5 // pred_check_branch
      %194 = sbr.rel (%p192) target = $region36
    $region35: #{comenet_forward.19} parent=5 // pred_region
      %s195 = ssub.s32 %s8, 2
      // Predicated region
      $region37: #{comenet_forward.19} parent=35 // pred_check
        %p196 = pneg %p84
      $region38: #{comenet_forward.19} parent=35 // pred_check_branch
        %198 = sbr.rel (%p196) target = $region40
      $region39: #{comenet_forward.19} parent=35 // pred_region
        %s199 = smul.u32 2, %s14
        %p200 = scmp.lt.s32.totalorder %s199, 3
        %s201 = scalar_select %p200, %s199, 3
        %s202 = smul.addr %s201, 4
        %s203 = scalar_lea.vmem %s2, %s202
      $region40: #{comenet_forward.19} parent=35 // pred_fallthru
        _
    $region36: #{comenet_forward.19} parent=5 // pred_fallthru
      _
  $region6: #{comenet_forward.19} parent=0 // loop_footer
    %s12 = sadd.s32 1, %s8
  $region7: #{comenet_forward.19} parent=0 // loop_footer_branch
    %7 = sbr.rel target = $region3
  $region8: #{comenet_forward.19} parent=0 // loop_exit
    _

// kernel: comenet_forward.22
$region0: #{comenet_forward.22}
  #allocation0 [shape = 'u32[]', space=smem, size = 0x4, offset = 0x4, fixed_abs, tag = 'smem constant byte address 0x4 - core index']
  #allocation1 [shape = 'u32[72,128]{1,0:T(1,128)}', space=vmem, size = 0x9000, scoped, tag = 'internal scratch']
  %s0 = inlined_call_operand.vmem [shape: bf16[16,128], index: 0, kind: input, shape index: {}]
  %s1 = inlined_call_operand.vmem [shape: bf16[2,128,128], index: 1, kind: input, shape index: {}]
  %s2 = inlined_call_operand.vmem [shape: f32[2,1,128], index: 2, kind: input, shape index: {}]
  %s3 = inlined_call_operand.vmem [shape: bf16[16,128], index: 3, kind: output, shape index: {}]
  %s4 = sld [smem:[#allocation0]]
  $region45: #{comenet_forward.22} parent=0
    _
  %s6 = ssub.s32 1, %s4
  %s7 = scalar_select 0, %s6, %s4
  loop: start=0, step=1, limit=4
  $region2: #{comenet_forward.22} parent=0 // loop_pre_header
    _
  $region3: #{comenet_forward.22} parent=0 // loop_header
    %s9 = sphi 0, %s13
    %p10 = scmp.ge.s32.totalorder %s9, 4
    %s19 = sphi 0, %s21
    %s22 = sphi 0, %s19
    %s23 = sphi 0, %s22
    %s39 = sphi 0, %s23
    %s43 = sphi 0, %s43
    %s45 = sphi 0, %s43
    %s46 = sphi 0, %s45
    %s60 = sphi 0, %s46
    %s64 = sphi 0, %s64
    %s66 = sphi 0, %s64
    %s67 = sphi 0, %s66
    %s81 = sphi 0, %s67
    %s87 = sphi 0, %s89
    %s90 = sphi 0, %s87
    %s91 = sphi 0, %s90
    %s107 = sphi 0, %s91
  $region4: #{comenet_forward.22} parent=0 // loop_header_branch
    %12 = sbr.rel (%p10) target = $region8
  $region5: #{comenet_forward.22} parent=0 // loop_body
    %s14 = ssub.s32 %s9, 1
    %s15 = ssub.s32 %s9, 2
    %s16 = sadd.s32 %s9, 1
    %s17 = ssub.s32 %s9, %s16
    %p18 = scmp.eq.s32.totalorder %s17, 0
    %s20 = sadd.s32 %s19, 1
    %s21 = scalar_select %p18, %s19, %s20
    %p24 = pneg %p18
    %p25 = scmp.eq.s32.totalorder %s9, 1
    %p26 = por %p24, %p25
    %p27 = scmp.ne.s32.totalorder %s19, %s22
    %p28 = scmp.eq.s32.totalorder %s9, 0
    %p29 = por %p27, %p28
    %p30 = scmp.ne.s32.totalorder %s19, %s22
    %p31 = scmp.eq.s32.totalorder %s14, 1
    %p32 = por %p30, %p31
    %p33 = scmp.ne.s32.totalorder %s22, %s23
    %p34 = scmp.eq.s32.totalorder %s14, 0
    %p35 = por %p33, %p34
    %p36 = scmp.ne.s32.totalorder %s22, %s23
    %p37 = scmp.eq.s32.totalorder %s15, 1
    %p38 = por %p36, %p37
    %p40 = scmp.ne.s32.totalorder %s23, %s39
    %p41 = scmp.eq.s32.totalorder %s15, 0
    %p42 = por %p40, %p41
    %s44 = sadd.s32 %s43, 1
    %p47 = scmp.eq.s32.totalorder %s9, 1
    %p48 = scmp.ne.s32.totalorder %s43, %s45
    %p49 = scmp.eq.s32.totalorder %s9, 0
    %p50 = por %p48, %p49
    %p51 = scmp.ne.s32.totalorder %s43, %s45
    %p52 = scmp.eq.s32.totalorder %s14, 1
    %p53 = por %p51, %p52
    %p54 = scmp.ne.s32.totalorder %s45, %s46
    %p55 = scmp.eq.s32.totalorder %s14, 0
    %p56 = por %p54, %p55
    %p57 = scmp.ne.s32.totalorder %s45, %s46
    %p58 = scmp.eq.s32.totalorder %s15, 1
    %p59 = por %p57, %p58
    %p61 = scmp.ne.s32.totalorder %s46, %s60
    %p62 = scmp.eq.s32.totalorder %s15, 0
    %p63 = por %p61, %p62
    %s65 = sadd.s32 %s64, 1
    %p68 = scmp.eq.s32.totalorder %s9, 1
    %p69 = scmp.ne.s32.totalorder %s64, %s66
    %p70 = scmp.eq.s32.totalorder %s9, 0
    %p71 = por %p69, %p70
    %p72 = scmp.ne.s32.totalorder %s64, %s66
    %p73 = scmp.eq.s32.totalorder %s14, 1
    %p74 = por %p72, %p73
    %p75 = scmp.ne.s32.totalorder %s66, %s67
    %p76 = scmp.eq.s32.totalorder %s14, 0
    %p77 = por %p75, %p76
    %p78 = scmp.ne.s32.totalorder %s66, %s67
    %p79 = scmp.eq.s32.totalorder %s15, 1
    %p80 = por %p78, %p79
    %p82 = scmp.ne.s32.totalorder %s67, %s81
    %p83 = scmp.eq.s32.totalorder %s15, 0
    %p84 = por %p82, %p83
    %s85 = ssub.s32 %s9, %s16
    %p86 = scmp.eq.s32.totalorder %s85, 0
    %s88 = sadd.s32 %s87, 1
    %s89 = scalar_select %p86, %s87, %s88
    %p92 = pneg %p86
    %p93 = scmp.eq.s32.totalorder %s9, 1
    %p94 = por %p92, %p93
    %p95 = scmp.ne.s32.totalorder %s87, %s90
    %p96 = scmp.eq.s32.totalorder %s9, 0
    %p97 = por %p95, %p96
    %p98 = scmp.ne.s32.totalorder %s87, %s90
    %p99 = scmp.eq.s32.totalorder %s14, 1
    %p100 = por %p98, %p99
    %p101 = scmp.ne.s32.totalorder %s90, %s91
    %p102 = scmp.eq.s32.totalorder %s14, 0
    %p103 = por %p101, %p102
    %p104 = scmp.ne.s32.totalorder %s90, %s91
    %p105 = scmp.eq.s32.totalorder %s15, 1
    %p106 = por %p104, %p105
    %p108 = scmp.ne.s32.totalorder %s91, %s107
    %p109 = scmp.eq.s32.totalorder %s15, 0
    %p110 = por %p108, %p109
    %p111 = scmp.le.s32.totalorder 1, %s9
    %p112 = scmp.lt.s32.totalorder %s9, 3
    %p113 = pnand %p111, %p112
    %p114 = pneg %p113
    // Predicated region
    $region9: #{comenet_forward.22} parent=5 // pred_check
      _
    $region10: #{comenet_forward.22} parent=5 // pred_check_branch
      %116 = sbr.rel (%p113) target = $region12
    $region11: #{comenet_forward.22} parent=5 // pred_region
      %s117 = ssub.s32 %s9, 1
      // Predicated region
      $region13: #{comenet_forward.22} parent=11 // pred_check
        %p118 = pneg %p56
      $region14: #{comenet_forward.22} parent=11 // pred_check_branch
        %120 = sbr.rel (%p118) target = $region16
      $region15: #{comenet_forward.22} parent=11 // pred_region
        _
      $region16: #{comenet_forward.22} parent=11 // pred_fallthru
        _
      // Predicated region
      $region17: #{comenet_forward.22} parent=11 // pred_check
        %p121 = pneg %p77
      $region18: #{comenet_forward.22} parent=11 // pred_check_branch
        %123 = sbr.rel (%p121) target = $region20
      $region19: #{comenet_forward.22} parent=11 // pred_region
        _
      $region20: #{comenet_forward.22} parent=11 // pred_fallthru
        _
    $region12: #{comenet_forward.22} parent=5 // pred_fallthru
      _
    %p124 = scmp.lt.s32.totalorder %s9, 2
    // Predicated region
    $region21: #{comenet_forward.22} parent=5 // pred_check
      %p125 = pneg %p124
    $region22: #{comenet_forward.22} parent=5 // pred_check_branch
      %127 = sbr.rel (%p125) target = $region24
    $region23: #{comenet_forward.22} parent=5 // pred_region
      // Predicated region
      $region25: #{comenet_forward.22} parent=23 // pred_check
        %p128 = pneg %p29
      $region26: #{comenet_forward.22} parent=23 // pred_check_branch
        %130 = sbr.rel (%p128) target = $region28
      $region27: #{comenet_forward.22} parent=23 // pred_region
        %p131 = scmp.lt.s32.totalorder %s9, 1
        %s132 = scalar_select %p131, %s9, 1
        %s133 = smul.addr %s132, 4
        %s134 = scalar_lea.vmem %s0, %s133
      $region28: #{comenet_forward.22} parent=23 // pred_fallthru
        _
    $region24: #{comenet_forward.22} parent=5 // pred_fallthru
      _
    %p135 = scmp.le.s32.totalorder 1, %s9
    %p136 = scmp.lt.s32.totalorder %s9, 3
    %p137 = pnand %p135, %p136
    %p138 = pneg %p137
    // Predicated region
    $region29: #{comenet_forward.22} parent=5 // pred_check
      _
    $region30: #{comenet_forward.22} parent=5 // pred_check_branch
      %140 = sbr.rel (%p137) target = $region32
    $region31: #{comenet_forward.22} parent=5 // pred_region
      %s141 = ssub.s32 %s9, 1
      %p142 = scmp.lt.s32.totalorder %s14, 1
      %s143 = scalar_select %p142, %s14, 1
      %s144 = smul.addr %s143, 4
      %s145 = scalar_lea.vmem %s0, %s144
      %p146 = pneg %p35
      %p147 = pneg %p32
      %p148 = pneg %p56
      %p149 = pneg %p53
      %p150 = pneg %p77
      %p151 = pneg %p74
      %p152 = pneg %p103
      %p153 = pneg %p100
      %p154 = scmp.lt.s32.totalorder %s14, 1
      %s155 = scalar_select %p154, %s14, 1
      %s156 = smul.addr %s155, 4
      %s157 = scalar_lea.vmem %s3, %s156
      %p158 = scmp.lt.s32.totalorder %s14, 1
      %s159 = scalar_select %p158, %s14, 1
      %s160 = smul.addr %s159, 4
      %s161 = scalar_lea.vmem %s0, %s160
      %p162 = scmp.lt.s32.totalorder %s14, 1
      %s163 = scalar_select %p162, %s14, 1
      %s164 = smul.addr %s163, 4
      %s165 = scalar_lea.vmem %s3, %s164
      %v166 = vld [vmem:[%s161] sm:$0xf]
      %v167 = vunpack.c.l.bf16 %v166
      %v168 = vld [vmem:[%s1] sm:$0xf]
      %v169 = vld [vmem:[%s1 + $0x4] sm:$0xf]
      %v170 = vld [vmem:[%s1 + $0x8] sm:$0xf]
      %v171 = vld [vmem:[%s1 + $0xc] sm:$0xf]
      %v172 = vld [vmem:[%s1 + $0x10] sm:$0xf]
      %v173 = vld [vmem:[%s1 + $0x14] sm:$0xf]
      %v174 = vld [vmem:[%s1 + $0x18] sm:$0xf]
      %v175 = vld [vmem:[%s1 + $0x1c] sm:$0xf]
      %v176 = vld [vmem:[%s1 + $0x20] sm:$0xf]
      %v177 = vld [vmem:[%s1 + $0x24] sm:$0xf]
      %v178 = vld [vmem:[%s1 + $0x28] sm:$0xf]
      %v179 = vld [vmem:[%s1 + $0x2c] sm:$0xf]
      %v180 = vld [vmem:[%s1 + $0x30] sm:$0xf]
      %v181 = vld [vmem:[%s1 + $0x34] sm:$0xf]
      %v182 = vld [vmem:[%s1 + $0x38] sm:$0xf]
      %v183 = vld [vmem:[%s1 + $0x3c] sm:$0xf]
      %v184 = vld [vmem:[%s2] sm:$0x1]
      %v186 = vperm.slane %v184, 0
      %v204 = vunpack.c.l.b16 %v168
      %v205 = vunpack.c.l.b16 %v169
      %v206 = vunpack.c.l.b16 %v170
      %v207 = vunpack.c.l.b16 %v171
      %v208 = vunpack.c.l.b16 %v172
      %v209 = vunpack.c.l.b16 %v173
      %v210 = vunpack.c.l.b16 %v174
      %v211 = vunpack.c.l.b16 %v175
      %v212 = vunpack.c.l.b16 %v176
      %v213 = vunpack.c.l.b16 %v177
      %v214 = vunpack.c.l.b16 %v178
      %v215 = vunpack.c.l.b16 %v179
      %v216 = vunpack.c.l.b16 %v180
      %v217 = vunpack.c.l.b16 %v181
      %v218 = vunpack.c.l.b16 %v182
      %v219 = vunpack.c.l.b16 %v183
      %v220 = vpack.c.b16 %v205, %v204
      %v221 = vpack.c.b16 %v207, %v206
      %v222 = vpack.c.b16 %v209, %v208
      %v223 = vpack.c.b16 %v211, %v210
      %v224 = vpack.c.b16 %v213, %v212
      %v225 = vpack.c.b16 %v215, %v214
      %v226 = vpack.c.b16 %v217, %v216
      %v227 = vpack.c.b16 %v219, %v218
      %236 = vmatpush.bf16.msra.mxu0 %v227
      %237 = vmatpush.bf16.msra.mxu0 %v226
      %238 = vmatpush.bf16.msra.mxu0 %v225
      %239 = vmatpush.bf16.msra.mxu0 %v224
      %240 = vmatpush.bf16.msra.mxu0 %v223
      %241 = vmatpush.bf16.msra.mxu0 %v222
      %242 = vmatpush.bf16.msra.mxu0 %v221
      %243 = vmatpush.bf16.msra.mxu0 %v220
      %244 = vmatmul.bf16.gmra.mxu0 %v166
      %v245 = vpop.f32.mrf.mxu0
      %v246 = vadd.f32 %v186, %v245
      %v247 = vpop.f32.mrf.mxu0
      %248 = vdwg.mxu0
      %v249 = vxor.u32 %v246, 2147483648
      %v250 = vmul.f32 %v249, 1.442695
      %v251 = vpow.pop %v250
      %v252 = vadd.f32 %v251, 1.0
      %v253 = vrcp.pop %v252
      %v254 = vmul.f32 %v252, %v253
      %v255 = vsub.f32 1.0, %v254
      %v256 = vmul.f32 %v253, %v255
      %v257 = vadd.f32 %v253, %v256
      %vm258 = vweird.f32 %v252
      %vm259 = vweird.f32 %v253
      %vm260 = vmor %vm258, %vm259
      %v261 = vsel %vm260, %v253, %v257
      %v262 = vand.u32 2147483647, %v252
      %vm263 = vcmp.eq.f32.partialorder %v262, 8.507059e+37
      %v264 = vand.u32 %v252, 2147483648
      %v265 = vor.u32 1.1754944e-38, %v264
      %v266 = vsel %vm263, %v265, %v261
      %v267 = vmul.f32 1.0, %v266
      %v268 = vmul.f32 %v246, %v267
      %v269 = vadd.f32 %v167, %v268
      %v270 = vpack.c.bf16 %v269, %v269
      %s271 = scalar_lea.vmem %s1, 64
      %v272 = vld [vmem:[%s271] sm:$0xf]
      %v273 = vld [vmem:[%s271 + $0x4] sm:$0xf]
      %v274 = vld [vmem:[%s271 + $0x8] sm:$0xf]
      %v275 = vld [vmem:[%s271 + $0xc] sm:$0xf]
      %v276 = vld [vmem:[%s271 + $0x10] sm:$0xf]
      %v277 = vld [vmem:[%s271 + $0x14] sm:$0xf]
      %v278 = vld [vmem:[%s271 + $0x18] sm:$0xf]
      %v279 = vld [vmem:[%s271 + $0x1c] sm:$0xf]
      %v280 = vld [vmem:[%s271 + $0x20] sm:$0xf]
      %v281 = vld [vmem:[%s271 + $0x24] sm:$0xf]
      %v282 = vld [vmem:[%s271 + $0x28] sm:$0xf]
      %v283 = vld [vmem:[%s271 + $0x2c] sm:$0xf]
      %v284 = vld [vmem:[%s271 + $0x30] sm:$0xf]
      %v285 = vld [vmem:[%s271 + $0x34] sm:$0xf]
      %v286 = vld [vmem:[%s271 + $0x38] sm:$0xf]
      %v287 = vld [vmem:[%s271 + $0x3c] sm:$0xf]
      %s288 = scalar_lea.vmem %s2, 1
      %v289 = vld [vmem:[%s288] sm:$0x1]
      %v291 = vperm.slane %v289, 0
      %v309 = vunpack.c.l.b16 %v272
      %v310 = vunpack.c.l.b16 %v273
      %v311 = vunpack.c.l.b16 %v274
      %v312 = vunpack.c.l.b16 %v275
      %v313 = vunpack.c.l.b16 %v276
      %v314 = vunpack.c.l.b16 %v277
      %v315 = vunpack.c.l.b16 %v278
      %v316 = vunpack.c.l.b16 %v279
      %v317 = vunpack.c.l.b16 %v280
      %v318 = vunpack.c.l.b16 %v281
      %v319 = vunpack.c.l.b16 %v282
      %v320 = vunpack.c.l.b16 %v283
      %v321 = vunpack.c.l.b16 %v284
      %v322 = vunpack.c.l.b16 %v285
      %v323 = vunpack.c.l.b16 %v286
      %v324 = vunpack.c.l.b16 %v287
      %v325 = vpack.c.b16 %v310, %v309
      %v326 = vpack.c.b16 %v312, %v311
      %v327 = vpack.c.b16 %v314, %v313
      %v328 = vpack.c.b16 %v316, %v315
      %v329 = vpack.c.b16 %v318, %v317
      %v330 = vpack.c.b16 %v320, %v319
      %v331 = vpack.c.b16 %v322, %v321
      %v332 = vpack.c.b16 %v324, %v323
      %341 = vmatpush.bf16.msra.mxu0 %v332
      %342 = vmatpush.bf16.msra.mxu0 %v331
      %343 = vmatpush.bf16.msra.mxu0 %v330
      %344 = vmatpush.bf16.msra.mxu0 %v329
      %345 = vmatpush.bf16.msra.mxu0 %v328
      %346 = vmatpush.bf16.msra.mxu0 %v327
      %347 = vmatpush.bf16.msra.mxu0 %v326
      %348 = vmatpush.bf16.msra.mxu0 %v325
      %349 = vmatmul.bf16.gmra.mxu0 %v270
      %v350 = vpop.f32.mrf.mxu0
      %v351 = vadd.f32 %v291, %v350
      %v352 = vpop.f32.mrf.mxu0
      %353 = vdwg.mxu0
      %v354 = vxor.u32 %v351, 2147483648
      %v355 = vmul.f32 %v354, 1.442695
      %v356 = vpow.pop %v355
      %v357 = vadd.f32 %v356, 1.0
      %v358 = vrcp.pop %v357
      %v359 = vmul.f32 %v357, %v358
      %v360 = vsub.f32 1.0, %v359
      %v361 = vmul.f32 %v358, %v360
      %v362 = vadd.f32 %v358, %v361
      %vm363 = vweird.f32 %v357
      %vm364 = vweird.f32 %v358
      %vm365 = vmor %vm363, %vm364
      %v366 = vsel %vm365, %v358, %v362
      %v367 = vand.u32 2147483647, %v357
      %vm368 = vcmp.eq.f32.partialorder %v367, 8.507059e+37
      %v369 = vand.u32 %v357, 2147483648
      %v370 = vor.u32 1.1754944e-38, %v369
      %v371 = vsel %vm368, %v370, %v366
      %v372 = vmul.f32 1.0, %v371
      %v373 = vmul.f32 %v351, %v372
      %v374 = vadd.f32 %v269, %v373
      %v375 = vpack.c.bf16 %v374, %v374
      %376 = vst [vmem:[%s165] sm:$0xf] %v375
      %p377 = scmp.lt.s32.totalorder %s14, 1
      %s378 = scalar_select %p377, %s14, 1
      %s379 = smul.addr %s378, 4
      %s380 = scalar_lea.vmem %s3, %s379
      // Predicated region
      $region33: #{comenet_forward.22} parent=31 // pred_check
        %p381 = pneg %p100
      $region34: #{comenet_forward.22} parent=31 // pred_check_branch
        %383 = sbr.rel (%p381) target = $region36
      $region35: #{comenet_forward.22} parent=31 // pred_region
        _
      $region36: #{comenet_forward.22} parent=31 // pred_fallthru
        _
    $region32: #{comenet_forward.22} parent=5 // pred_fallthru
      _
    %p384 = scmp.le.s32.totalorder 2, %s9
    // Predicated region
    $region37: #{comenet_forward.22} parent=5 // pred_check
      %p385 = pneg %p384
    $region38: #{comenet_forward.22} parent=5 // pred_check_branch
      %387 = sbr.rel (%p385) target = $region40
    $region39: #{comenet_forward.22} parent=5 // pred_region
      %s388 = ssub.s32 %s9, 2
      // Predicated region
      $region41: #{comenet_forward.22} parent=39 // pred_check
        %p389 = pneg %p106
      $region42: #{comenet_forward.22} parent=39 // pred_check_branch
        %391 = sbr.rel (%p389) target = $region44
      $region43: #{comenet_forward.22} parent=39 // pred_region
        %p392 = scmp.lt.s32.totalorder %s15, 1
        %s393 = scalar_select %p392, %s15, 1
        %s394 = smul.addr %s393, 4
        %s395 = scalar_lea.vmem %s3, %s394
      $region44: #{comenet_forward.22} parent=39 // pred_fallthru
        _
    $region40: #{comenet_forward.22} parent=5 // pred_fallthru
      _
  $region6: #{comenet_forward.22} parent=0 // loop_footer
    %s13 = sadd.s32 1, %s9
  $region7: #{comenet_forward.22} parent=0 // loop_footer_branch
    %8 = sbr.rel target = $region3
  $region8: #{comenet_forward.22} parent=0 // loop_exit
    _

// kernel: comenet_forward.23
$region0: #{comenet_forward.23}
  #allocation0 [shape = 'u32[]', space=smem, size = 0x4, offset = 0x4, fixed_abs, tag = 'smem constant byte address 0x4 - core index']
  #allocation1 [shape = 'u32[72,128]{1,0:T(1,128)}', space=vmem, size = 0x9000, scoped, tag = 'internal scratch']
  %s0 = inlined_call_operand.vmem [shape: bf16[16,128], index: 0, kind: input, shape index: {}]
  %s1 = inlined_call_operand.vmem [shape: bf16[16,128], index: 1, kind: input, shape index: {}]
  %s2 = inlined_call_operand.vmem [shape: bf16[16,128], index: 2, kind: input, shape index: {}]
  %s3 = inlined_call_operand.vmem [shape: bf16[128,128], index: 3, kind: input, shape index: {}]
  %s4 = inlined_call_operand.vmem [shape: f32[1,128], index: 4, kind: input, shape index: {}]
  %s5 = inlined_call_operand.vmem [shape: bf16[16,128], index: 5, kind: output, shape index: {}]
  %s6 = sld [smem:[#allocation0]]
  $region53: #{comenet_forward.23} parent=0
    _
  %s8 = ssub.s32 1, %s6
  %s9 = scalar_select 0, %s8, %s6
  loop: start=0, step=1, limit=4
  $region2: #{comenet_forward.23} parent=0 // loop_pre_header
    _
  $region3: #{comenet_forward.23} parent=0 // loop_header
    %s11 = sphi 0, %s15
    %p12 = scmp.ge.s32.totalorder %s11, 4
    %s21 = sphi 0, %s23
    %s24 = sphi 0, %s21
    %s25 = sphi 0, %s24
    %s41 = sphi 0, %s25
    %s47 = sphi 0, %s49
    %s50 = sphi 0, %s47
    %s51 = sphi 0, %s50
    %s67 = sphi 0, %s51
    %s73 = sphi 0, %s75
    %s76 = sphi 0, %s73
    %s77 = sphi 0, %s76
    %s93 = sphi 0, %s77
    %s97 = sphi 0, %s97
    %s99 = sphi 0, %s97
    %s100 = sphi 0, %s99
    %s114 = sphi 0, %s100
    %s118 = sphi 0, %s118
    %s120 = sphi 0, %s118
    %s121 = sphi 0, %s120
    %s135 = sphi 0, %s121
    %s141 = sphi 0, %s143
    %s144 = sphi 0, %s141
    %s145 = sphi 0, %s144
    %s161 = sphi 0, %s145
  $region4: #{comenet_forward.23} parent=0 // loop_header_branch
    %14 = sbr.rel (%p12) target = $region8
  $region5: #{comenet_forward.23} parent=0 // loop_body
    %s16 = ssub.s32 %s11, 1
    %s17 = ssub.s32 %s11, 2
    %s18 = sadd.s32 %s11, 1
    %s19 = ssub.s32 %s11, %s18
    %p20 = scmp.eq.s32.totalorder %s19, 0
    %s22 = sadd.s32 %s21, 1
    %s23 = scalar_select %p20, %s21, %s22
    %p26 = pneg %p20
    %p27 = scmp.eq.s32.totalorder %s11, 1
    %p28 = por %p26, %p27
    %p29 = scmp.ne.s32.totalorder %s21, %s24
    %p30 = scmp.eq.s32.totalorder %s11, 0
    %p31 = por %p29, %p30
    %p32 = scmp.ne.s32.totalorder %s21, %s24
    %p33 = scmp.eq.s32.totalorder %s16, 1
    %p34 = por %p32, %p33
    %p35 = scmp.ne.s32.totalorder %s24, %s25
    %p36 = scmp.eq.s32.totalorder %s16, 0
    %p37 = por %p35, %p36
    %p38 = scmp.ne.s32.totalorder %s24, %s25
    %p39 = scmp.eq.s32.totalorder %s17, 1
    %p40 = por %p38, %p39
    %p42 = scmp.ne.s32.totalorder %s25, %s41
    %p43 = scmp.eq.s32.totalorder %s17, 0
    %p44 = por %p42, %p43
    %s45 = ssub.s32 %s11, %s18
    %p46 = scmp.eq.s32.totalorder %s45, 0
    %s48 = sadd.s32 %s47, 1
    %s49 = scalar_select %p46, %s47, %s48
    %p52 = pneg %p46
    %p53 = scmp.eq.s32.totalorder %s11, 1
    %p54 = por %p52, %p53
    %p55 = scmp.ne.s32.totalorder %s47, %s50
    %p56 = scmp.eq.s32.totalorder %s11, 0
    %p57 = por %p55, %p56
    %p58 = scmp.ne.s32.totalorder %s47, %s50
    %p59 = scmp.eq.s32.totalorder %s16, 1
    %p60 = por %p58, %p59
    %p61 = scmp.ne.s32.totalorder %s50, %s51
    %p62 = scmp.eq.s32.totalorder %s16, 0
    %p63 = por %p61, %p62
    %p64 = scmp.ne.s32.totalorder %s50, %s51
    %p65 = scmp.eq.s32.totalorder %s17, 1
    %p66 = por %p64, %p65
    %p68 = scmp.ne.s32.totalorder %s51, %s67
    %p69 = scmp.eq.s32.totalorder %s17, 0
    %p70 = por %p68, %p69
    %s71 = ssub.s32 %s11, %s18
    %p72 = scmp.eq.s32.totalorder %s71, 0
    %s74 = sadd.s32 %s73, 1
    %s75 = scalar_select %p72, %s73, %s74
    %p78 = pneg %p72
    %p79 = scmp.eq.s32.totalorder %s11, 1
    %p80 = por %p78, %p79
    %p81 = scmp.ne.s32.totalorder %s73, %s76
    %p82 = scmp.eq.s32.totalorder %s11, 0
    %p83 = por %p81, %p82
    %p84 = scmp.ne.s32.totalorder %s73, %s76
    %p85 = scmp.eq.s32.totalorder %s16, 1
    %p86 = por %p84, %p85
    %p87 = scmp.ne.s32.totalorder %s76, %s77
    %p88 = scmp.eq.s32.totalorder %s16, 0
    %p89 = por %p87, %p88
    %p90 = scmp.ne.s32.totalorder %s76, %s77
    %p91 = scmp.eq.s32.totalorder %s17, 1
    %p92 = por %p90, %p91
    %p94 = scmp.ne.s32.totalorder %s77, %s93
    %p95 = scmp.eq.s32.totalorder %s17, 0
    %p96 = por %p94, %p95
    %s98 = sadd.s32 %s97, 1
    %p101 = scmp.eq.s32.totalorder %s11, 1
    %p102 = scmp.ne.s32.totalorder %s97, %s99
    %p103 = scmp.eq.s32.totalorder %s11, 0
    %p104 = por %p102, %p103
    %p105 = scmp.ne.s32.totalorder %s97, %s99
    %p106 = scmp.eq.s32.totalorder %s16, 1
    %p107 = por %p105, %p106
    %p108 = scmp.ne.s32.totalorder %s99, %s100
    %p109 = scmp.eq.s32.totalorder %s16, 0
    %p110 = por %p108, %p109
    %p111 = scmp.ne.s32.totalorder %s99, %s100
    %p112 = scmp.eq.s32.totalorder %s17, 1
    %p113 = por %p111, %p112
    %p115 = scmp.ne.s32.totalorder %s100, %s114
    %p116 = scmp.eq.s32.totalorder %s17, 0
    %p117 = por %p115, %p116
    %s119 = sadd.s32 %s118, 1
    %p122 = scmp.eq.s32.totalorder %s11, 1
    %p123 = scmp.ne.s32.totalorder %s118, %s120
    %p124 = scmp.eq.s32.totalorder %s11, 0
    %p125 = por %p123, %p124
    %p126 = scmp.ne.s32.totalorder %s118, %s120
    %p127 = scmp.eq.s32.totalorder %s16, 1
    %p128 = por %p126, %p127
    %p129 = scmp.ne.s32.totalorder %s120, %s121
    %p130 = scmp.eq.s32.totalorder %s16, 0
    %p131 = por %p129, %p130
    %p132 = scmp.ne.s32.totalorder %s120, %s121
    %p133 = scmp.eq.s32.totalorder %s17, 1
    %p134 = por %p132, %p133
    %p136 = scmp.ne.s32.totalorder %s121, %s135
    %p137 = scmp.eq.s32.totalorder %s17, 0
    %p138 = por %p136, %p137
    %s139 = ssub.s32 %s11, %s18
    %p140 = scmp.eq.s32.totalorder %s139, 0
    %s142 = sadd.s32 %s141, 1
    %s143 = scalar_select %p140, %s141, %s142
    %p146 = pneg %p140
    %p147 = scmp.eq.s32.totalorder %s11, 1
    %p148 = por %p146, %p147
    %p149 = scmp.ne.s32.totalorder %s141, %s144
    %p150 = scmp.eq.s32.totalorder %s11, 0
    %p151 = por %p149, %p150
    %p152 = scmp.ne.s32.totalorder %s141, %s144
    %p153 = scmp.eq.s32.totalorder %s16, 1
    %p154 = por %p152, %p153
    %p155 = scmp.ne.s32.totalorder %s144, %s145
    %p156 = scmp.eq.s32.totalorder %s16, 0
    %p157 = por %p155, %p156
    %p158 = scmp.ne.s32.totalorder %s144, %s145
    %p159 = scmp.eq.s32.totalorder %s17, 1
    %p160 = por %p158, %p159
    %p162 = scmp.ne.s32.totalorder %s145, %s161
    %p163 = scmp.eq.s32.totalorder %s17, 0
    %p164 = por %p162, %p163
    %p165 = scmp.le.s32.totalorder 1, %s11
    %p166 = scmp.lt.s32.totalorder %s11, 3
    %p167 = pnand %p165, %p166
    %p168 = pneg %p167
    // Predicated region
    $region9: #{comenet_forward.23} parent=5 // pred_check
      _
    $region10: #{comenet_forward.23} parent=5 // pred_check_branch
      %170 = sbr.rel (%p167) target = $region12
    $region11: #{comenet_forward.23} parent=5 // pred_region
      %s171 = ssub.s32 %s11, 1
      // Predicated region
      $region13: #{comenet_forward.23} parent=11 // pred_check
        %p172 = pneg %p110
      $region14: #{comenet_forward.23} parent=11 // pred_check_branch
        %174 = sbr.rel (%p172) target = $region16
      $region15: #{comenet_forward.23} parent=11 // pred_region
        _
      $region16: #{comenet_forward.23} parent=11 // pred_fallthru
        _
      // Predicated region
      $region17: #{comenet_forward.23} parent=11 // pred_check
        %p175 = pneg %p131
      $region18: #{comenet_forward.23} parent=11 // pred_check_branch
        %177 = sbr.rel (%p175) target = $region20
      $region19: #{comenet_forward.23} parent=11 // pred_region
        _
      $region20: #{comenet_forward.23} parent=11 // pred_fallthru
        _
    $region12: #{comenet_forward.23} parent=5 // pred_fallthru
      _
    %p178 = scmp.lt.s32.totalorder %s11, 2
    // Predicated region
    $region21: #{comenet_forward.23} parent=5 // pred_check
      %p179 = pneg %p178
    $region22: #{comenet_forward.23} parent=5 // pred_check_branch
      %181 = sbr.rel (%p179) target = $region24
    $region23: #{comenet_forward.23} parent=5 // pred_region
      // Predicated region
      $region25: #{comenet_forward.23} parent=23 // pred_check
        %p182 = pneg %p31
      $region26: #{comenet_forward.23} parent=23 // pred_check_branch
        %184 = sbr.rel (%p182) target = $region28
      $region27: #{comenet_forward.23} parent=23 // pred_region
        %p185 = scmp.lt.s32.totalorder %s11, 1
        %s186 = scalar_select %p185, %s11, 1
        %s187 = smul.addr %s186, 4
        %s188 = scalar_lea.vmem %s0, %s187
      $region28: #{comenet_forward.23} parent=23 // pred_fallthru
        _
      // Predicated region
      $region29: #{comenet_forward.23} parent=23 // pred_check
        %p189 = pneg %p57
      $region30: #{comenet_forward.23} parent=23 // pred_check_branch
        %191 = sbr.rel (%p189) target = $region32
      $region31: #{comenet_forward.23} parent=23 // pred_region
        %p192 = scmp.lt.s32.totalorder %s11, 1
        %s193 = scalar_select %p192, %s11, 1
        %s194 = smul.addr %s193, 4
        %s195 = scalar_lea.vmem %s1, %s194
      $region32: #{comenet_forward.23} parent=23 // pred_fallthru
        _
      // Predicated region
      $region33: #{comenet_forward.23} parent=23 // pred_check
        %p196 = pneg %p83
      $region34: #{comenet_forward.23} parent=23 // pred_check_branch
        %198 = sbr.rel (%p196) target = $region36
      $region35: #{comenet_forward.23} parent=23 // pred_region
        %p199 = scmp.lt.s32.totalorder %s11, 1
        %s200 = scalar_select %p199, %s11, 1
        %s201 = smul.addr %s200, 4
        %s202 = scalar_lea.vmem %s2, %s201
      $region36: #{comenet_forward.23} parent=23 // pred_fallthru
        _
    $region24: #{comenet_forward.23} parent=5 // pred_fallthru
      _
    %p203 = scmp.le.s32.totalorder 1, %s11
    %p204 = scmp.lt.s32.totalorder %s11, 3
    %p205 = pnand %p203, %p204
    %p206 = pneg %p205
    // Predicated region
    $region37: #{comenet_forward.23} parent=5 // pred_check
      _
    $region38: #{comenet_forward.23} parent=5 // pred_check_branch
      %208 = sbr.rel (%p205) target = $region40
    $region39: #{comenet_forward.23} parent=5 // pred_region
      %s209 = ssub.s32 %s11, 1
      %p210 = scmp.lt.s32.totalorder %s16, 1
      %s211 = scalar_select %p210, %s16, 1
      %s212 = smul.addr %s211, 4
      %s213 = scalar_lea.vmem %s0, %s212
      %p214 = pneg %p37
      %p215 = pneg %p34
      %p216 = scmp.lt.s32.totalorder %s16, 1
      %s217 = scalar_select %p216, %s16, 1
      %s218 = smul.addr %s217, 4
      %s219 = scalar_lea.vmem %s1, %s218
      %p220 = pneg %p63
      %p221 = pneg %p60
      %p222 = scmp.lt.s32.totalorder %s16, 1
      %s223 = scalar_select %p222, %s16, 1
      %s224 = smul.addr %s223, 4
      %s225 = scalar_lea.vmem %s2, %s224
      %p226 = pneg %p89
      %p227 = pneg %p86
      %p228 = pneg %p110
      %p229 = pneg %p107
      %p230 = pneg %p131
      %p231 = pneg %p128
      %p232 = pneg %p157
      %p233 = pneg %p154
      %p234 = scmp.lt.s32.totalorder %s16, 1
      %s235 = scalar_select %p234, %s16, 1
      %s236 = smul.addr %s235, 4
      %s237 = scalar_lea.vmem %s5, %s236
      %p238 = scmp.lt.s32.totalorder %s16, 1
      %s239 = scalar_select %p238, %s16, 1
      %s240 = smul.addr %s239, 4
      %s241 = scalar_lea.vmem %s0, %s240
      %p242 = scmp.lt.s32.totalorder %s16, 1
      %s243 = scalar_select %p242, %s16, 1
      %s244 = smul.addr %s243, 4
      %s245 = scalar_lea.vmem %s1, %s244
      %p246 = scmp.lt.s32.totalorder %s16, 1
      %s247 = scalar_select %p246, %s16, 1
      %s248 = smul.addr %s247, 4
      %s249 = scalar_lea.vmem %s2, %s248
      %p250 = scmp.lt.s32.totalorder %s16, 1
      %s251 = scalar_select %p250, %s16, 1
      %s252 = smul.addr %s251, 4
      %s253 = scalar_lea.vmem %s5, %s252
      %v254 = vld [vmem:[%s241] sm:$0xf]
      %v255 = vld [vmem:[%s245] sm:$0xf]
      %v256 = vunpack.c.l.bf16 %v255
      %v257 = vld [vmem:[%s249] sm:$0xf]
      %v258 = vunpack.c.l.bf16 %v257
      %v259 = vunpack.c.l.bf16 %v254
      %v260 = vmul.f32 %v259, %v256
      %v261 = vadd.f32 %v260, %v258
      %v262 = vpack.c.bf16 %v261, %v261
      %v263 = vld [vmem:[%s3] sm:$0xf]
      %v264 = vld [vmem:[%s3 + $0x4] sm:$0xf]
      %v265 = vld [vmem:[%s3 + $0x8] sm:$0xf]
      %v266 = vld [vmem:[%s3 + $0xc] sm:$0xf]
      %v267 = vld [vmem:[%s3 + $0x10] sm:$0xf]
      %v268 = vld [vmem:[%s3 + $0x14] sm:$0xf]
      %v269 = vld [vmem:[%s3 + $0x18] sm:$0xf]
      %v270 = vld [vmem:[%s3 + $0x1c] sm:$0xf]
      %v271 = vld [vmem:[%s3 + $0x20] sm:$0xf]
      %v272 = vld [vmem:[%s3 + $0x24] sm:$0xf]
      %v273 = vld [vmem:[%s3 + $0x28] sm:$0xf]
      %v274 = vld [vmem:[%s3 + $0x2c] sm:$0xf]
      %v275 = vld [vmem:[%s3 + $0x30] sm:$0xf]
      %v276 = vld [vmem:[%s3 + $0x34] sm:$0xf]
      %v277 = vld [vmem:[%s3 + $0x38] sm:$0xf]
      %v278 = vld [vmem:[%s3 + $0x3c] sm:$0xf]
      %v279 = vld [vmem:[%s4] sm:$0x1]
      %v281 = vperm.slane %v279, 0
      %v299 = vunpack.c.l.b16 %v263
      %v300 = vunpack.c.l.b16 %v264
      %v301 = vunpack.c.l.b16 %v265
      %v302 = vunpack.c.l.b16 %v266
      %v303 = vunpack.c.l.b16 %v267
      %v304 = vunpack.c.l.b16 %v268
      %v305 = vunpack.c.l.b16 %v269
      %v306 = vunpack.c.l.b16 %v270
      %v307 = vunpack.c.l.b16 %v271
      %v308 = vunpack.c.l.b16 %v272
      %v309 = vunpack.c.l.b16 %v273
      %v310 = vunpack.c.l.b16 %v274
      %v311 = vunpack.c.l.b16 %v275
      %v312 = vunpack.c.l.b16 %v276
      %v313 = vunpack.c.l.b16 %v277
      %v314 = vunpack.c.l.b16 %v278
      %v315 = vpack.c.b16 %v300, %v299
      %v316 = vpack.c.b16 %v302, %v301
      %v317 = vpack.c.b16 %v304, %v303
      %v318 = vpack.c.b16 %v306, %v305
      %v319 = vpack.c.b16 %v308, %v307
      %v320 = vpack.c.b16 %v310, %v309
      %v321 = vpack.c.b16 %v312, %v311
      %v322 = vpack.c.b16 %v314, %v313
      %331 = vmatpush.bf16.msra.mxu0 %v322
      %332 = vmatpush.bf16.msra.mxu0 %v321
      %333 = vmatpush.bf16.msra.mxu0 %v320
      %334 = vmatpush.bf16.msra.mxu0 %v319
      %335 = vmatpush.bf16.msra.mxu0 %v318
      %336 = vmatpush.bf16.msra.mxu0 %v317
      %337 = vmatpush.bf16.msra.mxu0 %v316
      %338 = vmatpush.bf16.msra.mxu0 %v315
      %339 = vmatmul.bf16.gmra.mxu0 %v262
      %v340 = vpop.f32.mrf.mxu0
      %v341 = vadd.f32 %v281, %v340
      %v342 = vpop.f32.mrf.mxu0
      %343 = vdwg.mxu0
      %v344 = vxor.u32 %v341, 2147483648
      %v345 = vmul.f32 %v344, 1.442695
      %v346 = vpow.pop %v345
      %v347 = vadd.f32 %v346, 1.0
      %v348 = vrcp.pop %v347
      %v349 = vmul.f32 %v347, %v348
      %v350 = vsub.f32 1.0, %v349
      %v351 = vmul.f32 %v348, %v350
      %v352 = vadd.f32 %v348, %v351
      %vm353 = vweird.f32 %v347
      %vm354 = vweird.f32 %v348
      %vm355 = vmor %vm353, %vm354
      %v356 = vsel %vm355, %v348, %v352
      %v357 = vand.u32 2147483647, %v347
      %vm358 = vcmp.eq.f32.partialorder %v357, 8.507059e+37
      %v359 = vand.u32 %v347, 2147483648
      %v360 = vor.u32 1.1754944e-38, %v359
      %v361 = vsel %vm358, %v360, %v356
      %v362 = vmul.f32 1.0, %v361
      %v363 = vmul.f32 %v341, %v362
      %v364 = vpack.c.bf16 %v363, %v363
      %365 = vst [vmem:[%s253] sm:$0xf] %v364
      %p366 = scmp.lt.s32.totalorder %s16, 1
      %s367 = scalar_select %p366, %s16, 1
      %s368 = smul.addr %s367, 4
      %s369 = scalar_lea.vmem %s5, %s368
      // Predicated region
      $region41: #{comenet_forward.23} parent=39 // pred_check
        %p370 = pneg %p154
      $region42: #{comenet_forward.23} parent=39 // pred_check_branch
        %372 = sbr.rel (%p370) target = $region44
      $region43: #{comenet_forward.23} parent=39 // pred_region
        _
      $region44: #{comenet_forward.23} parent=39 // pred_fallthru
        _
    $region40: #{comenet_forward.23} parent=5 // pred_fallthru
      _
    %p373 = scmp.le.s32.totalorder 2, %s11
    // Predicated region
    $region45: #{comenet_forward.23} parent=5 // pred_check
      %p374 = pneg %p373
    $region46: #{comenet_forward.23} parent=5 // pred_check_branch
      %376 = sbr.rel (%p374) target = $region48
    $region47: #{comenet_forward.23} parent=5 // pred_region
      %s377 = ssub.s32 %s11, 2
      // Predicated region
      $region49: #{comenet_forward.23} parent=47 // pred_check
        %p378 = pneg %p160
      $region50: #{comenet_forward.23} parent=47 // pred_check_branch
        %380 = sbr.rel (%p378) target = $region52
      $region51: #{comenet_forward.23} parent=47 // pred_region
        %p381 = scmp.lt.s32.totalorder %s17, 1
        %s382 = scalar_select %p381, %s17, 1
        %s383 = smul.addr %s382, 4
        %s384 = scalar_lea.vmem %s5, %s383
      $region52: #{comenet_forward.23} parent=47 // pred_fallthru
        _
    $region48: #{comenet_forward.23} parent=5 // pred_fallthru
      _
  $region6: #{comenet_forward.23} parent=0 // loop_footer
    %s15 = sadd.s32 1, %s11
  $region7: #{comenet_forward.23} parent=0 // loop_footer_branch
    %10 = sbr.rel target = $region3
  $region8: #{comenet_forward.23} parent=0 // loop_exit
    _

// kernel: comenet_forward.31
$region0: #{comenet_forward.31}
  #allocation0 [shape = 'u32[]', space=smem, size = 0x4, offset = 0x4, fixed_abs, tag = 'smem constant byte address 0x4 - core index']
  #allocation1 [shape = 'u32[72,128]{1,0:T(1,128)}', space=vmem, size = 0x9000, scoped, tag = 'internal scratch']
  %s0 = inlined_call_operand.vmem [shape: bf16[16,128], index: 0, kind: input, shape index: {}]
  %s1 = inlined_call_operand.vmem [shape: bf16[1,128,128], index: 1, kind: input, shape index: {}]
  %s2 = inlined_call_operand.vmem [shape: f32[1,1,128], index: 2, kind: input, shape index: {}]
  %s3 = inlined_call_operand.vmem [shape: bf16[16,128], index: 3, kind: output, shape index: {}]
  %s4 = sld [smem:[#allocation0]]
  $region45: #{comenet_forward.31} parent=0
    _
  %s6 = ssub.s32 1, %s4
  %s7 = scalar_select 0, %s6, %s4
  loop: start=0, step=1, limit=4
  $region2: #{comenet_forward.31} parent=0 // loop_pre_header
    _
  $region3: #{comenet_forward.31} parent=0 // loop_header
    %s9 = sphi 0, %s13
    %p10 = scmp.ge.s32.totalorder %s9, 4
    %s19 = sphi 0, %s21
    %s22 = sphi 0, %s19
    %s23 = sphi 0, %s22
    %s39 = sphi 0, %s23
    %s43 = sphi 0, %s43
    %s45 = sphi 0, %s43
    %s46 = sphi 0, %s45
    %s60 = sphi 0, %s46
    %s64 = sphi 0, %s64
    %s66 = sphi 0, %s64
    %s67 = sphi 0, %s66
    %s81 = sphi 0, %s67
    %s87 = sphi 0, %s89
    %s90 = sphi 0, %s87
    %s91 = sphi 0, %s90
    %s107 = sphi 0, %s91
  $region4: #{comenet_forward.31} parent=0 // loop_header_branch
    %12 = sbr.rel (%p10) target = $region8
  $region5: #{comenet_forward.31} parent=0 // loop_body
    %s14 = ssub.s32 %s9, 1
    %s15 = ssub.s32 %s9, 2
    %s16 = sadd.s32 %s9, 1
    %s17 = ssub.s32 %s9, %s16
    %p18 = scmp.eq.s32.totalorder %s17, 0
    %s20 = sadd.s32 %s19, 1
    %s21 = scalar_select %p18, %s19, %s20
    %p24 = pneg %p18
    %p25 = scmp.eq.s32.totalorder %s9, 1
    %p26 = por %p24, %p25
    %p27 = scmp.ne.s32.totalorder %s19, %s22
    %p28 = scmp.eq.s32.totalorder %s9, 0
    %p29 = por %p27, %p28
    %p30 = scmp.ne.s32.totalorder %s19, %s22
    %p31 = scmp.eq.s32.totalorder %s14, 1
    %p32 = por %p30, %p31
    %p33 = scmp.ne.s32.totalorder %s22, %s23
    %p34 = scmp.eq.s32.totalorder %s14, 0
    %p35 = por %p33, %p34
    %p36 = scmp.ne.s32.totalorder %s22, %s23
    %p37 = scmp.eq.s32.totalorder %s15, 1
    %p38 = por %p36, %p37
    %p40 = scmp.ne.s32.totalorder %s23, %s39
    %p41 = scmp.eq.s32.totalorder %s15, 0
    %p42 = por %p40, %p41
    %s44 = sadd.s32 %s43, 1
    %p47 = scmp.eq.s32.totalorder %s9, 1
    %p48 = scmp.ne.s32.totalorder %s43, %s45
    %p49 = scmp.eq.s32.totalorder %s9, 0
    %p50 = por %p48, %p49
    %p51 = scmp.ne.s32.totalorder %s43, %s45
    %p52 = scmp.eq.s32.totalorder %s14, 1
    %p53 = por %p51, %p52
    %p54 = scmp.ne.s32.totalorder %s45, %s46
    %p55 = scmp.eq.s32.totalorder %s14, 0
    %p56 = por %p54, %p55
    %p57 = scmp.ne.s32.totalorder %s45, %s46
    %p58 = scmp.eq.s32.totalorder %s15, 1
    %p59 = por %p57, %p58
    %p61 = scmp.ne.s32.totalorder %s46, %s60
    %p62 = scmp.eq.s32.totalorder %s15, 0
    %p63 = por %p61, %p62
    %s65 = sadd.s32 %s64, 1
    %p68 = scmp.eq.s32.totalorder %s9, 1
    %p69 = scmp.ne.s32.totalorder %s64, %s66
    %p70 = scmp.eq.s32.totalorder %s9, 0
    %p71 = por %p69, %p70
    %p72 = scmp.ne.s32.totalorder %s64, %s66
    %p73 = scmp.eq.s32.totalorder %s14, 1
    %p74 = por %p72, %p73
    %p75 = scmp.ne.s32.totalorder %s66, %s67
    %p76 = scmp.eq.s32.totalorder %s14, 0
    %p77 = por %p75, %p76
    %p78 = scmp.ne.s32.totalorder %s66, %s67
    %p79 = scmp.eq.s32.totalorder %s15, 1
    %p80 = por %p78, %p79
    %p82 = scmp.ne.s32.totalorder %s67, %s81
    %p83 = scmp.eq.s32.totalorder %s15, 0
    %p84 = por %p82, %p83
    %s85 = ssub.s32 %s9, %s16
    %p86 = scmp.eq.s32.totalorder %s85, 0
    %s88 = sadd.s32 %s87, 1
    %s89 = scalar_select %p86, %s87, %s88
    %p92 = pneg %p86
    %p93 = scmp.eq.s32.totalorder %s9, 1
    %p94 = por %p92, %p93
    %p95 = scmp.ne.s32.totalorder %s87, %s90
    %p96 = scmp.eq.s32.totalorder %s9, 0
    %p97 = por %p95, %p96
    %p98 = scmp.ne.s32.totalorder %s87, %s90
    %p99 = scmp.eq.s32.totalorder %s14, 1
    %p100 = por %p98, %p99
    %p101 = scmp.ne.s32.totalorder %s90, %s91
    %p102 = scmp.eq.s32.totalorder %s14, 0
    %p103 = por %p101, %p102
    %p104 = scmp.ne.s32.totalorder %s90, %s91
    %p105 = scmp.eq.s32.totalorder %s15, 1
    %p106 = por %p104, %p105
    %p108 = scmp.ne.s32.totalorder %s91, %s107
    %p109 = scmp.eq.s32.totalorder %s15, 0
    %p110 = por %p108, %p109
    %p111 = scmp.le.s32.totalorder 1, %s9
    %p112 = scmp.lt.s32.totalorder %s9, 3
    %p113 = pnand %p111, %p112
    %p114 = pneg %p113
    // Predicated region
    $region9: #{comenet_forward.31} parent=5 // pred_check
      _
    $region10: #{comenet_forward.31} parent=5 // pred_check_branch
      %116 = sbr.rel (%p113) target = $region12
    $region11: #{comenet_forward.31} parent=5 // pred_region
      %s117 = ssub.s32 %s9, 1
      // Predicated region
      $region13: #{comenet_forward.31} parent=11 // pred_check
        %p118 = pneg %p56
      $region14: #{comenet_forward.31} parent=11 // pred_check_branch
        %120 = sbr.rel (%p118) target = $region16
      $region15: #{comenet_forward.31} parent=11 // pred_region
        _
      $region16: #{comenet_forward.31} parent=11 // pred_fallthru
        _
      // Predicated region
      $region17: #{comenet_forward.31} parent=11 // pred_check
        %p121 = pneg %p77
      $region18: #{comenet_forward.31} parent=11 // pred_check_branch
        %123 = sbr.rel (%p121) target = $region20
      $region19: #{comenet_forward.31} parent=11 // pred_region
        _
      $region20: #{comenet_forward.31} parent=11 // pred_fallthru
        _
    $region12: #{comenet_forward.31} parent=5 // pred_fallthru
      _
    %p124 = scmp.lt.s32.totalorder %s9, 2
    // Predicated region
    $region21: #{comenet_forward.31} parent=5 // pred_check
      %p125 = pneg %p124
    $region22: #{comenet_forward.31} parent=5 // pred_check_branch
      %127 = sbr.rel (%p125) target = $region24
    $region23: #{comenet_forward.31} parent=5 // pred_region
      // Predicated region
      $region25: #{comenet_forward.31} parent=23 // pred_check
        %p128 = pneg %p29
      $region26: #{comenet_forward.31} parent=23 // pred_check_branch
        %130 = sbr.rel (%p128) target = $region28
      $region27: #{comenet_forward.31} parent=23 // pred_region
        %p131 = scmp.lt.s32.totalorder %s9, 1
        %s132 = scalar_select %p131, %s9, 1
        %s133 = smul.addr %s132, 4
        %s134 = scalar_lea.vmem %s0, %s133
      $region28: #{comenet_forward.31} parent=23 // pred_fallthru
        _
    $region24: #{comenet_forward.31} parent=5 // pred_fallthru
      _
    %p135 = scmp.le.s32.totalorder 1, %s9
    %p136 = scmp.lt.s32.totalorder %s9, 3
    %p137 = pnand %p135, %p136
    %p138 = pneg %p137
    // Predicated region
    $region29: #{comenet_forward.31} parent=5 // pred_check
      _
    $region30: #{comenet_forward.31} parent=5 // pred_check_branch
      %140 = sbr.rel (%p137) target = $region32
    $region31: #{comenet_forward.31} parent=5 // pred_region
      %s141 = ssub.s32 %s9, 1
      %p142 = scmp.lt.s32.totalorder %s14, 1
      %s143 = scalar_select %p142, %s14, 1
      %s144 = smul.addr %s143, 4
      %s145 = scalar_lea.vmem %s0, %s144
      %p146 = pneg %p35
      %p147 = pneg %p32
      %p148 = pneg %p56
      %p149 = pneg %p53
      %p150 = pneg %p77
      %p151 = pneg %p74
      %p152 = pneg %p103
      %p153 = pneg %p100
      %p154 = scmp.lt.s32.totalorder %s14, 1
      %s155 = scalar_select %p154, %s14, 1
      %s156 = smul.addr %s155, 4
      %s157 = scalar_lea.vmem %s3, %s156
      %p158 = scmp.lt.s32.totalorder %s14, 1
      %s159 = scalar_select %p158, %s14, 1
      %s160 = smul.addr %s159, 4
      %s161 = scalar_lea.vmem %s0, %s160
      %p162 = scmp.lt.s32.totalorder %s14, 1
      %s163 = scalar_select %p162, %s14, 1
      %s164 = smul.addr %s163, 4
      %s165 = scalar_lea.vmem %s3, %s164
      %v166 = vld [vmem:[%s161] sm:$0xf]
      %v167 = vld [vmem:[%s1] sm:$0xf]
      %v168 = vld [vmem:[%s1 + $0x4] sm:$0xf]
      %v169 = vld [vmem:[%s1 + $0x8] sm:$0xf]
      %v170 = vld [vmem:[%s1 + $0xc] sm:$0xf]
      %v171 = vld [vmem:[%s1 + $0x10] sm:$0xf]
      %v172 = vld [vmem:[%s1 + $0x14] sm:$0xf]
      %v173 = vld [vmem:[%s1 + $0x18] sm:$0xf]
      %v174 = vld [vmem:[%s1 + $0x1c] sm:$0xf]
      %v175 = vld [vmem:[%s1 + $0x20] sm:$0xf]
      %v176 = vld [vmem:[%s1 + $0x24] sm:$0xf]
      %v177 = vld [vmem:[%s1 + $0x28] sm:$0xf]
      %v178 = vld [vmem:[%s1 + $0x2c] sm:$0xf]
      %v179 = vld [vmem:[%s1 + $0x30] sm:$0xf]
      %v180 = vld [vmem:[%s1 + $0x34] sm:$0xf]
      %v181 = vld [vmem:[%s1 + $0x38] sm:$0xf]
      %v182 = vld [vmem:[%s1 + $0x3c] sm:$0xf]
      %v183 = vld [vmem:[%s2] sm:$0x1]
      %v185 = vperm.slane %v183, 0
      %v203 = vunpack.c.l.b16 %v167
      %v204 = vunpack.c.l.b16 %v168
      %v205 = vunpack.c.l.b16 %v169
      %v206 = vunpack.c.l.b16 %v170
      %v207 = vunpack.c.l.b16 %v171
      %v208 = vunpack.c.l.b16 %v172
      %v209 = vunpack.c.l.b16 %v173
      %v210 = vunpack.c.l.b16 %v174
      %v211 = vunpack.c.l.b16 %v175
      %v212 = vunpack.c.l.b16 %v176
      %v213 = vunpack.c.l.b16 %v177
      %v214 = vunpack.c.l.b16 %v178
      %v215 = vunpack.c.l.b16 %v179
      %v216 = vunpack.c.l.b16 %v180
      %v217 = vunpack.c.l.b16 %v181
      %v218 = vunpack.c.l.b16 %v182
      %v219 = vpack.c.b16 %v204, %v203
      %v220 = vpack.c.b16 %v206, %v205
      %v221 = vpack.c.b16 %v208, %v207
      %v222 = vpack.c.b16 %v210, %v209
      %v223 = vpack.c.b16 %v212, %v211
      %v224 = vpack.c.b16 %v214, %v213
      %v225 = vpack.c.b16 %v216, %v215
      %v226 = vpack.c.b16 %v218, %v217
      %235 = vmatpush.bf16.msra.mxu0 %v226
      %236 = vmatpush.bf16.msra.mxu0 %v225
      %237 = vmatpush.bf16.msra.mxu0 %v224
      %238 = vmatpush.bf16.msra.mxu0 %v223
      %239 = vmatpush.bf16.msra.mxu0 %v222
      %240 = vmatpush.bf16.msra.mxu0 %v221
      %241 = vmatpush.bf16.msra.mxu0 %v220
      %242 = vmatpush.bf16.msra.mxu0 %v219
      %243 = vmatmul.bf16.gmra.mxu0 %v166
      %v244 = vpop.f32.mrf.mxu0
      %v245 = vadd.f32 %v185, %v244
      %v246 = vpop.f32.mrf.mxu0
      %247 = vdwg.mxu0
      %v248 = vxor.u32 %v245, 2147483648
      %v249 = vmul.f32 %v248, 1.442695
      %v250 = vpow.pop %v249
      %v251 = vadd.f32 %v250, 1.0
      %v252 = vrcp.pop %v251
      %v253 = vmul.f32 %v251, %v252
      %v254 = vsub.f32 1.0, %v253
      %v255 = vmul.f32 %v252, %v254
      %v256 = vadd.f32 %v252, %v255
      %vm257 = vweird.f32 %v251
      %vm258 = vweird.f32 %v252
      %vm259 = vmor %vm257, %vm258
      %v260 = vsel %vm259, %v252, %v256
      %v261 = vand.u32 2147483647, %v251
      %vm262 = vcmp.eq.f32.partialorder %v261, 8.507059e+37
      %v263 = vand.u32 %v251, 2147483648
      %v264 = vor.u32 1.1754944e-38, %v263
      %v265 = vsel %vm262, %v264, %v260
      %v266 = vmul.f32 1.0, %v265
      %v267 = vmul.f32 %v245, %v266
      %v268 = vpack.c.bf16 %v267, %v267
      %269 = vst [vmem:[%s165] sm:$0xf] %v268
      %p270 = scmp.lt.s32.totalorder %s14, 1
      %s271 = scalar_select %p270, %s14, 1
      %s272 = smul.addr %s271, 4
      %s273 = scalar_lea.vmem %s3, %s272
      // Predicated region
      $region33: #{comenet_forward.31} parent=31 // pred_check
        %p274 = pneg %p100
      $region34: #{comenet_forward.31} parent=31 // pred_check_branch
        %276 = sbr.rel (%p274) target = $region36
      $region35: #{comenet_forward.31} parent=31 // pred_region
        _
      $region36: #{comenet_forward.31} parent=31 // pred_fallthru
        _
    $region32: #{comenet_forward.31} parent=5 // pred_fallthru
      _
    %p277 = scmp.le.s32.totalorder 2, %s9
    // Predicated region
    $region37: #{comenet_forward.31} parent=5 // pred_check
      %p278 = pneg %p277
    $region38: #{comenet_forward.31} parent=5 // pred_check_branch
      %280 = sbr.rel (%p278) target = $region40
    $region39: #{comenet_forward.31} parent=5 // pred_region
      %s281 = ssub.s32 %s9, 2
      // Predicated region
      $region41: #{comenet_forward.31} parent=39 // pred_check
        %p282 = pneg %p106
      $region42: #{comenet_forward.31} parent=39 // pred_check_branch
        %284 = sbr.rel (%p282) target = $region44
      $region43: #{comenet_forward.31} parent=39 // pred_region
        %p285 = scmp.lt.s32.totalorder %s15, 1
        %s286 = scalar_select %p285, %s15, 1
        %s287 = smul.addr %s286, 4
        %s288 = scalar_lea.vmem %s3, %s287
      $region44: #{comenet_forward.31} parent=39 // pred_fallthru
        _
    $region40: #{comenet_forward.31} parent=5 // pred_fallthru
      _
  $region6: #{comenet_forward.31} parent=0 // loop_footer
    %s13 = sadd.s32 1, %s9
  $region7: #{comenet_forward.31} parent=0 // loop_footer_branch
    %8 = sbr.rel target = $region3
  $region8: #{comenet_forward.31} parent=0 // loop_exit
    _

</llo_original>
